<compile_context>
chip_gen: v5e
topology: v5e:2x2
jax: 0.10.0
libtpu: 0.0.40
codegen_flags: <defaults>
</compile_context>

<pallas_src>
import jax
import jax.numpy as jnp
from jax.experimental import pallas as pl
from jax.experimental.pallas import tpu as pltpu

_MXU_DTYPE = jnp.float32   # flip to jnp.bfloat16 on v6e/v7x for full MXU throughput
_BN_EPS = 1e-5

_PARALLEL = pltpu.CompilerParams(dimension_semantics=("parallel",))


# ----------------------------- BlockSpec helpers -----------------------------
def _batch_spec(shape, bt):
    """`bt` images / slabs per grid step along the leading batch axis."""
    tail = tuple(shape[1:])
    zeros = (0,) * len(tail)
    return pl.BlockSpec((bt,) + tail, lambda i, _z=zeros: (i,) + _z)


def _bcast_spec(shape):
    """Whole (small) array, same block for every grid step (weights / coefficients)."""
    shape = tuple(shape)
    zeros = (0,) * len(shape)
    return pl.BlockSpec(shape, lambda i, _z=zeros: _z)


# --------------------------------- kernels -----------------------------------
def _zero_halo(xpad, h, w):
    """Zero only the 1-wide halo ring; the interior is fully rewritten every image."""
    c = xpad.shape[-1]
    xpad[0] = jnp.zeros((w + 2, c), xpad.dtype)
    xpad[h + 1] = jnp.zeros((w + 2, c), xpad.dtype)
    xpad[1:h + 1, 0:1, :] = jnp.zeros((h, 1, c), xpad.dtype)
    xpad[1:h + 1, w + 1:w + 2, :] = jnp.zeros((h, 1, c), xpad.dtype)


def _im2col_matmul(xpad, w_ref, h, w):
    """9-tap im2col from the padded VMEM scratch + ONE (H*W, 9*C) @ (9*C, Cout) matmul."""
    c = xpad.shape[-1]
    xp = xpad[...]
    patches = jnp.concatenate(
        [xp[dy:dy + h, dx:dx + w, :].reshape(h * w, c)
         for dy in range(3) for dx in range(3)], axis=1)            # (H*W, 9*C)
    return jnp.dot(patches.astype(_MXU_DTYPE), w_ref[...].astype(_MXU_DTYPE),
                   preferred_element_type=jnp.float32)              # (H*W, Cout) f32


def _partial_stats(y):
    """One-pass per-block (sum, sum-of-squares) over rows -> (2, Cout)."""
    return jnp.concatenate([jnp.sum(y, axis=0, keepdims=True),
                            jnp.sum(y * y, axis=0, keepdims=True)], axis=0)


def _conv1_kernel(x2_ref, xup_ref, w_ref, o_ref, stats_ref, xpad):
    """concat([x2, up(x1)]) -> Conv2d 3x3 'same' -> raw output + BN1 partial stats.

    x2_ref : (BT, H, W, C2)    xup_ref: (BT, H, W, Cmid)   w_ref: (9*(C2+Cmid), Cout)
    o_ref  : (BT, H, W, Cout)  raw pre-BN output           stats_ref: (1, 2, Cout)
    xpad   : VMEM (H+2, W+2, C2+Cmid); 'same' padding + channel concat stay in VMEM.
    """
    bt, h, w, _ = x2_ref.shape
    cout = o_ref.shape[-1]

    _zero_halo(xpad, h, w)

    acc = jnp.zeros((2, cout), jnp.float32)
    for b in range(bt):                                   # static unroll (BT is small)
        xpad[1:h + 1, 1:w + 1, :] = jnp.concatenate(      # channel concat never hits HBM
            [x2_ref[b], xup_ref[b]], axis=-1)
        y = _im2col_matmul(xpad, w_ref, h, w)             # conv bias dropped (BN cancels)
        acc = acc + _partial_stats(y)
        o_ref[b] = y.reshape(h, w, cout)
    stats_ref[0] = acc


def _conv2_kernel(y1_ref, coef_ref, w_ref, o_ref, stats_ref, xpad):
    """Fused BN1+ReLU (normalize the input tile on the fly) -> Conv2d 3x3 -> raw output
    + BN2 partial stats.

    y1_ref : (BT, H, W, C) raw conv1 output   coef_ref: (2, C) = [scale1; shift1]
    w_ref  : (9*C, Cout)   o_ref: (BT, H, W, Cout)   stats_ref: (1, 2, Cout)
    xpad   : VMEM (H+2, W+2, C)
    """
    bt, h, w, c = y1_ref.shape
    cout = o_ref.shape[-1]
    scale = coef_ref[0:1, :].reshape(1, 1, c)
    shift = coef_ref[1:2, :].reshape(1, 1, c)

    _zero_halo(xpad, h, w)

    acc = jnp.zeros((2, cout), jnp.float32)
    for b in range(bt):
        xpad[1:h + 1, 1:w + 1, :] = jnp.maximum(y1_ref[b] * scale + shift, 0.0)
        y = _im2col_matmul(xpad, w_ref, h, w)
        acc = acc + _partial_stats(y)
        o_ref[b] = y.reshape(h, w, cout)
    stats_ref[0] = acc


# --------------------------------- wrapper ------------------------------------
def _finish_stats(stats, gamma, beta, count):
    """Finish the one-pass BN reduction: (G, 2, C) block partials -> folded scale/shift.

    NOTE: one-pass variance (E[x^2]-E[x]^2) is fine at these sizes; for very large
    counts use centered per-block partials instead (catastrophic-cancellation risk).
    """
    s = jnp.sum(stats[:, 0, :], axis=0)
    ss = jnp.sum(stats[:, 1, :], axis=0)
    mean = s / count
    var = ss / count - mean * mean                       # biased variance (train-mode BN)
    scale = gamma * jax.lax.rsqrt(var + _BN_EPS)
    return scale, beta - mean * scale


def _pick_bt(n):
    """Images per grid step: biggest divisor of N that still leaves >= 2 grid steps
    (so the 'parallel' batch axis can split across both TensorCores on v7x)."""
    for bt in range(min(8, n), 0, -1):
        if n % bt == 0 and (n // bt) >= 2:
            return bt
    return 1


@jax.jit
def up_forward(x1_nchw, x2_nchw, params):
    """Forward pass of `Up` (PyTorch train-mode semantics). NCHW in, NCHW out."""
    x1 = jnp.transpose(x1_nchw, (0, 2, 3, 1)).astype(jnp.float32)    # NCHW -> NHWC
    x2 = jnp.transpose(x2_nchw, (0, 2, 3, 1)).astype(jnp.float32)
    n, h1, w1, cin = x1.shape
    _, h, w, c2 = x2.shape
    cmid = params["w_up"].shape[1]
    cout = params["w1"].shape[-1]
    cin_cat = c2 + cmid
    bt = _pick_bt(n)
    grid_n = n // bt

    # ---- ConvTranspose2d(k=2, s=2) + F.pad: one fused XLA pass feeding conv1 ---------
    # (matmul + stride-2 tap interleave; see TODO at the top about full in-kernel fusion)
    x1u = jnp.einsum("nijc,cokl->nikjlo", x1, params["w_up"])
    x1u = x1u.reshape(n, 2 * h1, 2 * w1, cmid) + params["b_up"].reshape(1, 1, 1, -1)
    dy, dx = h - 2 * h1, w - 2 * w1
    if dy or dx:                                 # static; no-op for matching UNet shapes
        x1u = jnp.pad(x1u, ((0, 0), (dy // 2, dy - dy // 2),
                            (dx // 2, dx - dx // 2), (0, 0)))

    # ---- Conv1 (channel concat inside the kernel's VMEM) + BN1 partial stats ---------
    w1f = params["w1"].reshape(9 * cin_cat, cout)
    y1, st1 = pl.pallas_call(
        _conv1_kernel,
        grid=(grid_n,),
        in_specs=[_batch_spec((n, h, w, c2), bt),
                  _batch_spec((n, h, w, cmid), bt),
                  _bcast_spec((9 * cin_cat, cout))],
        out_shape=(jax.ShapeDtypeStruct((n, h, w, cout), jnp.float32),
                   jax.ShapeDtypeStruct((grid_n, 2, cout), jnp.float32)),
        out_specs=(_batch_spec((n, h, w, cout), bt),
                   _batch_spec((grid_n, 2, cout), 1)),
        scratch_shapes=[pltpu.VMEM((h + 2, w + 2, cin_cat), jnp.float32)],
        compiler_params=_PARALLEL,
    )(x2, x1u, w1f)

    count = n * h * w
    scale1, shift1 = _finish_stats(st1, params["g1"], params["beta1"], count)
    coef1 = jnp.stack([scale1, shift1], axis=0)                          # (2, Cout)

    # ---- (fused BN1 + ReLU) -> Conv2 + BN2 partial stats ------------------------------
    w2f = params["w2"].reshape(9 * cout, cout)
    y2, st2 = pl.pallas_call(
        _conv2_kernel,
        grid=(grid_n,),
        in_specs=[_batch_spec((n, h, w, cout), bt),
                  _bcast_spec((2, cout)),
                  _bcast_spec((9 * cout, cout))],
        out_shape=(jax.ShapeDtypeStruct((n, h, w, cout), jnp.float32),
                   jax.ShapeDtypeStruct((grid_n, 2, cout), jnp.float32)),
        out_specs=(_batch_spec((n, h, w, cout), bt),
                   _batch_spec((grid_n, 2, cout), 1)),
        scratch_shapes=[pltpu.VMEM((h + 2, w + 2, cout), jnp.float32)],
        compiler_params=_PARALLEL,
    )(y1, coef1, w2f)

    scale2, shift2 = _finish_stats(st2, params["g2"], params["beta2"], count)
    # Final BN2 + ReLU left to XLA so it fuses with the NHWC->NCHW output transpose
    # (one pass over the output instead of a separate elementwise kernel + transpose).
    out = jnp.maximum(y2 * scale2 + shift2, 0.0)
    return jnp.transpose(out, (0, 3, 1, 2))                              # NHWC -> NCHW


# ----------------------------- pure-JAX reference ------------------------------
def _ref_stage(x, w, b, g, beta):
    y = jax.lax.conv_general_dilated(
        x, w, window_strides=(1, 1), padding="SAME",
        dimension_numbers=("NHWC", "HWIO", "NHWC"))
    y = y + b.reshape(1, 1, 1, -1)
    mean = jnp.mean(y, axis=(0, 1, 2), keepdims=True)
    var = jnp.mean((y - mean) ** 2, axis=(0, 1, 2), keepdims=True)
    y = (y - mean) * jax.lax.rsqrt(var + _BN_EPS) * g.reshape(1, 1, 1, -1) \
        + beta.reshape(1, 1, 1, -1)
    return jnp.maximum(y, 0.0)


def up_forward_ref(x1_nchw, x2_nchw, p):
    x1 = jnp.transpose(x1_nchw, (0, 2, 3, 1))
    x2 = jnp.transpose(x2_nchw, (0, 2, 3, 1))
    n, h1, w1, _ = x1.shape
    cmid = p["w_up"].shape[1]
    # ConvTranspose2d(k=2, s=2): out[n, 2i+ky, 2j+kx, co] = sum_ci x1[n,i,j,ci]*W[ci,co,ky,kx]
    up = jnp.zeros((n, 2 * h1, 2 * w1, cmid), jnp.float32)
    for ky in range(2):
        for kx in range(2):
            tap = jnp.einsum("nijc,co->nijo", x1, p["w_up"][:, :, ky, kx])
            up = up.at[:, ky::2, kx::2, :].set(tap)
    up = up + p["b_up"].reshape(1, 1, 1, -1)
    dy = x2.shape[1] - up.shape[1]
    dx = x2.shape[2] - up.shape[2]
    up = jnp.pad(up, ((0, 0), (dy // 2, dy - dy // 2), (dx // 2, dx - dx // 2), (0, 0)))
    x = jnp.concatenate([x2, up], axis=-1)
    y = _ref_stage(x, p["w1"], p["b1"], p["g1"], p["beta1"])
    y = _ref_stage(y, p["w2"], p["b2"], p["g2"], p["beta2"])
    return jnp.transpose(y, (0, 3, 1, 2))


# ----------------------------------- main --------------------------------------
if __name__ == "__main__":
    N = 2
    in_channels, out_channels = 8, 8
    H1 = W1 = 8                        # x1 spatial; x2 is 2x -> 16x16
    Cin1 = in_channels                 # x1 channels
    Cmid = in_channels // 2            # ConvTranspose2d output channels
    C2 = in_channels // 2              # x2 (skip) channels -> concat has `in_channels`
    Cout = out_channels

    key = jax.random.PRNGKey(0)
    ks = jax.random.split(key, 12)
    # Conv weights stored directly in TPU-friendly layouts:
    #   w_up : (Cin, Cmid, 2, 2)  == PyTorch ConvTranspose2d weight layout
    #   w1/w2: HWIO (3, 3, Cin, Cout) == PyTorch Conv2d weight transposed (2,3,1,0)
    params = {
        "w_up":  0.1 * jax.random.normal(ks[0], (Cin1, Cmid, 2, 2), jnp.float32),
        "b_up":  0.1 * jax.random.normal(ks[1], (Cmid,), jnp.float32),
        "w1":    0.1 * jax.random.normal(ks[2], (3, 3, C2 + Cmid, Cout), jnp.float32),
        "b1":    0.1 * jax.random.normal(ks[3], (Cout,), jnp.float32),   # cancelled by BN
        "g1":    1.0 + 0.1 * jax.random.normal(ks[4], (Cout,), jnp.float32),
        "beta1": 0.1 * jax.random.normal(ks[5], (Cout,), jnp.float32),
        "w2":    0.1 * jax.random.normal(ks[6], (3, 3, Cout, Cout), jnp.float32),
        "b2":    0.1 * jax.random.normal(ks[7], (Cout,), jnp.float32),   # cancelled by BN
        "g2":    1.0 + 0.1 * jax.random.normal(ks[8], (Cout,), jnp.float32),
        "beta2": 0.1 * jax.random.normal(ks[9], (Cout,), jnp.float32),
    }
    x1 = jax.random.normal(ks[10], (N, Cin1, H1, W1), jnp.float32)          # NCHW
    x2 = jax.random.normal(ks[11], (N, C2, 2 * H1, 2 * W1), jnp.float32)    # NCHW

    out = jax.block_until_ready(up_forward(x1, x2, params))
    ref = jax.block_until_ready(up_forward_ref(x1, x2, params))

    assert out.shape == (N, Cout, 2 * H1, 2 * W1), out.shape
    max_err = float(jnp.max(jnp.abs(out - ref)))
    assert jnp.allclose(out, ref, atol=1e-3, rtol=1e-3), max_err
    print("KERNEL_OK")
</pallas_src>

<mosaic_0001>
module attributes {stable_mosaic.version = 11 : i64} {
  func.func @_conv1_kernel(%arg0: i32, %arg1: memref<1x16x16x4xf32, #tpu.memory_space<vmem>>, %arg2: memref<1x16x16x4xf32, #tpu.memory_space<vmem>>, %arg3: memref<72x8xf32, #tpu.memory_space<vmem>>, %arg4: memref<1x16x16x8xf32, #tpu.memory_space<vmem>>, %arg5: memref<1x2x8xf32, #tpu.memory_space<vmem>>, %arg6: memref<18x18x8xf32, #tpu.memory_space<vmem>>) attributes {dimension_semantics = [#tpu.dimension_semantics<parallel>], iteration_bounds = array<i64: 2>, scalar_prefetch = 0 : i64, scratch_operands = 1 : i64, tpu.core_type = #tpu.core_type<tc>, window_params = [{transform_indices = @transform_0, window_bounds = array<i64: 1, 16, 16, 4>}, {transform_indices = @transform_1, window_bounds = array<i64: 1, 16, 16, 4>}, {pipeline_mode = #tpu.pipeline_mode<synchronous>, transform_indices = @transform_2, window_bounds = array<i64: 72, 8>}, {transform_indices = @transform_3, window_bounds = array<i64: 1, 16, 16, 8>}, {transform_indices = @transform_4, window_bounds = array<i64: 1, 2, 8>}]} {
    %cst = arith.constant 0.000000e+00 : f32
    %0 = vector.broadcast %cst : f32 to vector<18x8xf32>
    %c0 = arith.constant 0 : index
    %c0_0 = arith.constant 0 : index
    %c0_1 = arith.constant 0 : index
    %1 = vector.load %arg6[%c0, %c0_0, %c0_1] : memref<18x18x8xf32, #tpu.memory_space<vmem>>, vector<1x18x8xf32>
    %2 = vector.shape_cast %1 : vector<1x18x8xf32> to vector<18x8xf32>
    %3 = vector.shape_cast %0 : vector<18x8xf32> to vector<1x18x8xf32>
    tpu.vector_store %arg6[%c0, %c0_0, %c0_1], %3 {strides = array<i32>} : memref<18x18x8xf32, #tpu.memory_space<vmem>>, vector<1x18x8xf32>,
    %cst_2 = arith.constant 0.000000e+00 : f32
    %4 = vector.broadcast %cst_2 : f32 to vector<18x8xf32>
    %c17 = arith.constant 17 : index
    %c0_3 = arith.constant 0 : index
    %c0_4 = arith.constant 0 : index
    %5 = vector.load %arg6[%c17, %c0_3, %c0_4] : memref<18x18x8xf32, #tpu.memory_space<vmem>>, vector<1x18x8xf32>
    %6 = vector.shape_cast %5 : vector<1x18x8xf32> to vector<18x8xf32>
    %7 = vector.shape_cast %4 : vector<18x8xf32> to vector<1x18x8xf32>
    tpu.vector_store %arg6[%c17, %c0_3, %c0_4], %7 {strides = array<i32>} : memref<18x18x8xf32, #tpu.memory_space<vmem>>, vector<1x18x8xf32>,
    %cst_5 = arith.constant 0.000000e+00 : f32
    %8 = vector.broadcast %cst_5 : f32 to vector<16x1x8xf32>
    %c1 = arith.constant 1 : index
    %c0_6 = arith.constant 0 : index
    %c0_7 = arith.constant 0 : index
    %9 = vector.load %arg6[%c1, %c0_6, %c0_7] : memref<18x18x8xf32, #tpu.memory_space<vmem>>, vector<16x1x8xf32>
    tpu.vector_store %arg6[%c1, %c0_6, %c0_7], %8 {strides = array<i32>} : memref<18x18x8xf32, #tpu.memory_space<vmem>>, vector<16x1x8xf32>,
    %cst_8 = arith.constant 0.000000e+00 : f32
    %10 = vector.broadcast %cst_8 : f32 to vector<16x1x8xf32>
    %c1_9 = arith.constant 1 : index
    %c17_10 = arith.constant 17 : index
    %c0_11 = arith.constant 0 : index
    %11 = vector.load %arg6[%c1_9, %c17_10, %c0_11] : memref<18x18x8xf32, #tpu.memory_space<vmem>>, vector<16x1x8xf32>
    tpu.vector_store %arg6[%c1_9, %c17_10, %c0_11], %10 {strides = array<i32>} : memref<18x18x8xf32, #tpu.memory_space<vmem>>, vector<16x1x8xf32>,
    %cst_12 = arith.constant 0.000000e+00 : f32
    %12 = vector.broadcast %cst_12 : f32 to vector<2x8xf32>
    %c0_13 = arith.constant 0 : index
    %c0_14 = arith.constant 0 : index
    %c0_15 = arith.constant 0 : index
    %c0_16 = arith.constant 0 : index
    %13 = vector.load %arg1[%c0_13, %c0_14, %c0_15, %c0_16] : memref<1x16x16x4xf32, #tpu.memory_space<vmem>>, vector<1x16x16x4xf32>
    %14 = vector.shape_cast %13 : vector<1x16x16x4xf32> to vector<16x16x4xf32>
    %c0_17 = arith.constant 0 : index
    %c0_18 = arith.constant 0 : index
    %c0_19 = arith.constant 0 : index
    %c0_20 = arith.constant 0 : index
    %15 = vector.load %arg2[%c0_17, %c0_18, %c0_19, %c0_20] : memref<1x16x16x4xf32, #tpu.memory_space<vmem>>, vector<1x16x16x4xf32>
    %16 = vector.shape_cast %15 : vector<1x16x16x4xf32> to vector<16x16x4xf32>
    %17 = tpu.concatenate %14, %16 in 2 : vector<16x16x4xf32>, vector<16x16x4xf32> -> vector<16x16x8xf32>
    %c1_21 = arith.constant 1 : index
    %c1_22 = arith.constant 1 : index
    %c0_23 = arith.constant 0 : index
    %18 = vector.load %arg6[%c1_21, %c1_22, %c0_23] : memref<18x18x8xf32, #tpu.memory_space<vmem>>, vector<16x16x8xf32>
    tpu.vector_store %arg6[%c1_21, %c1_22, %c0_23], %17 {strides = array<i32>} : memref<18x18x8xf32, #tpu.memory_space<vmem>>, vector<16x16x8xf32>,
    %c0_24 = arith.constant 0 : index
    %c0_25 = arith.constant 0 : index
    %c0_26 = arith.constant 0 : index
    %19 = vector.load %arg6[%c0_24, %c0_25, %c0_26] : memref<18x18x8xf32, #tpu.memory_space<vmem>>, vector<18x18x8xf32>
    %20 = vector.extract_strided_slice %19 {offsets = [0, 0, 0], sizes = [16, 16, 8], strides = [1, 1, 1]} : vector<18x18x8xf32> to vector<16x16x8xf32>
    %21 = vector.shape_cast %20 : vector<16x16x8xf32> to vector<256x8xf32>
    %22 = vector.extract_strided_slice %19 {offsets = [0, 1, 0], sizes = [16, 16, 8], strides = [1, 1, 1]} : vector<18x18x8xf32> to vector<16x16x8xf32>
    %23 = vector.shape_cast %22 : vector<16x16x8xf32> to vector<256x8xf32>
    %24 = vector.extract_strided_slice %19 {offsets = [0, 2, 0], sizes = [16, 16, 8], strides = [1, 1, 1]} : vector<18x18x8xf32> to vector<16x16x8xf32>
    %25 = vector.shape_cast %24 : vector<16x16x8xf32> to vector<256x8xf32>
    %26 = vector.extract_strided_slice %19 {offsets = [1, 0, 0], sizes = [16, 16, 8], strides = [1, 1, 1]} : vector<18x18x8xf32> to vector<16x16x8xf32>
    %27 = vector.shape_cast %26 : vector<16x16x8xf32> to vector<256x8xf32>
    %28 = vector.extract_strided_slice %19 {offsets = [1, 1, 0], sizes = [16, 16, 8], strides = [1, 1, 1]} : vector<18x18x8xf32> to vector<16x16x8xf32>
    %29 = vector.shape_cast %28 : vector<16x16x8xf32> to vector<256x8xf32>
    %30 = vector.extract_strided_slice %19 {offsets = [1, 2, 0], sizes = [16, 16, 8], strides = [1, 1, 1]} : vector<18x18x8xf32> to vector<16x16x8xf32>
    %31 = vector.shape_cast %30 : vector<16x16x8xf32> to vector<256x8xf32>
    %32 = vector.extract_strided_slice %19 {offsets = [2, 0, 0], sizes = [16, 16, 8], strides = [1, 1, 1]} : vector<18x18x8xf32> to vector<16x16x8xf32>
    %33 = vector.shape_cast %32 : vector<16x16x8xf32> to vector<256x8xf32>
    %34 = vector.extract_strided_slice %19 {offsets = [2, 1, 0], sizes = [16, 16, 8], strides = [1, 1, 1]} : vector<18x18x8xf32> to vector<16x16x8xf32>
    %35 = vector.shape_cast %34 : vector<16x16x8xf32> to vector<256x8xf32>
    %36 = vector.extract_strided_slice %19 {offsets = [2, 2, 0], sizes = [16, 16, 8], strides = [1, 1, 1]} : vector<18x18x8xf32> to vector<16x16x8xf32>
    %37 = vector.shape_cast %36 : vector<16x16x8xf32> to vector<256x8xf32>
    %38 = tpu.concatenate %21, %23, %25, %27, %29, %31, %33, %35, %37 in 1 : vector<256x8xf32>, vector<256x8xf32>, vector<256x8xf32>, vector<256x8xf32>, vector<256x8xf32>, vector<256x8xf32>, vector<256x8xf32>, vector<256x8xf32>, vector<256x8xf32> -> vector<256x72xf32>
    %c0_27 = arith.constant 0 : index
    %c0_28 = arith.constant 0 : index
    %39 = vector.load %arg3[%c0_27, %c0_28] : memref<72x8xf32, #tpu.memory_space<vmem>>, vector<72x8xf32>
    %cst_29 = arith.constant dense<0.000000e+00> : vector<256x8xf32>
    %40 = tpu.matmul %38, %39, %cst_29 {dimension_numbers = #tpu.dot_dimension_numbers<[1], [0], [0], [1], [0, 0, 1, 1], [], []>} : vector<256x72xf32>, vector<72x8xf32>, vector<256x8xf32> -> vector<256x8xf32>
    %cst_30 = arith.constant dense<0.000000e+00> : vector<8xf32>
    %41 = vector.multi_reduction <add>, %40, %cst_30 [0] : vector<256x8xf32> to vector<8xf32>
    %42 = vector.shape_cast %41 : vector<8xf32> to vector<1x8xf32>
    %43 = arith.mulf %40, %40 : vector<256x8xf32>
    %cst_31 = arith.constant dense<0.000000e+00> : vector<8xf32>
    %44 = vector.multi_reduction <add>, %43, %cst_31 [0] : vector<256x8xf32> to vector<8xf32>
    %45 = vector.shape_cast %44 : vector<8xf32> to vector<1x8xf32>
    %46 = tpu.concatenate %42, %45 in 0 : vector<1x8xf32>, vector<1x8xf32> -> vector<2x8xf32>
    %47 = arith.addf %12, %46 : vector<2x8xf32>
    %48 = vector.shape_cast %40 : vector<256x8xf32> to vector<16x16x8xf32>
    %c0_32 = arith.constant 0 : index
    %c0_33 = arith.constant 0 : index
    %c0_34 = arith.constant 0 : index
    %c0_35 = arith.constant 0 : index
    %49 = vector.load %arg4[%c0_32, %c0_33, %c0_34, %c0_35] : memref<1x16x16x8xf32, #tpu.memory_space<vmem>>, vector<1x16x16x8xf32>
    %50 = vector.shape_cast %49 : vector<1x16x16x8xf32> to vector<16x16x8xf32>
    %51 = vector.shape_cast %48 : vector<16x16x8xf32> to vector<1x16x16x8xf32>
    tpu.vector_store %arg4[%c0_32, %c0_33, %c0_34, %c0_35], %51 {strides = array<i32>} : memref<1x16x16x8xf32, #tpu.memory_space<vmem>>, vector<1x16x16x8xf32>,
    %c0_36 = arith.constant 0 : index
    %c0_37 = arith.constant 0 : index
    %c0_38 = arith.constant 0 : index
    %52 = vector.load %arg5[%c0_36, %c0_37, %c0_38] : memref<1x2x8xf32, #tpu.memory_space<vmem>>, vector<1x2x8xf32>
    %53 = vector.shape_cast %52 : vector<1x2x8xf32> to vector<2x8xf32>
    %54 = vector.shape_cast %47 : vector<2x8xf32> to vector<1x2x8xf32>
    tpu.vector_store %arg5[%c0_36, %c0_37, %c0_38], %54 {strides = array<i32>} : memref<1x2x8xf32, #tpu.memory_space<vmem>>, vector<1x2x8xf32>,
    return
  }
  func.func @transform_0(%arg0: i32) -> (i32, i32, i32, i32) {
    %c0_i32 = arith.constant 0 : i32
    %c0_i32_0 = arith.constant 0 : i32
    %c0_i32_1 = arith.constant 0 : i32
    %c0_i32_2 = arith.constant 0 : i32
    return %arg0, %c0_i32, %c0_i32_0, %c0_i32_1 : i32, i32, i32, i32
  }
  func.func @transform_1(%arg0: i32) -> (i32, i32, i32, i32) {
    %c0_i32 = arith.constant 0 : i32
    %c0_i32_0 = arith.constant 0 : i32
    %c0_i32_1 = arith.constant 0 : i32
    %c0_i32_2 = arith.constant 0 : i32
    return %arg0, %c0_i32, %c0_i32_0, %c0_i32_1 : i32, i32, i32, i32
  }
  func.func @transform_2(%arg0: i32) -> (i32, i32) {
    %c0_i32 = arith.constant 0 : i32
    %c0_i32_0 = arith.constant 0 : i32
    %c0_i32_1 = arith.constant 0 : i32
    return %c0_i32, %c0_i32_0 : i32, i32
  }
  func.func @transform_3(%arg0: i32) -> (i32, i32, i32, i32) {
    %c0_i32 = arith.constant 0 : i32
    %c0_i32_0 = arith.constant 0 : i32
    %c0_i32_1 = arith.constant 0 : i32
    %c0_i32_2 = arith.constant 0 : i32
    return %arg0, %c0_i32, %c0_i32_0, %c0_i32_1 : i32, i32, i32, i32
  }
  func.func @transform_4(%arg0: i32) -> (i32, i32, i32) {
    %c0_i32 = arith.constant 0 : i32
    %c0_i32_0 = arith.constant 0 : i32
    %c0_i32_1 = arith.constant 0 : i32
    return %arg0, %c0_i32, %c0_i32_0 : i32, i32, i32
  }
}

module attributes {stable_mosaic.version = 11 : i64} {
  func.func @_conv2_kernel(%arg0: i32, %arg1: memref<1x16x16x8xf32, #tpu.memory_space<vmem>>, %arg2: memref<2x8xf32, #tpu.memory_space<vmem>>, %arg3: memref<72x8xf32, #tpu.memory_space<vmem>>, %arg4: memref<1x16x16x8xf32, #tpu.memory_space<vmem>>, %arg5: memref<1x2x8xf32, #tpu.memory_space<vmem>>, %arg6: memref<18x18x8xf32, #tpu.memory_space<vmem>>) attributes {dimension_semantics = [#tpu.dimension_semantics<parallel>], iteration_bounds = array<i64: 2>, scalar_prefetch = 0 : i64, scratch_operands = 1 : i64, tpu.core_type = #tpu.core_type<tc>, window_params = [{transform_indices = @transform_0, window_bounds = array<i64: 1, 16, 16, 8>}, {pipeline_mode = #tpu.pipeline_mode<synchronous>, transform_indices = @transform_1, window_bounds = array<i64: 2, 8>}, {pipeline_mode = #tpu.pipeline_mode<synchronous>, transform_indices = @transform_2, window_bounds = array<i64: 72, 8>}, {transform_indices = @transform_3, window_bounds = array<i64: 1, 16, 16, 8>}, {transform_indices = @transform_4, window_bounds = array<i64: 1, 2, 8>}]} {
    %c0 = arith.constant 0 : index
    %c0_0 = arith.constant 0 : index
    %0 = vector.load %arg2[%c0, %c0_0] : memref<2x8xf32, #tpu.memory_space<vmem>>, vector<1x8xf32>
    %1 = vector.shape_cast %0 : vector<1x8xf32> to vector<1x1x8xf32>
    %c1 = arith.constant 1 : index
    %c0_1 = arith.constant 0 : index
    %2 = vector.load %arg2[%c1, %c0_1] : memref<2x8xf32, #tpu.memory_space<vmem>>, vector<1x8xf32>
    %3 = vector.shape_cast %2 : vector<1x8xf32> to vector<1x1x8xf32>
    %cst = arith.constant 0.000000e+00 : f32
    %4 = vector.broadcast %cst : f32 to vector<18x8xf32>
    %c0_2 = arith.constant 0 : index
    %c0_3 = arith.constant 0 : index
    %c0_4 = arith.constant 0 : index
    %5 = vector.load %arg6[%c0_2, %c0_3, %c0_4] : memref<18x18x8xf32, #tpu.memory_space<vmem>>, vector<1x18x8xf32>
    %6 = vector.shape_cast %5 : vector<1x18x8xf32> to vector<18x8xf32>
    %7 = vector.shape_cast %4 : vector<18x8xf32> to vector<1x18x8xf32>
    tpu.vector_store %arg6[%c0_2, %c0_3, %c0_4], %7 {strides = array<i32>} : memref<18x18x8xf32, #tpu.memory_space<vmem>>, vector<1x18x8xf32>,
    %cst_5 = arith.constant 0.000000e+00 : f32
    %8 = vector.broadcast %cst_5 : f32 to vector<18x8xf32>
    %c17 = arith.constant 17 : index
    %c0_6 = arith.constant 0 : index
    %c0_7 = arith.constant 0 : index
    %9 = vector.load %arg6[%c17, %c0_6, %c0_7] : memref<18x18x8xf32, #tpu.memory_space<vmem>>, vector<1x18x8xf32>
    %10 = vector.shape_cast %9 : vector<1x18x8xf32> to vector<18x8xf32>
    %11 = vector.shape_cast %8 : vector<18x8xf32> to vector<1x18x8xf32>
    tpu.vector_store %arg6[%c17, %c0_6, %c0_7], %11 {strides = array<i32>} : memref<18x18x8xf32, #tpu.memory_space<vmem>>, vector<1x18x8xf32>,
    %cst_8 = arith.constant 0.000000e+00 : f32
    %12 = vector.broadcast %cst_8 : f32 to vector<16x1x8xf32>
    %c1_9 = arith.constant 1 : index
    %c0_10 = arith.constant 0 : index
    %c0_11 = arith.constant 0 : index
    %13 = vector.load %arg6[%c1_9, %c0_10, %c0_11] : memref<18x18x8xf32, #tpu.memory_space<vmem>>, vector<16x1x8xf32>
    tpu.vector_store %arg6[%c1_9, %c0_10, %c0_11], %12 {strides = array<i32>} : memref<18x18x8xf32, #tpu.memory_space<vmem>>, vector<16x1x8xf32>,
    %cst_12 = arith.constant 0.000000e+00 : f32
    %14 = vector.broadcast %cst_12 : f32 to vector<16x1x8xf32>
    %c1_13 = arith.constant 1 : index
    %c17_14 = arith.constant 17 : index
    %c0_15 = arith.constant 0 : index
    %15 = vector.load %arg6[%c1_13, %c17_14, %c0_15] : memref<18x18x8xf32, #tpu.memory_space<vmem>>, vector<16x1x8xf32>
    tpu.vector_store %arg6[%c1_13, %c17_14, %c0_15], %14 {strides = array<i32>} : memref<18x18x8xf32, #tpu.memory_space<vmem>>, vector<16x1x8xf32>,
    %cst_16 = arith.constant 0.000000e+00 : f32
    %16 = vector.broadcast %cst_16 : f32 to vector<2x8xf32>
    %c0_17 = arith.constant 0 : index
    %c0_18 = arith.constant 0 : index
    %c0_19 = arith.constant 0 : index
    %c0_20 = arith.constant 0 : index
    %17 = vector.load %arg1[%c0_17, %c0_18, %c0_19, %c0_20] : memref<1x16x16x8xf32, #tpu.memory_space<vmem>>, vector<1x16x16x8xf32>
    %18 = vector.shape_cast %17 : vector<1x16x16x8xf32> to vector<16x16x8xf32>
    %19 = vector.broadcast %1 : vector<1x1x8xf32> to vector<16x16x8xf32>
    %20 = arith.mulf %18, %19 : vector<16x16x8xf32>
    %21 = vector.broadcast %3 : vector<1x1x8xf32> to vector<16x16x8xf32>
    %22 = arith.addf %20, %21 : vector<16x16x8xf32>
    %cst_21 = arith.constant 0.000000e+00 : f32
    %23 = vector.broadcast %cst_21 : f32 to vector<16x16x8xf32>
    %24 = arith.maximumf %22, %23 : vector<16x16x8xf32>
    %c1_22 = arith.constant 1 : index
    %c1_23 = arith.constant 1 : index
    %c0_24 = arith.constant 0 : index
    %25 = vector.load %arg6[%c1_22, %c1_23, %c0_24] : memref<18x18x8xf32, #tpu.memory_space<vmem>>, vector<16x16x8xf32>
    tpu.vector_store %arg6[%c1_22, %c1_23, %c0_24], %24 {strides = array<i32>} : memref<18x18x8xf32, #tpu.memory_space<vmem>>, vector<16x16x8xf32>,
    %c0_25 = arith.constant 0 : index
    %c0_26 = arith.constant 0 : index
    %c0_27 = arith.constant 0 : index
    %26 = vector.load %arg6[%c0_25, %c0_26, %c0_27] : memref<18x18x8xf32, #tpu.memory_space<vmem>>, vector<18x18x8xf32>
    %27 = vector.extract_strided_slice %26 {offsets = [0, 0, 0], sizes = [16, 16, 8], strides = [1, 1, 1]} : vector<18x18x8xf32> to vector<16x16x8xf32>
    %28 = vector.shape_cast %27 : vector<16x16x8xf32> to vector<256x8xf32>
    %29 = vector.extract_strided_slice %26 {offsets = [0, 1, 0], sizes = [16, 16, 8], strides = [1, 1, 1]} : vector<18x18x8xf32> to vector<16x16x8xf32>
    %30 = vector.shape_cast %29 : vector<16x16x8xf32> to vector<256x8xf32>
    %31 = vector.extract_strided_slice %26 {offsets = [0, 2, 0], sizes = [16, 16, 8], strides = [1, 1, 1]} : vector<18x18x8xf32> to vector<16x16x8xf32>
    %32 = vector.shape_cast %31 : vector<16x16x8xf32> to vector<256x8xf32>
    %33 = vector.extract_strided_slice %26 {offsets = [1, 0, 0], sizes = [16, 16, 8], strides = [1, 1, 1]} : vector<18x18x8xf32> to vector<16x16x8xf32>
    %34 = vector.shape_cast %33 : vector<16x16x8xf32> to vector<256x8xf32>
    %35 = vector.extract_strided_slice %26 {offsets = [1, 1, 0], sizes = [16, 16, 8], strides = [1, 1, 1]} : vector<18x18x8xf32> to vector<16x16x8xf32>
    %36 = vector.shape_cast %35 : vector<16x16x8xf32> to vector<256x8xf32>
    %37 = vector.extract_strided_slice %26 {offsets = [1, 2, 0], sizes = [16, 16, 8], strides = [1, 1, 1]} : vector<18x18x8xf32> to vector<16x16x8xf32>
    %38 = vector.shape_cast %37 : vector<16x16x8xf32> to vector<256x8xf32>
    %39 = vector.extract_strided_slice %26 {offsets = [2, 0, 0], sizes = [16, 16, 8], strides = [1, 1, 1]} : vector<18x18x8xf32> to vector<16x16x8xf32>
    %40 = vector.shape_cast %39 : vector<16x16x8xf32> to vector<256x8xf32>
    %41 = vector.extract_strided_slice %26 {offsets = [2, 1, 0], sizes = [16, 16, 8], strides = [1, 1, 1]} : vector<18x18x8xf32> to vector<16x16x8xf32>
    %42 = vector.shape_cast %41 : vector<16x16x8xf32> to vector<256x8xf32>
    %43 = vector.extract_strided_slice %26 {offsets = [2, 2, 0], sizes = [16, 16, 8], strides = [1, 1, 1]} : vector<18x18x8xf32> to vector<16x16x8xf32>
    %44 = vector.shape_cast %43 : vector<16x16x8xf32> to vector<256x8xf32>
    %45 = tpu.concatenate %28, %30, %32, %34, %36, %38, %40, %42, %44 in 1 : vector<256x8xf32>, vector<256x8xf32>, vector<256x8xf32>, vector<256x8xf32>, vector<256x8xf32>, vector<256x8xf32>, vector<256x8xf32>, vector<256x8xf32>, vector<256x8xf32> -> vector<256x72xf32>
    %c0_28 = arith.constant 0 : index
    %c0_29 = arith.constant 0 : index
    %46 = vector.load %arg3[%c0_28, %c0_29] : memref<72x8xf32, #tpu.memory_space<vmem>>, vector<72x8xf32>
    %cst_30 = arith.constant dense<0.000000e+00> : vector<256x8xf32>
    %47 = tpu.matmul %45, %46, %cst_30 {dimension_numbers = #tpu.dot_dimension_numbers<[1], [0], [0], [1], [0, 0, 1, 1], [], []>} : vector<256x72xf32>, vector<72x8xf32>, vector<256x8xf32> -> vector<256x8xf32>
    %cst_31 = arith.constant dense<0.000000e+00> : vector<8xf32>
    %48 = vector.multi_reduction <add>, %47, %cst_31 [0] : vector<256x8xf32> to vector<8xf32>
    %49 = vector.shape_cast %48 : vector<8xf32> to vector<1x8xf32>
    %50 = arith.mulf %47, %47 : vector<256x8xf32>
    %cst_32 = arith.constant dense<0.000000e+00> : vector<8xf32>
    %51 = vector.multi_reduction <add>, %50, %cst_32 [0] : vector<256x8xf32> to vector<8xf32>
    %52 = vector.shape_cast %51 : vector<8xf32> to vector<1x8xf32>
    %53 = tpu.concatenate %49, %52 in 0 : vector<1x8xf32>, vector<1x8xf32> -> vector<2x8xf32>
    %54 = arith.addf %16, %53 : vector<2x8xf32>
    %55 = vector.shape_cast %47 : vector<256x8xf32> to vector<16x16x8xf32>
    %c0_33 = arith.constant 0 : index
    %c0_34 = arith.constant 0 : index
    %c0_35 = arith.constant 0 : index
    %c0_36 = arith.constant 0 : index
    %56 = vector.load %arg4[%c0_33, %c0_34, %c0_35, %c0_36] : memref<1x16x16x8xf32, #tpu.memory_space<vmem>>, vector<1x16x16x8xf32>
    %57 = vector.shape_cast %56 : vector<1x16x16x8xf32> to vector<16x16x8xf32>
    %58 = vector.shape_cast %55 : vector<16x16x8xf32> to vector<1x16x16x8xf32>
    tpu.vector_store %arg4[%c0_33, %c0_34, %c0_35, %c0_36], %58 {strides = array<i32>} : memref<1x16x16x8xf32, #tpu.memory_space<vmem>>, vector<1x16x16x8xf32>,
    %c0_37 = arith.constant 0 : index
    %c0_38 = arith.constant 0 : index
    %c0_39 = arith.constant 0 : index
    %59 = vector.load %arg5[%c0_37, %c0_38, %c0_39] : memref<1x2x8xf32, #tpu.memory_space<vmem>>, vector<1x2x8xf32>
    %60 = vector.shape_cast %59 : vector<1x2x8xf32> to vector<2x8xf32>
    %61 = vector.shape_cast %54 : vector<2x8xf32> to vector<1x2x8xf32>
    tpu.vector_store %arg5[%c0_37, %c0_38, %c0_39], %61 {strides = array<i32>} : memref<1x2x8xf32, #tpu.memory_space<vmem>>, vector<1x2x8xf32>,
    return
  }
  func.func @transform_0(%arg0: i32) -> (i32, i32, i32, i32) {
    %c0_i32 = arith.constant 0 : i32
    %c0_i32_0 = arith.constant 0 : i32
    %c0_i32_1 = arith.constant 0 : i32
    %c0_i32_2 = arith.constant 0 : i32
    return %arg0, %c0_i32, %c0_i32_0, %c0_i32_1 : i32, i32, i32, i32
  }
  func.func @transform_1(%arg0: i32) -> (i32, i32) {
    %c0_i32 = arith.constant 0 : i32
    %c0_i32_0 = arith.constant 0 : i32
    %c0_i32_1 = arith.constant 0 : i32
    return %c0_i32, %c0_i32_0 : i32, i32
  }
  func.func @transform_2(%arg0: i32) -> (i32, i32) {
    %c0_i32 = arith.constant 0 : i32
    %c0_i32_0 = arith.constant 0 : i32
    %c0_i32_1 = arith.constant 0 : i32
    return %c0_i32, %c0_i32_0 : i32, i32
  }
  func.func @transform_3(%arg0: i32) -> (i32, i32, i32, i32) {
    %c0_i32 = arith.constant 0 : i32
    %c0_i32_0 = arith.constant 0 : i32
    %c0_i32_1 = arith.constant 0 : i32
    %c0_i32_2 = arith.constant 0 : i32
    return %arg0, %c0_i32, %c0_i32_0, %c0_i32_1 : i32, i32, i32, i32
  }
  func.func @transform_4(%arg0: i32) -> (i32, i32, i32) {
    %c0_i32 = arith.constant 0 : i32
    %c0_i32_0 = arith.constant 0 : i32
    %c0_i32_1 = arith.constant 0 : i32
    return %arg0, %c0_i32, %c0_i32_0 : i32, i32, i32
  }
}

</mosaic_0001>

<llo_original>
// kernel: up_forward.2
$region0: #{up_forward.2}
  #allocation0 [shape = 'u32[]', space=smem, size = 0x4, offset = 0x4, fixed_abs, tag = 'smem constant byte address 0x4 - core index']
  #allocation1 [shape = 'u32[72,128]{1,0:T(1,128)}', space=vmem, size = 0x9000, scoped, tag = 'internal scratch']
  #allocation2 [shape = 'f32[18,18,8]{2,1,0:T(8,128)}', space=vmem, size = 0x36000, scoped, tag = 'scratch operand']
  %s0 = inlined_call_operand.vmem [shape: f32[2,16,16,4], index: 0, kind: input, shape index: {}]
  %s1 = inlined_call_operand.vmem [shape: f32[2,16,16,4], index: 1, kind: input, shape index: {}]
  %s2 = inlined_call_operand.vmem [shape: f32[72,8], index: 2, kind: input, shape index: {}]
  %s3 = inlined_call_operand.vmem [shape: f32[2,16,16,8], index: 3, kind: output, shape index: {0}]
  %s4 = inlined_call_operand.vmem [shape: f32[2,2,8], index: 4, kind: output, shape index: {1}]
  %5 = xla_tuple %s3, %s4
  %s6 = sld [smem:[#allocation0]]
  $region53: #{up_forward.2} parent=0
    _
  %s8 = ssub.s32 1, %s6
  %s9 = scalar_select 0, %s8, %s6
  loop: start=0, step=1, limit=4
  $region2: #{up_forward.2} parent=0 // loop_pre_header
    _
  $region3: #{up_forward.2} parent=0 // loop_header
    %s11 = sphi 0, %s15
    %p12 = scmp.ge.s32.totalorder %s11, 4
    %s21 = sphi 0, %s23
    %s24 = sphi 0, %s21
    %s25 = sphi 0, %s24
    %s41 = sphi 0, %s25
    %s47 = sphi 0, %s49
    %s50 = sphi 0, %s47
    %s51 = sphi 0, %s50
    %s67 = sphi 0, %s51
    %s71 = sphi 0, %s71
    %s73 = sphi 0, %s71
    %s74 = sphi 0, %s73
    %s88 = sphi 0, %s74
    %s94 = sphi 0, %s96
    %s97 = sphi 0, %s94
    %s98 = sphi 0, %s97
    %s114 = sphi 0, %s98
    %s120 = sphi 0, %s122
    %s123 = sphi 0, %s120
    %s124 = sphi 0, %s123
    %s140 = sphi 0, %s124
  $region4: #{up_forward.2} parent=0 // loop_header_branch
    %14 = sbr.rel (%p12) target = $region8
  $region5: #{up_forward.2} parent=0 // loop_body
    %s16 = ssub.s32 %s11, 1
    %s17 = ssub.s32 %s11, 2
    %s18 = sadd.s32 %s11, 1
    %s19 = ssub.s32 %s11, %s18
    %p20 = scmp.eq.s32.totalorder %s19, 0
    %s22 = sadd.s32 %s21, 1
    %s23 = scalar_select %p20, %s21, %s22
    %p26 = pneg %p20
    %p27 = scmp.eq.s32.totalorder %s11, 1
    %p28 = por %p26, %p27
    %p29 = scmp.ne.s32.totalorder %s21, %s24
    %p30 = scmp.eq.s32.totalorder %s11, 0
    %p31 = por %p29, %p30
    %p32 = scmp.ne.s32.totalorder %s21, %s24
    %p33 = scmp.eq.s32.totalorder %s16, 1
    %p34 = por %p32, %p33
    %p35 = scmp.ne.s32.totalorder %s24, %s25
    %p36 = scmp.eq.s32.totalorder %s16, 0
    %p37 = por %p35, %p36
    %p38 = scmp.ne.s32.totalorder %s24, %s25
    %p39 = scmp.eq.s32.totalorder %s17, 1
    %p40 = por %p38, %p39
    %p42 = scmp.ne.s32.totalorder %s25, %s41
    %p43 = scmp.eq.s32.totalorder %s17, 0
    %p44 = por %p42, %p43
    %s45 = ssub.s32 %s11, %s18
    %p46 = scmp.eq.s32.totalorder %s45, 0
    %s48 = sadd.s32 %s47, 1
    %s49 = scalar_select %p46, %s47, %s48
    %p52 = pneg %p46
    %p53 = scmp.eq.s32.totalorder %s11, 1
    %p54 = por %p52, %p53
    %p55 = scmp.ne.s32.totalorder %s47, %s50
    %p56 = scmp.eq.s32.totalorder %s11, 0
    %p57 = por %p55, %p56
    %p58 = scmp.ne.s32.totalorder %s47, %s50
    %p59 = scmp.eq.s32.totalorder %s16, 1
    %p60 = por %p58, %p59
    %p61 = scmp.ne.s32.totalorder %s50, %s51
    %p62 = scmp.eq.s32.totalorder %s16, 0
    %p63 = por %p61, %p62
    %p64 = scmp.ne.s32.totalorder %s50, %s51
    %p65 = scmp.eq.s32.totalorder %s17, 1
    %p66 = por %p64, %p65
    %p68 = scmp.ne.s32.totalorder %s51, %s67
    %p69 = scmp.eq.s32.totalorder %s17, 0
    %p70 = por %p68, %p69
    %s72 = sadd.s32 %s71, 1
    %p75 = scmp.eq.s32.totalorder %s11, 1
    %p76 = scmp.ne.s32.totalorder %s71, %s73
    %p77 = scmp.eq.s32.totalorder %s11, 0
    %p78 = por %p76, %p77
    %p79 = scmp.ne.s32.totalorder %s71, %s73
    %p80 = scmp.eq.s32.totalorder %s16, 1
    %p81 = por %p79, %p80
    %p82 = scmp.ne.s32.totalorder %s73, %s74
    %p83 = scmp.eq.s32.totalorder %s16, 0
    %p84 = por %p82, %p83
    %p85 = scmp.ne.s32.totalorder %s73, %s74
    %p86 = scmp.eq.s32.totalorder %s17, 1
    %p87 = por %p85, %p86
    %p89 = scmp.ne.s32.totalorder %s74, %s88
    %p90 = scmp.eq.s32.totalorder %s17, 0
    %p91 = por %p89, %p90
    %s92 = ssub.s32 %s11, %s18
    %p93 = scmp.eq.s32.totalorder %s92, 0
    %s95 = sadd.s32 %s94, 1
    %s96 = scalar_select %p93, %s94, %s95
    %p99 = pneg %p93
    %p100 = scmp.eq.s32.totalorder %s11, 1
    %p101 = por %p99, %p100
    %p102 = scmp.ne.s32.totalorder %s94, %s97
    %p103 = scmp.eq.s32.totalorder %s11, 0
    %p104 = por %p102, %p103
    %p105 = scmp.ne.s32.totalorder %s94, %s97
    %p106 = scmp.eq.s32.totalorder %s16, 1
    %p107 = por %p105, %p106
    %p108 = scmp.ne.s32.totalorder %s97, %s98
    %p109 = scmp.eq.s32.totalorder %s16, 0
    %p110 = por %p108, %p109
    %p111 = scmp.ne.s32.totalorder %s97, %s98
    %p112 = scmp.eq.s32.totalorder %s17, 1
    %p113 = por %p111, %p112
    %p115 = scmp.ne.s32.totalorder %s98, %s114
    %p116 = scmp.eq.s32.totalorder %s17, 0
    %p117 = por %p115, %p116
    %s118 = ssub.s32 %s11, %s18
    %p119 = scmp.eq.s32.totalorder %s118, 0
    %s121 = sadd.s32 %s120, 1
    %s122 = scalar_select %p119, %s120, %s121
    %p125 = pneg %p119
    %p126 = scmp.eq.s32.totalorder %s11, 1
    %p127 = por %p125, %p126
    %p128 = scmp.ne.s32.totalorder %s120, %s123
    %p129 = scmp.eq.s32.totalorder %s11, 0
    %p130 = por %p128, %p129
    %p131 = scmp.ne.s32.totalorder %s120, %s123
    %p132 = scmp.eq.s32.totalorder %s16, 1
    %p133 = por %p131, %p132
    %p134 = scmp.ne.s32.totalorder %s123, %s124
    %p135 = scmp.eq.s32.totalorder %s16, 0
    %p136 = por %p134, %p135
    %p137 = scmp.ne.s32.totalorder %s123, %s124
    %p138 = scmp.eq.s32.totalorder %s17, 1
    %p139 = por %p137, %p138
    %p141 = scmp.ne.s32.totalorder %s124, %s140
    %p142 = scmp.eq.s32.totalorder %s17, 0
    %p143 = por %p141, %p142
    %p144 = scmp.le.s32.totalorder 1, %s11
    %p145 = scmp.lt.s32.totalorder %s11, 3
    %p146 = pnand %p144, %p145
    %p147 = pneg %p146
    // Predicated region
    $region9: #{up_forward.2} parent=5 // pred_check
      _
    $region10: #{up_forward.2} parent=5 // pred_check_branch
      %149 = sbr.rel (%p146) target = $region12
    $region11: #{up_forward.2} parent=5 // pred_region
      %s150 = ssub.s32 %s11, 1
      // Predicated region
      $region13: #{up_forward.2} parent=11 // pred_check
        %p151 = pneg %p84
      $region14: #{up_forward.2} parent=11 // pred_check_branch
        %153 = sbr.rel (%p151) target = $region16
      $region15: #{up_forward.2} parent=11 // pred_region
        _
      $region16: #{up_forward.2} parent=11 // pred_fallthru
        _
    $region12: #{up_forward.2} parent=5 // pred_fallthru
      _
    %p154 = scmp.lt.s32.totalorder %s11, 2
    // Predicated region
    $region17: #{up_forward.2} parent=5 // pred_check
      %p155 = pneg %p154
    $region18: #{up_forward.2} parent=5 // pred_check_branch
      %157 = sbr.rel (%p155) target = $region20
    $region19: #{up_forward.2} parent=5 // pred_region
      // Predicated region
      $region21: #{up_forward.2} parent=19 // pred_check
        %p158 = pneg %p31
      $region22: #{up_forward.2} parent=19 // pred_check_branch
        %160 = sbr.rel (%p158) target = $region24
      $region23: #{up_forward.2} parent=19 // pred_region
        %p161 = scmp.lt.s32.totalorder %s11, 1
        %s162 = scalar_select %p161, %s11, 1
        %s163 = smul.addr %s162, 32
        %s164 = smul.addr %s163, 8
        %s165 = scalar_lea.vmem %s0, %s164
      $region24: #{up_forward.2} parent=19 // pred_fallthru
        _
      // Predicated region
      $region25: #{up_forward.2} parent=19 // pred_check
        %p166 = pneg %p57
      $region26: #{up_forward.2} parent=19 // pred_check_branch
        %168 = sbr.rel (%p166) target = $region28
      $region27: #{up_forward.2} parent=19 // pred_region
        %p169 = scmp.lt.s32.totalorder %s11, 1
        %s170 = scalar_select %p169, %s11, 1
        %s171 = smul.addr %s170, 32
        %s172 = smul.addr %s171, 8
        %s173 = scalar_lea.vmem %s1, %s172
      $region28: #{up_forward.2} parent=19 // pred_fallthru
        _
    $region20: #{up_forward.2} parent=5 // pred_fallthru
      _
    %p174 = scmp.le.s32.totalorder 1, %s11
    %p175 = scmp.lt.s32.totalorder %s11, 3
    %p176 = pnand %p174, %p175
    %p177 = pneg %p176
    // Predicated region
    $region29: #{up_forward.2} parent=5 // pred_check
      _
    $region30: #{up_forward.2} parent=5 // pred_check_branch
      %179 = sbr.rel (%p176) target = $region32
    $region31: #{up_forward.2} parent=5 // pred_region
      %s180 = ssub.s32 %s11, 1
      %p181 = scmp.lt.s32.totalorder %s16, 1
      %s182 = scalar_select %p181, %s16, 1
      %s183 = smul.addr %s182, 32
      %s184 = smul.addr %s183, 8
      %s185 = scalar_lea.vmem %s0, %s184
      %p186 = pneg %p37
      %p187 = pneg %p34
      %p188 = scmp.lt.s32.totalorder %s16, 1
      %s189 = scalar_select %p188, %s16, 1
      %s190 = smul.addr %s189, 32
      %s191 = smul.addr %s190, 8
      %s192 = scalar_lea.vmem %s1, %s191
      %p193 = pneg %p63
      %p194 = pneg %p60
      %p195 = pneg %p84
      %p196 = pneg %p81
      %p197 = pneg %p110
      %p198 = pneg %p107
      %p199 = scmp.lt.s32.totalorder %s16, 1
      %s200 = scalar_select %p199, %s16, 1
      %s201 = smul.addr %s200, 32
      %s202 = smul.addr %s201, 8
      %s203 = scalar_lea.vmem %s3, %s202
      %p204 = pneg %p136
      %p205 = pneg %p133
      %p206 = scmp.lt.s32.totalorder %s16, 1
      %s207 = scalar_select %p206, %s16, 1
      %s208 = smul.addr %s207, 2
      %s209 = scalar_lea.vmem %s4, %s208
      %p210 = scmp.lt.s32.totalorder %s16, 1
      %s211 = scalar_select %p210, %s16, 1
      %s212 = smul.addr %s211, 32
      %s213 = smul.addr %s212, 8
      %s214 = scalar_lea.vmem %s0, %s213
      %p215 = scmp.lt.s32.totalorder %s16, 1
      %s216 = scalar_select %p215, %s16, 1
      %s217 = smul.addr %s216, 32
      %s218 = smul.addr %s217, 8
      %s219 = scalar_lea.vmem %s1, %s218
      %p220 = scmp.lt.s32.totalorder %s16, 1
      %s221 = scalar_select %p220, %s16, 1
      %s222 = smul.addr %s221, 32
      %s223 = smul.addr %s222, 8
      %s224 = scalar_lea.vmem %s3, %s223
      %p225 = scmp.lt.s32.totalorder %s16, 1
      %s226 = scalar_select %p225, %s16, 1
      %s227 = smul.addr %s226, 2
      %s228 = scalar_lea.vmem %s4, %s227
      %vm229 = vcmask 64512
      %230 = vst.msk [vmem:[#allocation2] sm:$0xff] %vm229, 0.0
      %231 = vst.msk [vmem:[#allocation2 + $0x8] sm:$0xff] %vm229, 0.0
      %vm232 = vcmask 58368
      %233 = vst.msk [vmem:[#allocation2 + $0x10] sm:$0x3] %vm232, 0.0
      %s234 = scalar_lea.vmem [#allocation2], 408
      %235 = vst.msk [vmem:[%s234] sm:$0xff] %vm229, 0.0
      %236 = vst.msk [vmem:[%s234 + $0x8] sm:$0xff] %vm229, 0.0
      %237 = vst.msk [vmem:[%s234 + $0x10] sm:$0x3] %vm232, 0.0
      %s238 = scalar_lea.vmem [#allocation2], 24
      %vm239 = vcmask 57344
      %240 = vst.msk [vmem:[%s238] sm:$0x1] %vm239, 0.0
      %241 = vst.msk [vmem:[%s238 + $0x18] sm:$0x1] %vm239, 0.0
      %242 = vst.msk [vmem:[%s238 + $0x30] sm:$0x1] %vm239, 0.0
      %243 = vst.msk [vmem:[%s238 + $0x48] sm:$0x1] %vm239, 0.0
      %244 = vst.msk [vmem:[%s238 + $0x60] sm:$0x1] %vm239, 0.0
      %245 = vst.msk [vmem:[%s238 + $0x78] sm:$0x1] %vm239, 0.0
      %246 = vst.msk [vmem:[%s238 + $0x90] sm:$0x1] %vm239, 0.0
      %247 = vst.msk [vmem:[%s238 + $0xa8] sm:$0x1] %vm239, 0.0
      %248 = vst.msk [vmem:[%s238 + $0xc0] sm:$0x1] %vm239, 0.0
      %249 = vst.msk [vmem:[%s238 + $0xd8] sm:$0x1] %vm239, 0.0
      %250 = vst.msk [vmem:[%s238 + $0xf0] sm:$0x1] %vm239, 0.0
      %251 = vst.msk [vmem:[%s238 + $0x108] sm:$0x1] %vm239, 0.0
      %252 = vst.msk [vmem:[%s238 + $0x120] sm:$0x1] %vm239, 0.0
      %253 = vst.msk [vmem:[%s238 + $0x138] sm:$0x1] %vm239, 0.0
      %254 = vst.msk [vmem:[%s238 + $0x150] sm:$0x1] %vm239, 0.0
      %255 = vst.msk [vmem:[%s238 + $0x168] sm:$0x1] %vm239, 0.0
      %256 = vst.msk [vmem:[%s238 + $0x11] sm:$0x1] %vm239, 0.0
      %257 = vst.msk [vmem:[%s238 + $0x29] sm:$0x1] %vm239, 0.0
      %258 = vst.msk [vmem:[%s238 + $0x41] sm:$0x1] %vm239, 0.0
      %259 = vst.msk [vmem:[%s238 + $0x59] sm:$0x1] %vm239, 0.0
      %260 = vst.msk [vmem:[%s238 + $0x71] sm:$0x1] %vm239, 0.0
      %261 = vst.msk [vmem:[%s238 + $0x89] sm:$0x1] %vm239, 0.0
      %262 = vst.msk [vmem:[%s238 + $0xa1] sm:$0x1] %vm239, 0.0
      %263 = vst.msk [vmem:[%s238 + $0xb9] sm:$0x1] %vm239, 0.0
      %264 = vst.msk [vmem:[%s238 + $0xd1] sm:$0x1] %vm239, 0.0
      %265 = vst.msk [vmem:[%s238 + $0xe9] sm:$0x1] %vm239, 0.0
      %266 = vst.msk [vmem:[%s238 + $0x101] sm:$0x1] %vm239, 0.0
      %267 = vst.msk [vmem:[%s238 + $0x119] sm:$0x1] %vm239, 0.0
      %268 = vst.msk [vmem:[%s238 + $0x131] sm:$0x1] %vm239, 0.0
      %269 = vst.msk [vmem:[%s238 + $0x149] sm:$0x1] %vm239, 0.0
      %270 = vst.msk [vmem:[%s238 + $0x161] sm:$0x1] %vm239, 0.0
      %271 = vst.msk [vmem:[%s238 + $0x179] sm:$0x1] %vm239, 0.0
      %v272 = vld [vmem:[%s214] sm:$0xff]
      %v273 = vld [vmem:[%s214 + $0x8] sm:$0xff]
      %v274 = vld [vmem:[%s214 + $0x10] sm:$0xff]
      %v275 = vld [vmem:[%s214 + $0x18] sm:$0xff]
      %v276 = vld [vmem:[%s214 + $0x20] sm:$0xff]
      %v277 = vld [vmem:[%s214 + $0x28] sm:$0xff]
      %v278 = vld [vmem:[%s214 + $0x30] sm:$0xff]
      %v279 = vld [vmem:[%s214 + $0x38] sm:$0xff]
      %v280 = vld [vmem:[%s214 + $0x40] sm:$0xff]
      %v281 = vld [vmem:[%s214 + $0x48] sm:$0xff]
      %v282 = vld [vmem:[%s214 + $0x50] sm:$0xff]
      %v283 = vld [vmem:[%s214 + $0x58] sm:$0xff]
      %v284 = vld [vmem:[%s214 + $0x60] sm:$0xff]
      %v285 = vld [vmem:[%s214 + $0x68] sm:$0xff]
      %v286 = vld [vmem:[%s214 + $0x70] sm:$0xff]
      %v287 = vld [vmem:[%s214 + $0x78] sm:$0xff]
      %v288 = vld [vmem:[%s214 + $0x80] sm:$0xff]
      %v289 = vld [vmem:[%s214 + $0x88] sm:$0xff]
      %v290 = vld [vmem:[%s214 + $0x90] sm:$0xff]
      %v291 = vld [vmem:[%s214 + $0x98] sm:$0xff]
      %v292 = vld [vmem:[%s214 + $0xa0] sm:$0xff]
      %v293 = vld [vmem:[%s214 + $0xa8] sm:$0xff]
      %v294 = vld [vmem:[%s214 + $0xb0] sm:$0xff]
      %v295 = vld [vmem:[%s214 + $0xb8] sm:$0xff]
      %v296 = vld [vmem:[%s214 + $0xc0] sm:$0xff]
      %v297 = vld [vmem:[%s214 + $0xc8] sm:$0xff]
      %v298 = vld [vmem:[%s214 + $0xd0] sm:$0xff]
      %v299 = vld [vmem:[%s214 + $0xd8] sm:$0xff]
      %v300 = vld [vmem:[%s214 + $0xe0] sm:$0xff]
      %v301 = vld [vmem:[%s214 + $0xe8] sm:$0xff]
      %v302 = vld [vmem:[%s214 + $0xf0] sm:$0xff]
      %v303 = vld [vmem:[%s214 + $0xf8] sm:$0xff]
      %v304 = vld [vmem:[%s219] sm:$0xff]
      %v305 = vld [vmem:[%s219 + $0x8] sm:$0xff]
      %v306 = vld [vmem:[%s219 + $0x10] sm:$0xff]
      %v307 = vld [vmem:[%s219 + $0x18] sm:$0xff]
      %v308 = vld [vmem:[%s219 + $0x20] sm:$0xff]
      %v309 = vld [vmem:[%s219 + $0x28] sm:$0xff]
      %v310 = vld [vmem:[%s219 + $0x30] sm:$0xff]
      %v311 = vld [vmem:[%s219 + $0x38] sm:$0xff]
      %v312 = vld [vmem:[%s219 + $0x40] sm:$0xff]
      %v313 = vld [vmem:[%s219 + $0x48] sm:$0xff]
      %v314 = vld [vmem:[%s219 + $0x50] sm:$0xff]
      %v315 = vld [vmem:[%s219 + $0x58] sm:$0xff]
      %v316 = vld [vmem:[%s219 + $0x60] sm:$0xff]
      %v317 = vld [vmem:[%s219 + $0x68] sm:$0xff]
      %v318 = vld [vmem:[%s219 + $0x70] sm:$0xff]
      %v319 = vld [vmem:[%s219 + $0x78] sm:$0xff]
      %v320 = vld [vmem:[%s219 + $0x80] sm:$0xff]
      %v321 = vld [vmem:[%s219 + $0x88] sm:$0xff]
      %v322 = vld [vmem:[%s219 + $0x90] sm:$0xff]
      %v323 = vld [vmem:[%s219 + $0x98] sm:$0xff]
      %v324 = vld [vmem:[%s219 + $0xa0] sm:$0xff]
      %v325 = vld [vmem:[%s219 + $0xa8] sm:$0xff]
      %v326 = vld [vmem:[%s219 + $0xb0] sm:$0xff]
      %v327 = vld [vmem:[%s219 + $0xb8] sm:$0xff]
      %v328 = vld [vmem:[%s219 + $0xc0] sm:$0xff]
      %v329 = vld [vmem:[%s219 + $0xc8] sm:$0xff]
      %v330 = vld [vmem:[%s219 + $0xd0] sm:$0xff]
      %v331 = vld [vmem:[%s219 + $0xd8] sm:$0xff]
      %v332 = vld [vmem:[%s219 + $0xe0] sm:$0xff]
      %v333 = vld [vmem:[%s219 + $0xe8] sm:$0xff]
      %v334 = vld [vmem:[%s219 + $0xf0] sm:$0xff]
      %v335 = vld [vmem:[%s219 + $0xf8] sm:$0xff]
      %368 = vrot.lane.b32.xlu0 %v304, 4
      %v369 = vpop.permute.xlu0 %368
      %370 = vrot.lane.b32.xlu0 %v305, 4
      %v371 = vpop.permute.xlu0 %370
      %372 = vrot.lane.b32.xlu0 %v306, 4
      %v373 = vpop.permute.xlu0 %372
      %374 = vrot.lane.b32.xlu0 %v307, 4
      %v375 = vpop.permute.xlu0 %374
      %376 = vrot.lane.b32.xlu0 %v308, 4
      %v377 = vpop.permute.xlu0 %376
      %378 = vrot.lane.b32.xlu0 %v309, 4
      %v379 = vpop.permute.xlu0 %378
      %380 = vrot.lane.b32.xlu0 %v310, 4
      %v381 = vpop.permute.xlu0 %380
      %382 = vrot.lane.b32.xlu0 %v311, 4
      %v383 = vpop.permute.xlu0 %382
      %384 = vrot.lane.b32.xlu0 %v312, 4
      %v385 = vpop.permute.xlu0 %384
      %386 = vrot.lane.b32.xlu0 %v313, 4
      %v387 = vpop.permute.xlu0 %386
      %388 = vrot.lane.b32.xlu0 %v314, 4
      %v389 = vpop.permute.xlu0 %388
      %390 = vrot.lane.b32.xlu0 %v315, 4
      %v391 = vpop.permute.xlu0 %390
      %392 = vrot.lane.b32.xlu0 %v316, 4
      %v393 = vpop.permute.xlu0 %392
      %394 = vrot.lane.b32.xlu0 %v317, 4
      %v395 = vpop.permute.xlu0 %394
      %396 = vrot.lane.b32.xlu0 %v318, 4
      %v397 = vpop.permute.xlu0 %396
      %398 = vrot.lane.b32.xlu0 %v319, 4
      %v399 = vpop.permute.xlu0 %398
      %400 = vrot.lane.b32.xlu0 %v320, 4
      %v401 = vpop.permute.xlu0 %400
      %402 = vrot.lane.b32.xlu0 %v321, 4
      %v403 = vpop.permute.xlu0 %402
      %404 = vrot.lane.b32.xlu0 %v322, 4
      %v405 = vpop.permute.xlu0 %404
      %406 = vrot.lane.b32.xlu0 %v323, 4
      %v407 = vpop.permute.xlu0 %406
      %408 = vrot.lane.b32.xlu0 %v324, 4
      %v409 = vpop.permute.xlu0 %408
      %410 = vrot.lane.b32.xlu0 %v325, 4
      %v411 = vpop.permute.xlu0 %410
      %412 = vrot.lane.b32.xlu0 %v326, 4
      %v413 = vpop.permute.xlu0 %412
      %414 = vrot.lane.b32.xlu0 %v327, 4
      %v415 = vpop.permute.xlu0 %414
      %416 = vrot.lane.b32.xlu0 %v328, 4
      %v417 = vpop.permute.xlu0 %416
      %418 = vrot.lane.b32.xlu0 %v329, 4
      %v419 = vpop.permute.xlu0 %418
      %420 = vrot.lane.b32.xlu0 %v330, 4
      %v421 = vpop.permute.xlu0 %420
      %422 = vrot.lane.b32.xlu0 %v331, 4
      %v423 = vpop.permute.xlu0 %422
      %424 = vrot.lane.b32.xlu0 %v332, 4
      %v425 = vpop.permute.xlu0 %424
      %426 = vrot.lane.b32.xlu0 %v333, 4
      %v427 = vpop.permute.xlu0 %426
      %428 = vrot.lane.b32.xlu0 %v334, 4
      %v429 = vpop.permute.xlu0 %428
      %430 = vrot.lane.b32.xlu0 %v335, 4
      %v431 = vpop.permute.xlu0 %430
      %vm464 = vcmask 31744
      %v465 = vsel %vm464, %v272, %v369
      %v466 = vsel %vm464, %v273, %v371
      %v467 = vsel %vm464, %v274, %v373
      %v468 = vsel %vm464, %v275, %v375
      %v469 = vsel %vm464, %v276, %v377
      %v470 = vsel %vm464, %v277, %v379
      %v471 = vsel %vm464, %v278, %v381
      %v472 = vsel %vm464, %v279, %v383
      %v473 = vsel %vm464, %v280, %v385
      %v474 = vsel %vm464, %v281, %v387
      %v475 = vsel %vm464, %v282, %v389
      %v476 = vsel %vm464, %v283, %v391
      %v477 = vsel %vm464, %v284, %v393
      %v478 = vsel %vm464, %v285, %v395
      %v479 = vsel %vm464, %v286, %v397
      %v480 = vsel %vm464, %v287, %v399
      %v481 = vsel %vm464, %v288, %v401
      %v482 = vsel %vm464, %v289, %v403
      %v483 = vsel %vm464, %v290, %v405
      %v484 = vsel %vm464, %v291, %v407
      %v485 = vsel %vm464, %v292, %v409
      %v486 = vsel %vm464, %v293, %v411
      %v487 = vsel %vm464, %v294, %v413
      %v488 = vsel %vm464, %v295, %v415
      %v489 = vsel %vm464, %v296, %v417
      %v490 = vsel %vm464, %v297, %v419
      %v491 = vsel %vm464, %v298, %v421
      %v492 = vsel %vm464, %v299, %v423
      %v493 = vsel %vm464, %v300, %v425
      %v494 = vsel %vm464, %v301, %v427
      %v495 = vsel %vm464, %v302, %v429
      %v496 = vsel %vm464, %v303, %v431
      %497 = vst.msk [vmem:[%s238 + $0x1] sm:$0xff] %vm229, %v465
      %498 = vst.msk [vmem:[%s238 + $0x9] sm:$0xff] %vm229, %v466
      %499 = vst.msk [vmem:[%s238 + $0x19] sm:$0xff] %vm229, %v467
      %500 = vst.msk [vmem:[%s238 + $0x21] sm:$0xff] %vm229, %v468
      %501 = vst.msk [vmem:[%s238 + $0x31] sm:$0xff] %vm229, %v469
      %502 = vst.msk [vmem:[%s238 + $0x39] sm:$0xff] %vm229, %v470
      %503 = vst.msk [vmem:[%s238 + $0x49] sm:$0xff] %vm229, %v471
      %504 = vst.msk [vmem:[%s238 + $0x51] sm:$0xff] %vm229, %v472
      %505 = vst.msk [vmem:[%s238 + $0x61] sm:$0xff] %vm229, %v473
      %506 = vst.msk [vmem:[%s238 + $0x69] sm:$0xff] %vm229, %v474
      %507 = vst.msk [vmem:[%s238 + $0x79] sm:$0xff] %vm229, %v475
      %508 = vst.msk [vmem:[%s238 + $0x81] sm:$0xff] %vm229, %v476
      %509 = vst.msk [vmem:[%s238 + $0x91] sm:$0xff] %vm229, %v477
      %510 = vst.msk [vmem:[%s238 + $0x99] sm:$0xff] %vm229, %v478
      %511 = vst.msk [vmem:[%s238 + $0xa9] sm:$0xff] %vm229, %v479
      %512 = vst.msk [vmem:[%s238 + $0xb1] sm:$0xff] %vm229, %v480
      %513 = vst.msk [vmem:[%s238 + $0xc1] sm:$0xff] %vm229, %v481
      %514 = vst.msk [vmem:[%s238 + $0xc9] sm:$0xff] %vm229, %v482
      %515 = vst.msk [vmem:[%s238 + $0xd9] sm:$0xff] %vm229, %v483
      %516 = vst.msk [vmem:[%s238 + $0xe1] sm:$0xff] %vm229, %v484
      %517 = vst.msk [vmem:[%s238 + $0xf1] sm:$0xff] %vm229, %v485
      %518 = vst.msk [vmem:[%s238 + $0xf9] sm:$0xff] %vm229, %v486
      %519 = vst.msk [vmem:[%s238 + $0x109] sm:$0xff] %vm229, %v487
      %520 = vst.msk [vmem:[%s238 + $0x111] sm:$0xff] %vm229, %v488
      %521 = vst.msk [vmem:[%s238 + $0x121] sm:$0xff] %vm229, %v489
      %522 = vst.msk [vmem:[%s238 + $0x129] sm:$0xff] %vm229, %v490
      %523 = vst.msk [vmem:[%s238 + $0x139] sm:$0xff] %vm229, %v491
      %524 = vst.msk [vmem:[%s238 + $0x141] sm:$0xff] %vm229, %v492
      %525 = vst.msk [vmem:[%s238 + $0x151] sm:$0xff] %vm229, %v493
      %526 = vst.msk [vmem:[%s238 + $0x159] sm:$0xff] %vm229, %v494
      %527 = vst.msk [vmem:[%s238 + $0x169] sm:$0xff] %vm229, %v495
      %528 = vst.msk [vmem:[%s238 + $0x171] sm:$0xff] %vm229, %v496
      %v529 = vld [vmem:[#allocation2] sm:$0xff]
      %v530 = vld [vmem:[#allocation2 + $0x8] sm:$0xff]
      %v531 = vld [vmem:[#allocation2 + $0x10] sm:$0x3]
      %v532 = vld [vmem:[#allocation2 + $0x18] sm:$0xff]
      %v533 = vld [vmem:[#allocation2 + $0x20] sm:$0xff]
      %v534 = vld [vmem:[#allocation2 + $0x28] sm:$0x3]
      %v535 = vld [vmem:[#allocation2 + $0x30] sm:$0xff]
      %v536 = vld [vmem:[#allocation2 + $0x38] sm:$0xff]
      %v537 = vld [vmem:[#allocation2 + $0x40] sm:$0x3]
      %v538 = vld [vmem:[#allocation2 + $0x48] sm:$0xff]
      %v539 = vld [vmem:[#allocation2 + $0x50] sm:$0xff]
      %v540 = vld [vmem:[#allocation2 + $0x58] sm:$0x3]
      %v541 = vld [vmem:[#allocation2 + $0x60] sm:$0xff]
      %v542 = vld [vmem:[#allocation2 + $0x68] sm:$0xff]
      %v543 = vld [vmem:[#allocation2 + $0x70] sm:$0x3]
      %v544 = vld [vmem:[#allocation2 + $0x78] sm:$0xff]
      %v545 = vld [vmem:[#allocation2 + $0x80] sm:$0xff]
      %v546 = vld [vmem:[#allocation2 + $0x88] sm:$0x3]
      %v547 = vld [vmem:[#allocation2 + $0x90] sm:$0xff]
      %v548 = vld [vmem:[#allocation2 + $0x98] sm:$0xff]
      %v549 = vld [vmem:[#allocation2 + $0xa0] sm:$0x3]
      %v550 = vld [vmem:[#allocation2 + $0xa8] sm:$0xff]
      %v551 = vld [vmem:[#allocation2 + $0xb0] sm:$0xff]
      %v552 = vld [vmem:[#allocation2 + $0xb8] sm:$0x3]
      %v553 = vld [vmem:[#allocation2 + $0xc0] sm:$0xff]
      %v554 = vld [vmem:[#allocation2 + $0xc8] sm:$0xff]
      %v555 = vld [vmem:[#allocation2 + $0xd0] sm:$0x3]
      %v556 = vld [vmem:[#allocation2 + $0xd8] sm:$0xff]
      %v557 = vld [vmem:[#allocation2 + $0xe0] sm:$0xff]
      %v558 = vld [vmem:[#allocation2 + $0xe8] sm:$0x3]
      %v559 = vld [vmem:[#allocation2 + $0xf0] sm:$0xff]
      %v560 = vld [vmem:[#allocation2 + $0xf8] sm:$0xff]
      %v561 = vld [vmem:[#allocation2 + $0x100] sm:$0x3]
      %v562 = vld [vmem:[#allocation2 + $0x108] sm:$0xff]
      %v563 = vld [vmem:[#allocation2 + $0x110] sm:$0xff]
      %v564 = vld [vmem:[#allocation2 + $0x118] sm:$0x3]
      %v565 = vld [vmem:[#allocation2 + $0x120] sm:$0xff]
      %v566 = vld [vmem:[#allocation2 + $0x128] sm:$0xff]
      %v567 = vld [vmem:[#allocation2 + $0x130] sm:$0x3]
      %v568 = vld [vmem:[#allocation2 + $0x138] sm:$0xff]
      %v569 = vld [vmem:[#allocation2 + $0x140] sm:$0xff]
      %v570 = vld [vmem:[#allocation2 + $0x148] sm:$0x3]
      %v571 = vld [vmem:[#allocation2 + $0x150] sm:$0xff]
      %v572 = vld [vmem:[#allocation2 + $0x158] sm:$0xff]
      %v573 = vld [vmem:[#allocation2 + $0x160] sm:$0x3]
      %v574 = vld [vmem:[#allocation2 + $0x168] sm:$0xff]
      %v575 = vld [vmem:[#allocation2 + $0x170] sm:$0xff]
      %v576 = vld [vmem:[#allocation2 + $0x178] sm:$0x3]
      %v577 = vld [vmem:[#allocation2 + $0x180] sm:$0xff]
      %v578 = vld [vmem:[#allocation2 + $0x188] sm:$0xff]
      %v579 = vld [vmem:[#allocation2 + $0x190] sm:$0x3]
      %v580 = vld [vmem:[#allocation2 + $0x198] sm:$0xff]
      %v581 = vld [vmem:[#allocation2 + $0x1a0] sm:$0xff]
      %v582 = vld [vmem:[#allocation2 + $0x1a8] sm:$0x3]
      %vm631 = vcmask 1046528
      %v632 = vrot.slane %v529, 1
      %v633 = vrot.slane %v530, 1
      %v634 = vsel %vm631, %v632, %v633
      %v635 = vrot.slane %v531, 1
      %v636 = vsel %vm631, %v633, %v635
      %v637 = vrot.slane %v532, 1
      %v638 = vrot.slane %v533, 1
      %v639 = vsel %vm631, %v637, %v638
      %v640 = vrot.slane %v534, 1
      %v641 = vsel %vm631, %v638, %v640
      %v642 = vrot.slane %v535, 1
      %v643 = vrot.slane %v536, 1
      %v644 = vsel %vm631, %v642, %v643
      %v645 = vrot.slane %v537, 1
      %v646 = vsel %vm631, %v643, %v645
      %v647 = vrot.slane %v538, 1
      %v648 = vrot.slane %v539, 1
      %v649 = vsel %vm631, %v647, %v648
      %v650 = vrot.slane %v540, 1
      %v651 = vsel %vm631, %v648, %v650
      %v652 = vrot.slane %v541, 1
      %v653 = vrot.slane %v542, 1
      %v654 = vsel %vm631, %v652, %v653
      %v655 = vrot.slane %v543, 1
      %v656 = vsel %vm631, %v653, %v655
      %v657 = vrot.slane %v544, 1
      %v658 = vrot.slane %v545, 1
      %v659 = vsel %vm631, %v657, %v658
      %v660 = vrot.slane %v546, 1
      %v661 = vsel %vm631, %v658, %v660
      %v662 = vrot.slane %v547, 1
      %v663 = vrot.slane %v548, 1
      %v664 = vsel %vm631, %v662, %v663
      %v665 = vrot.slane %v549, 1
      %v666 = vsel %vm631, %v663, %v665
      %v667 = vrot.slane %v550, 1
      %v668 = vrot.slane %v551, 1
      %v669 = vsel %vm631, %v667, %v668
      %v670 = vrot.slane %v552, 1
      %v671 = vsel %vm631, %v668, %v670
      %v672 = vrot.slane %v553, 1
      %v673 = vrot.slane %v554, 1
      %v674 = vsel %vm631, %v672, %v673
      %v675 = vrot.slane %v555, 1
      %v676 = vsel %vm631, %v673, %v675
      %v677 = vrot.slane %v556, 1
      %v678 = vrot.slane %v557, 1
      %v679 = vsel %vm631, %v677, %v678
      %v680 = vrot.slane %v558, 1
      %v681 = vsel %vm631, %v678, %v680
      %v682 = vrot.slane %v559, 1
      %v683 = vrot.slane %v560, 1
      %v684 = vsel %vm631, %v682, %v683
      %v685 = vrot.slane %v561, 1
      %v686 = vsel %vm631, %v683, %v685
      %v687 = vrot.slane %v562, 1
      %v688 = vrot.slane %v563, 1
      %v689 = vsel %vm631, %v687, %v688
      %v690 = vrot.slane %v564, 1
      %v691 = vsel %vm631, %v688, %v690
      %v692 = vrot.slane %v565, 1
      %v693 = vrot.slane %v566, 1
      %v694 = vsel %vm631, %v692, %v693
      %v695 = vrot.slane %v567, 1
      %v696 = vsel %vm631, %v693, %v695
      %v697 = vrot.slane %v568, 1
      %v698 = vrot.slane %v569, 1
      %v699 = vsel %vm631, %v697, %v698
      %v700 = vrot.slane %v570, 1
      %v701 = vsel %vm631, %v698, %v700
      %v702 = vrot.slane %v571, 1
      %v703 = vrot.slane %v572, 1
      %v704 = vsel %vm631, %v702, %v703
      %v705 = vrot.slane %v573, 1
      %v706 = vsel %vm631, %v703, %v705
      %v707 = vrot.slane %v574, 1
      %v708 = vrot.slane %v575, 1
      %v709 = vsel %vm631, %v707, %v708
      %v710 = vrot.slane %v576, 1
      %v711 = vsel %vm631, %v708, %v710
      %vm712 = vcmask 1045504
      %v713 = vrot.slane %v529, 2
      %v714 = vrot.slane %v530, 2
      %v715 = vsel %vm712, %v713, %v714
      %v716 = vrot.slane %v531, 2
      %v717 = vsel %vm712, %v714, %v716
      %v718 = vrot.slane %v532, 2
      %v719 = vrot.slane %v533, 2
      %v720 = vsel %vm712, %v718, %v719
      %v721 = vrot.slane %v534, 2
      %v722 = vsel %vm712, %v719, %v721
      %v723 = vrot.slane %v535, 2
      %v724 = vrot.slane %v536, 2
      %v725 = vsel %vm712, %v723, %v724
      %v726 = vrot.slane %v537, 2
      %v727 = vsel %vm712, %v724, %v726
      %v728 = vrot.slane %v538, 2
      %v729 = vrot.slane %v539, 2
      %v730 = vsel %vm712, %v728, %v729
      %v731 = vrot.slane %v540, 2
      %v732 = vsel %vm712, %v729, %v731
      %v733 = vrot.slane %v541, 2
      %v734 = vrot.slane %v542, 2
      %v735 = vsel %vm712, %v733, %v734
      %v736 = vrot.slane %v543, 2
      %v737 = vsel %vm712, %v734, %v736
      %v738 = vrot.slane %v544, 2
      %v739 = vrot.slane %v545, 2
      %v740 = vsel %vm712, %v738, %v739
      %v741 = vrot.slane %v546, 2
      %v742 = vsel %vm712, %v739, %v741
      %v743 = vrot.slane %v547, 2
      %v744 = vrot.slane %v548, 2
      %v745 = vsel %vm712, %v743, %v744
      %v746 = vrot.slane %v549, 2
      %v747 = vsel %vm712, %v744, %v746
      %v748 = vrot.slane %v550, 2
      %v749 = vrot.slane %v551, 2
      %v750 = vsel %vm712, %v748, %v749
      %v751 = vrot.slane %v552, 2
      %v752 = vsel %vm712, %v749, %v751
      %v753 = vrot.slane %v553, 2
      %v754 = vrot.slane %v554, 2
      %v755 = vsel %vm712, %v753, %v754
      %v756 = vrot.slane %v555, 2
      %v757 = vsel %vm712, %v754, %v756
      %v758 = vrot.slane %v556, 2
      %v759 = vrot.slane %v557, 2
      %v760 = vsel %vm712, %v758, %v759
      %v761 = vrot.slane %v558, 2
      %v762 = vsel %vm712, %v759, %v761
      %v763 = vrot.slane %v559, 2
      %v764 = vrot.slane %v560, 2
      %v765 = vsel %vm712, %v763, %v764
      %v766 = vrot.slane %v561, 2
      %v767 = vsel %vm712, %v764, %v766
      %v768 = vrot.slane %v562, 2
      %v769 = vrot.slane %v563, 2
      %v770 = vsel %vm712, %v768, %v769
      %v771 = vrot.slane %v564, 2
      %v772 = vsel %vm712, %v769, %v771
      %v773 = vrot.slane %v565, 2
      %v774 = vrot.slane %v566, 2
      %v775 = vsel %vm712, %v773, %v774
      %v776 = vrot.slane %v567, 2
      %v777 = vsel %vm712, %v774, %v776
      %v778 = vrot.slane %v568, 2
      %v779 = vrot.slane %v569, 2
      %v780 = vsel %vm712, %v778, %v779
      %v781 = vrot.slane %v570, 2
      %v782 = vsel %vm712, %v779, %v781
      %v783 = vrot.slane %v571, 2
      %v784 = vrot.slane %v572, 2
      %v785 = vsel %vm712, %v783, %v784
      %v786 = vrot.slane %v573, 2
      %v787 = vsel %vm712, %v784, %v786
      %v788 = vrot.slane %v574, 2
      %v789 = vrot.slane %v575, 2
      %v790 = vsel %vm712, %v788, %v789
      %v791 = vrot.slane %v576, 2
      %v792 = vsel %vm712, %v789, %v791
      %v796 = vrot.slane %v577, 1
      %v797 = vrot.slane %v578, 1
      %v798 = vsel %vm631, %v796, %v797
      %v799 = vrot.slane %v579, 1
      %v800 = vsel %vm631, %v797, %v799
      %v801 = vrot.slane %v577, 2
      %v802 = vrot.slane %v578, 2
      %v803 = vsel %vm712, %v801, %v802
      %v804 = vrot.slane %v579, 2
      %v805 = vsel %vm712, %v802, %v804
      %v809 = vrot.slane %v580, 1
      %v810 = vrot.slane %v581, 1
      %v811 = vsel %vm631, %v809, %v810
      %v812 = vrot.slane %v582, 1
      %v813 = vsel %vm631, %v810, %v812
      %v814 = vrot.slane %v580, 2
      %v815 = vrot.slane %v581, 2
      %v816 = vsel %vm712, %v814, %v815
      %v817 = vrot.slane %v582, 2
      %v818 = vsel %vm712, %v815, %v817
      %819 = vrot.lane.b32.xlu0 %v634, 8
      %v820 = vpop.permute.xlu0 %819
      %821 = vrot.lane.b32.xlu0 %v636, 8
      %v822 = vpop.permute.xlu0 %821
      %823 = vrot.lane.b32.xlu0 %v639, 8
      %v824 = vpop.permute.xlu0 %823
      %825 = vrot.lane.b32.xlu0 %v641, 8
      %v826 = vpop.permute.xlu0 %825
      %827 = vrot.lane.b32.xlu0 %v644, 8
      %v828 = vpop.permute.xlu0 %827
      %829 = vrot.lane.b32.xlu0 %v646, 8
      %v830 = vpop.permute.xlu0 %829
      %831 = vrot.lane.b32.xlu0 %v649, 8
      %v832 = vpop.permute.xlu0 %831
      %833 = vrot.lane.b32.xlu0 %v651, 8
      %v834 = vpop.permute.xlu0 %833
      %835 = vrot.lane.b32.xlu0 %v654, 8
      %v836 = vpop.permute.xlu0 %835
      %837 = vrot.lane.b32.xlu0 %v656, 8
      %v838 = vpop.permute.xlu0 %837
      %839 = vrot.lane.b32.xlu0 %v659, 8
      %v840 = vpop.permute.xlu0 %839
      %841 = vrot.lane.b32.xlu0 %v661, 8
      %v842 = vpop.permute.xlu0 %841
      %843 = vrot.lane.b32.xlu0 %v664, 8
      %v844 = vpop.permute.xlu0 %843
      %845 = vrot.lane.b32.xlu0 %v666, 8
      %v846 = vpop.permute.xlu0 %845
      %847 = vrot.lane.b32.xlu0 %v669, 8
      %v848 = vpop.permute.xlu0 %847
      %849 = vrot.lane.b32.xlu0 %v671, 8
      %v850 = vpop.permute.xlu0 %849
      %851 = vrot.lane.b32.xlu0 %v674, 8
      %v852 = vpop.permute.xlu0 %851
      %853 = vrot.lane.b32.xlu0 %v676, 8
      %v854 = vpop.permute.xlu0 %853
      %855 = vrot.lane.b32.xlu0 %v679, 8
      %v856 = vpop.permute.xlu0 %855
      %857 = vrot.lane.b32.xlu0 %v681, 8
      %v858 = vpop.permute.xlu0 %857
      %859 = vrot.lane.b32.xlu0 %v684, 8
      %v860 = vpop.permute.xlu0 %859
      %861 = vrot.lane.b32.xlu0 %v686, 8
      %v862 = vpop.permute.xlu0 %861
      %863 = vrot.lane.b32.xlu0 %v689, 8
      %v864 = vpop.permute.xlu0 %863
      %865 = vrot.lane.b32.xlu0 %v691, 8
      %v866 = vpop.permute.xlu0 %865
      %867 = vrot.lane.b32.xlu0 %v694, 8
      %v868 = vpop.permute.xlu0 %867
      %869 = vrot.lane.b32.xlu0 %v696, 8
      %v870 = vpop.permute.xlu0 %869
      %871 = vrot.lane.b32.xlu0 %v699, 8
      %v872 = vpop.permute.xlu0 %871
      %873 = vrot.lane.b32.xlu0 %v701, 8
      %v874 = vpop.permute.xlu0 %873
      %875 = vrot.lane.b32.xlu0 %v704, 8
      %v876 = vpop.permute.xlu0 %875
      %877 = vrot.lane.b32.xlu0 %v706, 8
      %v878 = vpop.permute.xlu0 %877
      %879 = vrot.lane.b32.xlu0 %v709, 8
      %v880 = vpop.permute.xlu0 %879
      %881 = vrot.lane.b32.xlu0 %v711, 8
      %v882 = vpop.permute.xlu0 %881
      %915 = vrot.lane.b32.xlu0 %v715, 16
      %v916 = vpop.permute.xlu0 %915
      %917 = vrot.lane.b32.xlu0 %v717, 16
      %v918 = vpop.permute.xlu0 %917
      %919 = vrot.lane.b32.xlu0 %v720, 16
      %v920 = vpop.permute.xlu0 %919
      %921 = vrot.lane.b32.xlu0 %v722, 16
      %v922 = vpop.permute.xlu0 %921
      %923 = vrot.lane.b32.xlu0 %v725, 16
      %v924 = vpop.permute.xlu0 %923
      %925 = vrot.lane.b32.xlu0 %v727, 16
      %v926 = vpop.permute.xlu0 %925
      %927 = vrot.lane.b32.xlu0 %v730, 16
      %v928 = vpop.permute.xlu0 %927
      %929 = vrot.lane.b32.xlu0 %v732, 16
      %v930 = vpop.permute.xlu0 %929
      %931 = vrot.lane.b32.xlu0 %v735, 16
      %v932 = vpop.permute.xlu0 %931
      %933 = vrot.lane.b32.xlu0 %v737, 16
      %v934 = vpop.permute.xlu0 %933
      %935 = vrot.lane.b32.xlu0 %v740, 16
      %v936 = vpop.permute.xlu0 %935
      %937 = vrot.lane.b32.xlu0 %v742, 16
      %v938 = vpop.permute.xlu0 %937
      %939 = vrot.lane.b32.xlu0 %v745, 16
      %v940 = vpop.permute.xlu0 %939
      %941 = vrot.lane.b32.xlu0 %v747, 16
      %v942 = vpop.permute.xlu0 %941
      %943 = vrot.lane.b32.xlu0 %v750, 16
      %v944 = vpop.permute.xlu0 %943
      %945 = vrot.lane.b32.xlu0 %v752, 16
      %v946 = vpop.permute.xlu0 %945
      %947 = vrot.lane.b32.xlu0 %v755, 16
      %v948 = vpop.permute.xlu0 %947
      %949 = vrot.lane.b32.xlu0 %v757, 16
      %v950 = vpop.permute.xlu0 %949
      %951 = vrot.lane.b32.xlu0 %v760, 16
      %v952 = vpop.permute.xlu0 %951
      %953 = vrot.lane.b32.xlu0 %v762, 16
      %v954 = vpop.permute.xlu0 %953
      %955 = vrot.lane.b32.xlu0 %v765, 16
      %v956 = vpop.permute.xlu0 %955
      %957 = vrot.lane.b32.xlu0 %v767, 16
      %v958 = vpop.permute.xlu0 %957
      %959 = vrot.lane.b32.xlu0 %v770, 16
      %v960 = vpop.permute.xlu0 %959
      %961 = vrot.lane.b32.xlu0 %v772, 16
      %v962 = vpop.permute.xlu0 %961
      %963 = vrot.lane.b32.xlu0 %v775, 16
      %v964 = vpop.permute.xlu0 %963
      %965 = vrot.lane.b32.xlu0 %v777, 16
      %v966 = vpop.permute.xlu0 %965
      %967 = vrot.lane.b32.xlu0 %v780, 16
      %v968 = vpop.permute.xlu0 %967
      %969 = vrot.lane.b32.xlu0 %v782, 16
      %v970 = vpop.permute.xlu0 %969
      %971 = vrot.lane.b32.xlu0 %v785, 16
      %v972 = vpop.permute.xlu0 %971
      %973 = vrot.lane.b32.xlu0 %v787, 16
      %v974 = vpop.permute.xlu0 %973
      %975 = vrot.lane.b32.xlu0 %v790, 16
      %v976 = vpop.permute.xlu0 %975
      %977 = vrot.lane.b32.xlu0 %v792, 16
      %v978 = vpop.permute.xlu0 %977
      %1011 = vrot.lane.b32.xlu0 %v532, 24
      %v1012 = vpop.permute.xlu0 %1011
      %1013 = vrot.lane.b32.xlu0 %v533, 24
      %v1014 = vpop.permute.xlu0 %1013
      %1015 = vrot.lane.b32.xlu0 %v535, 24
      %v1016 = vpop.permute.xlu0 %1015
      %1017 = vrot.lane.b32.xlu0 %v536, 24
      %v1018 = vpop.permute.xlu0 %1017
      %1019 = vrot.lane.b32.xlu0 %v538, 24
      %v1020 = vpop.permute.xlu0 %1019
      %1021 = vrot.lane.b32.xlu0 %v539, 24
      %v1022 = vpop.permute.xlu0 %1021
      %1023 = vrot.lane.b32.xlu0 %v541, 24
      %v1024 = vpop.permute.xlu0 %1023
      %1025 = vrot.lane.b32.xlu0 %v542, 24
      %v1026 = vpop.permute.xlu0 %1025
      %1027 = vrot.lane.b32.xlu0 %v544, 24
      %v1028 = vpop.permute.xlu0 %1027
      %1029 = vrot.lane.b32.xlu0 %v545, 24
      %v1030 = vpop.permute.xlu0 %1029
      %1031 = vrot.lane.b32.xlu0 %v547, 24
      %v1032 = vpop.permute.xlu0 %1031
      %1033 = vrot.lane.b32.xlu0 %v548, 24
      %v1034 = vpop.permute.xlu0 %1033
      %1035 = vrot.lane.b32.xlu0 %v550, 24
      %v1036 = vpop.permute.xlu0 %1035
      %1037 = vrot.lane.b32.xlu0 %v551, 24
      %v1038 = vpop.permute.xlu0 %1037
      %1039 = vrot.lane.b32.xlu0 %v553, 24
      %v1040 = vpop.permute.xlu0 %1039
      %1041 = vrot.lane.b32.xlu0 %v554, 24
      %v1042 = vpop.permute.xlu0 %1041
      %1043 = vrot.lane.b32.xlu0 %v556, 24
      %v1044 = vpop.permute.xlu0 %1043
      %1045 = vrot.lane.b32.xlu0 %v557, 24
      %v1046 = vpop.permute.xlu0 %1045
      %1047 = vrot.lane.b32.xlu0 %v559, 24
      %v1048 = vpop.permute.xlu0 %1047
      %1049 = vrot.lane.b32.xlu0 %v560, 24
      %v1050 = vpop.permute.xlu0 %1049
      %1051 = vrot.lane.b32.xlu0 %v562, 24
      %v1052 = vpop.permute.xlu0 %1051
      %1053 = vrot.lane.b32.xlu0 %v563, 24
      %v1054 = vpop.permute.xlu0 %1053
      %1055 = vrot.lane.b32.xlu0 %v565, 24
      %v1056 = vpop.permute.xlu0 %1055
      %1057 = vrot.lane.b32.xlu0 %v566, 24
      %v1058 = vpop.permute.xlu0 %1057
      %1059 = vrot.lane.b32.xlu0 %v568, 24
      %v1060 = vpop.permute.xlu0 %1059
      %1061 = vrot.lane.b32.xlu0 %v569, 24
      %v1062 = vpop.permute.xlu0 %1061
      %1063 = vrot.lane.b32.xlu0 %v571, 24
      %v1064 = vpop.permute.xlu0 %1063
      %1065 = vrot.lane.b32.xlu0 %v572, 24
      %v1066 = vpop.permute.xlu0 %1065
      %1067 = vrot.lane.b32.xlu0 %v574, 24
      %v1068 = vpop.permute.xlu0 %1067
      %1069 = vrot.lane.b32.xlu0 %v575, 24
      %v1070 = vpop.permute.xlu0 %1069
      %1071 = vrot.lane.b32.xlu0 %v577, 24
      %v1072 = vpop.permute.xlu0 %1071
      %1073 = vrot.lane.b32.xlu0 %v578, 24
      %v1074 = vpop.permute.xlu0 %1073
      %1107 = vrot.lane.b32.xlu0 %v639, 32
      %v1108 = vpop.permute.xlu0 %1107
      %1109 = vrot.lane.b32.xlu0 %v641, 32
      %v1110 = vpop.permute.xlu0 %1109
      %1111 = vrot.lane.b32.xlu0 %v644, 32
      %v1112 = vpop.permute.xlu0 %1111
      %1113 = vrot.lane.b32.xlu0 %v646, 32
      %v1114 = vpop.permute.xlu0 %1113
      %1115 = vrot.lane.b32.xlu0 %v649, 32
      %v1116 = vpop.permute.xlu0 %1115
      %1117 = vrot.lane.b32.xlu0 %v651, 32
      %v1118 = vpop.permute.xlu0 %1117
      %1119 = vrot.lane.b32.xlu0 %v654, 32
      %v1120 = vpop.permute.xlu0 %1119
      %1121 = vrot.lane.b32.xlu0 %v656, 32
      %v1122 = vpop.permute.xlu0 %1121
      %1123 = vrot.lane.b32.xlu0 %v659, 32
      %v1124 = vpop.permute.xlu0 %1123
      %1125 = vrot.lane.b32.xlu0 %v661, 32
      %v1126 = vpop.permute.xlu0 %1125
      %1127 = vrot.lane.b32.xlu0 %v664, 32
      %v1128 = vpop.permute.xlu0 %1127
      %1129 = vrot.lane.b32.xlu0 %v666, 32
      %v1130 = vpop.permute.xlu0 %1129
      %1131 = vrot.lane.b32.xlu0 %v669, 32
      %v1132 = vpop.permute.xlu0 %1131
      %1133 = vrot.lane.b32.xlu0 %v671, 32
      %v1134 = vpop.permute.xlu0 %1133
      %1135 = vrot.lane.b32.xlu0 %v674, 32
      %v1136 = vpop.permute.xlu0 %1135
      %1137 = vrot.lane.b32.xlu0 %v676, 32
      %v1138 = vpop.permute.xlu0 %1137
      %1139 = vrot.lane.b32.xlu0 %v679, 32
      %v1140 = vpop.permute.xlu0 %1139
      %1141 = vrot.lane.b32.xlu0 %v681, 32
      %v1142 = vpop.permute.xlu0 %1141
      %1143 = vrot.lane.b32.xlu0 %v684, 32
      %v1144 = vpop.permute.xlu0 %1143
      %1145 = vrot.lane.b32.xlu0 %v686, 32
      %v1146 = vpop.permute.xlu0 %1145
      %1147 = vrot.lane.b32.xlu0 %v689, 32
      %v1148 = vpop.permute.xlu0 %1147
      %1149 = vrot.lane.b32.xlu0 %v691, 32
      %v1150 = vpop.permute.xlu0 %1149
      %1151 = vrot.lane.b32.xlu0 %v694, 32
      %v1152 = vpop.permute.xlu0 %1151
      %1153 = vrot.lane.b32.xlu0 %v696, 32
      %v1154 = vpop.permute.xlu0 %1153
      %1155 = vrot.lane.b32.xlu0 %v699, 32
      %v1156 = vpop.permute.xlu0 %1155
      %1157 = vrot.lane.b32.xlu0 %v701, 32
      %v1158 = vpop.permute.xlu0 %1157
      %1159 = vrot.lane.b32.xlu0 %v704, 32
      %v1160 = vpop.permute.xlu0 %1159
      %1161 = vrot.lane.b32.xlu0 %v706, 32
      %v1162 = vpop.permute.xlu0 %1161
      %1163 = vrot.lane.b32.xlu0 %v709, 32
      %v1164 = vpop.permute.xlu0 %1163
      %1165 = vrot.lane.b32.xlu0 %v711, 32
      %v1166 = vpop.permute.xlu0 %1165
      %1167 = vrot.lane.b32.xlu0 %v798, 32
      %v1168 = vpop.permute.xlu0 %1167
      %1169 = vrot.lane.b32.xlu0 %v800, 32
      %v1170 = vpop.permute.xlu0 %1169
      %1203 = vrot.lane.b32.xlu0 %v720, 40
      %v1204 = vpop.permute.xlu0 %1203
      %1205 = vrot.lane.b32.xlu0 %v722, 40
      %v1206 = vpop.permute.xlu0 %1205
      %1207 = vrot.lane.b32.xlu0 %v725, 40
      %v1208 = vpop.permute.xlu0 %1207
      %1209 = vrot.lane.b32.xlu0 %v727, 40
      %v1210 = vpop.permute.xlu0 %1209
      %1211 = vrot.lane.b32.xlu0 %v730, 40
      %v1212 = vpop.permute.xlu0 %1211
      %1213 = vrot.lane.b32.xlu0 %v732, 40
      %v1214 = vpop.permute.xlu0 %1213
      %1215 = vrot.lane.b32.xlu0 %v735, 40
      %v1216 = vpop.permute.xlu0 %1215
      %1217 = vrot.lane.b32.xlu0 %v737, 40
      %v1218 = vpop.permute.xlu0 %1217
      %1219 = vrot.lane.b32.xlu0 %v740, 40
      %v1220 = vpop.permute.xlu0 %1219
      %1221 = vrot.lane.b32.xlu0 %v742, 40
      %v1222 = vpop.permute.xlu0 %1221
      %1223 = vrot.lane.b32.xlu0 %v745, 40
      %v1224 = vpop.permute.xlu0 %1223
      %1225 = vrot.lane.b32.xlu0 %v747, 40
      %v1226 = vpop.permute.xlu0 %1225
      %1227 = vrot.lane.b32.xlu0 %v750, 40
      %v1228 = vpop.permute.xlu0 %1227
      %1229 = vrot.lane.b32.xlu0 %v752, 40
      %v1230 = vpop.permute.xlu0 %1229
      %1231 = vrot.lane.b32.xlu0 %v755, 40
      %v1232 = vpop.permute.xlu0 %1231
      %1233 = vrot.lane.b32.xlu0 %v757, 40
      %v1234 = vpop.permute.xlu0 %1233
      %1235 = vrot.lane.b32.xlu0 %v760, 40
      %v1236 = vpop.permute.xlu0 %1235
      %1237 = vrot.lane.b32.xlu0 %v762, 40
      %v1238 = vpop.permute.xlu0 %1237
      %1239 = vrot.lane.b32.xlu0 %v765, 40
      %v1240 = vpop.permute.xlu0 %1239
      %1241 = vrot.lane.b32.xlu0 %v767, 40
      %v1242 = vpop.permute.xlu0 %1241
      %1243 = vrot.lane.b32.xlu0 %v770, 40
      %v1244 = vpop.permute.xlu0 %1243
      %1245 = vrot.lane.b32.xlu0 %v772, 40
      %v1246 = vpop.permute.xlu0 %1245
      %1247 = vrot.lane.b32.xlu0 %v775, 40
      %v1248 = vpop.permute.xlu0 %1247
      %1249 = vrot.lane.b32.xlu0 %v777, 40
      %v1250 = vpop.permute.xlu0 %1249
      %1251 = vrot.lane.b32.xlu0 %v780, 40
      %v1252 = vpop.permute.xlu0 %1251
      %1253 = vrot.lane.b32.xlu0 %v782, 40
      %v1254 = vpop.permute.xlu0 %1253
      %1255 = vrot.lane.b32.xlu0 %v785, 40
      %v1256 = vpop.permute.xlu0 %1255
      %1257 = vrot.lane.b32.xlu0 %v787, 40
      %v1258 = vpop.permute.xlu0 %1257
      %1259 = vrot.lane.b32.xlu0 %v790, 40
      %v1260 = vpop.permute.xlu0 %1259
      %1261 = vrot.lane.b32.xlu0 %v792, 40
      %v1262 = vpop.permute.xlu0 %1261
      %1263 = vrot.lane.b32.xlu0 %v803, 40
      %v1264 = vpop.permute.xlu0 %1263
      %1265 = vrot.lane.b32.xlu0 %v805, 40
      %v1266 = vpop.permute.xlu0 %1265
      %1299 = vrot.lane.b32.xlu0 %v535, 48
      %v1300 = vpop.permute.xlu0 %1299
      %1301 = vrot.lane.b32.xlu0 %v536, 48
      %v1302 = vpop.permute.xlu0 %1301
      %1303 = vrot.lane.b32.xlu0 %v538, 48
      %v1304 = vpop.permute.xlu0 %1303
      %1305 = vrot.lane.b32.xlu0 %v539, 48
      %v1306 = vpop.permute.xlu0 %1305
      %1307 = vrot.lane.b32.xlu0 %v541, 48
      %v1308 = vpop.permute.xlu0 %1307
      %1309 = vrot.lane.b32.xlu0 %v542, 48
      %v1310 = vpop.permute.xlu0 %1309
      %1311 = vrot.lane.b32.xlu0 %v544, 48
      %v1312 = vpop.permute.xlu0 %1311
      %1313 = vrot.lane.b32.xlu0 %v545, 48
      %v1314 = vpop.permute.xlu0 %1313
      %1315 = vrot.lane.b32.xlu0 %v547, 48
      %v1316 = vpop.permute.xlu0 %1315
      %1317 = vrot.lane.b32.xlu0 %v548, 48
      %v1318 = vpop.permute.xlu0 %1317
      %1319 = vrot.lane.b32.xlu0 %v550, 48
      %v1320 = vpop.permute.xlu0 %1319
      %1321 = vrot.lane.b32.xlu0 %v551, 48
      %v1322 = vpop.permute.xlu0 %1321
      %1323 = vrot.lane.b32.xlu0 %v553, 48
      %v1324 = vpop.permute.xlu0 %1323
      %1325 = vrot.lane.b32.xlu0 %v554, 48
      %v1326 = vpop.permute.xlu0 %1325
      %1327 = vrot.lane.b32.xlu0 %v556, 48
      %v1328 = vpop.permute.xlu0 %1327
      %1329 = vrot.lane.b32.xlu0 %v557, 48
      %v1330 = vpop.permute.xlu0 %1329
      %1331 = vrot.lane.b32.xlu0 %v559, 48
      %v1332 = vpop.permute.xlu0 %1331
      %1333 = vrot.lane.b32.xlu0 %v560, 48
      %v1334 = vpop.permute.xlu0 %1333
      %1335 = vrot.lane.b32.xlu0 %v562, 48
      %v1336 = vpop.permute.xlu0 %1335
      %1337 = vrot.lane.b32.xlu0 %v563, 48
      %v1338 = vpop.permute.xlu0 %1337
      %1339 = vrot.lane.b32.xlu0 %v565, 48
      %v1340 = vpop.permute.xlu0 %1339
      %1341 = vrot.lane.b32.xlu0 %v566, 48
      %v1342 = vpop.permute.xlu0 %1341
      %1343 = vrot.lane.b32.xlu0 %v568, 48
      %v1344 = vpop.permute.xlu0 %1343
      %1345 = vrot.lane.b32.xlu0 %v569, 48
      %v1346 = vpop.permute.xlu0 %1345
      %1347 = vrot.lane.b32.xlu0 %v571, 48
      %v1348 = vpop.permute.xlu0 %1347
      %1349 = vrot.lane.b32.xlu0 %v572, 48
      %v1350 = vpop.permute.xlu0 %1349
      %1351 = vrot.lane.b32.xlu0 %v574, 48
      %v1352 = vpop.permute.xlu0 %1351
      %1353 = vrot.lane.b32.xlu0 %v575, 48
      %v1354 = vpop.permute.xlu0 %1353
      %1355 = vrot.lane.b32.xlu0 %v577, 48
      %v1356 = vpop.permute.xlu0 %1355
      %1357 = vrot.lane.b32.xlu0 %v578, 48
      %v1358 = vpop.permute.xlu0 %1357
      %1359 = vrot.lane.b32.xlu0 %v580, 48
      %v1360 = vpop.permute.xlu0 %1359
      %1361 = vrot.lane.b32.xlu0 %v581, 48
      %v1362 = vpop.permute.xlu0 %1361
      %1395 = vrot.lane.b32.xlu0 %v644, 56
      %v1396 = vpop.permute.xlu0 %1395
      %1397 = vrot.lane.b32.xlu0 %v646, 56
      %v1398 = vpop.permute.xlu0 %1397
      %1399 = vrot.lane.b32.xlu0 %v649, 56
      %v1400 = vpop.permute.xlu0 %1399
      %1401 = vrot.lane.b32.xlu0 %v651, 56
      %v1402 = vpop.permute.xlu0 %1401
      %1403 = vrot.lane.b32.xlu0 %v654, 56
      %v1404 = vpop.permute.xlu0 %1403
      %1405 = vrot.lane.b32.xlu0 %v656, 56
      %v1406 = vpop.permute.xlu0 %1405
      %1407 = vrot.lane.b32.xlu0 %v659, 56
      %v1408 = vpop.permute.xlu0 %1407
      %1409 = vrot.lane.b32.xlu0 %v661, 56
      %v1410 = vpop.permute.xlu0 %1409
      %1411 = vrot.lane.b32.xlu0 %v664, 56
      %v1412 = vpop.permute.xlu0 %1411
      %1413 = vrot.lane.b32.xlu0 %v666, 56
      %v1414 = vpop.permute.xlu0 %1413
      %1415 = vrot.lane.b32.xlu0 %v669, 56
      %v1416 = vpop.permute.xlu0 %1415
      %1417 = vrot.lane.b32.xlu0 %v671, 56
      %v1418 = vpop.permute.xlu0 %1417
      %1419 = vrot.lane.b32.xlu0 %v674, 56
      %v1420 = vpop.permute.xlu0 %1419
      %1421 = vrot.lane.b32.xlu0 %v676, 56
      %v1422 = vpop.permute.xlu0 %1421
      %1423 = vrot.lane.b32.xlu0 %v679, 56
      %v1424 = vpop.permute.xlu0 %1423
      %1425 = vrot.lane.b32.xlu0 %v681, 56
      %v1426 = vpop.permute.xlu0 %1425
      %1427 = vrot.lane.b32.xlu0 %v684, 56
      %v1428 = vpop.permute.xlu0 %1427
      %1429 = vrot.lane.b32.xlu0 %v686, 56
      %v1430 = vpop.permute.xlu0 %1429
      %1431 = vrot.lane.b32.xlu0 %v689, 56
      %v1432 = vpop.permute.xlu0 %1431
      %1433 = vrot.lane.b32.xlu0 %v691, 56
      %v1434 = vpop.permute.xlu0 %1433
      %1435 = vrot.lane.b32.xlu0 %v694, 56
      %v1436 = vpop.permute.xlu0 %1435
      %1437 = vrot.lane.b32.xlu0 %v696, 56
      %v1438 = vpop.permute.xlu0 %1437
      %1439 = vrot.lane.b32.xlu0 %v699, 56
      %v1440 = vpop.permute.xlu0 %1439
      %1441 = vrot.lane.b32.xlu0 %v701, 56
      %v1442 = vpop.permute.xlu0 %1441
      %1443 = vrot.lane.b32.xlu0 %v704, 56
      %v1444 = vpop.permute.xlu0 %1443
      %1445 = vrot.lane.b32.xlu0 %v706, 56
      %v1446 = vpop.permute.xlu0 %1445
      %1447 = vrot.lane.b32.xlu0 %v709, 56
      %v1448 = vpop.permute.xlu0 %1447
      %1449 = vrot.lane.b32.xlu0 %v711, 56
      %v1450 = vpop.permute.xlu0 %1449
      %1451 = vrot.lane.b32.xlu0 %v798, 56
      %v1452 = vpop.permute.xlu0 %1451
      %1453 = vrot.lane.b32.xlu0 %v800, 56
      %v1454 = vpop.permute.xlu0 %1453
      %1455 = vrot.lane.b32.xlu0 %v811, 56
      %v1456 = vpop.permute.xlu0 %1455
      %1457 = vrot.lane.b32.xlu0 %v813, 56
      %v1458 = vpop.permute.xlu0 %1457
      %1491 = vrot.lane.b32.xlu0 %v725, 64
      %v1492 = vpop.permute.xlu0 %1491
      %1493 = vrot.lane.b32.xlu0 %v727, 64
      %v1494 = vpop.permute.xlu0 %1493
      %1495 = vrot.lane.b32.xlu0 %v730, 64
      %v1496 = vpop.permute.xlu0 %1495
      %1497 = vrot.lane.b32.xlu0 %v732, 64
      %v1498 = vpop.permute.xlu0 %1497
      %1499 = vrot.lane.b32.xlu0 %v735, 64
      %v1500 = vpop.permute.xlu0 %1499
      %1501 = vrot.lane.b32.xlu0 %v737, 64
      %v1502 = vpop.permute.xlu0 %1501
      %1503 = vrot.lane.b32.xlu0 %v740, 64
      %v1504 = vpop.permute.xlu0 %1503
      %1505 = vrot.lane.b32.xlu0 %v742, 64
      %v1506 = vpop.permute.xlu0 %1505
      %1507 = vrot.lane.b32.xlu0 %v745, 64
      %v1508 = vpop.permute.xlu0 %1507
      %1509 = vrot.lane.b32.xlu0 %v747, 64
      %v1510 = vpop.permute.xlu0 %1509
      %1511 = vrot.lane.b32.xlu0 %v750, 64
      %v1512 = vpop.permute.xlu0 %1511
      %1513 = vrot.lane.b32.xlu0 %v752, 64
      %v1514 = vpop.permute.xlu0 %1513
      %1515 = vrot.lane.b32.xlu0 %v755, 64
      %v1516 = vpop.permute.xlu0 %1515
      %1517 = vrot.lane.b32.xlu0 %v757, 64
      %v1518 = vpop.permute.xlu0 %1517
      %1519 = vrot.lane.b32.xlu0 %v760, 64
      %v1520 = vpop.permute.xlu0 %1519
      %1521 = vrot.lane.b32.xlu0 %v762, 64
      %v1522 = vpop.permute.xlu0 %1521
      %1523 = vrot.lane.b32.xlu0 %v765, 64
      %v1524 = vpop.permute.xlu0 %1523
      %1525 = vrot.lane.b32.xlu0 %v767, 64
      %v1526 = vpop.permute.xlu0 %1525
      %1527 = vrot.lane.b32.xlu0 %v770, 64
      %v1528 = vpop.permute.xlu0 %1527
      %1529 = vrot.lane.b32.xlu0 %v772, 64
      %v1530 = vpop.permute.xlu0 %1529
      %1531 = vrot.lane.b32.xlu0 %v775, 64
      %v1532 = vpop.permute.xlu0 %1531
      %1533 = vrot.lane.b32.xlu0 %v777, 64
      %v1534 = vpop.permute.xlu0 %1533
      %1535 = vrot.lane.b32.xlu0 %v780, 64
      %v1536 = vpop.permute.xlu0 %1535
      %1537 = vrot.lane.b32.xlu0 %v782, 64
      %v1538 = vpop.permute.xlu0 %1537
      %1539 = vrot.lane.b32.xlu0 %v785, 64
      %v1540 = vpop.permute.xlu0 %1539
      %1541 = vrot.lane.b32.xlu0 %v787, 64
      %v1542 = vpop.permute.xlu0 %1541
      %1543 = vrot.lane.b32.xlu0 %v790, 64
      %v1544 = vpop.permute.xlu0 %1543
      %1545 = vrot.lane.b32.xlu0 %v792, 64
      %v1546 = vpop.permute.xlu0 %1545
      %1547 = vrot.lane.b32.xlu0 %v803, 64
      %v1548 = vpop.permute.xlu0 %1547
      %1549 = vrot.lane.b32.xlu0 %v805, 64
      %v1550 = vpop.permute.xlu0 %1549
      %1551 = vrot.lane.b32.xlu0 %v816, 64
      %v1552 = vpop.permute.xlu0 %1551
      %1553 = vrot.lane.b32.xlu0 %v818, 64
      %v1554 = vpop.permute.xlu0 %1553
      %v1587 = vsel %vm229, %v529, %v820
      %v1588 = vsel %vm229, %v530, %v822
      %v1589 = vsel %vm229, %v532, %v824
      %v1590 = vsel %vm229, %v533, %v826
      %v1591 = vsel %vm229, %v535, %v828
      %v1592 = vsel %vm229, %v536, %v830
      %v1593 = vsel %vm229, %v538, %v832
      %v1594 = vsel %vm229, %v539, %v834
      %v1595 = vsel %vm229, %v541, %v836
      %v1596 = vsel %vm229, %v542, %v838
      %v1597 = vsel %vm229, %v544, %v840
      %v1598 = vsel %vm229, %v545, %v842
      %v1599 = vsel %vm229, %v547, %v844
      %v1600 = vsel %vm229, %v548, %v846
      %v1601 = vsel %vm229, %v550, %v848
      %v1602 = vsel %vm229, %v551, %v850
      %v1603 = vsel %vm229, %v553, %v852
      %v1604 = vsel %vm229, %v554, %v854
      %v1605 = vsel %vm229, %v556, %v856
      %v1606 = vsel %vm229, %v557, %v858
      %v1607 = vsel %vm229, %v559, %v860
      %v1608 = vsel %vm229, %v560, %v862
      %v1609 = vsel %vm229, %v562, %v864
      %v1610 = vsel %vm229, %v563, %v866
      %v1611 = vsel %vm229, %v565, %v868
      %v1612 = vsel %vm229, %v566, %v870
      %v1613 = vsel %vm229, %v568, %v872
      %v1614 = vsel %vm229, %v569, %v874
      %v1615 = vsel %vm229, %v571, %v876
      %v1616 = vsel %vm229, %v572, %v878
      %v1617 = vsel %vm229, %v574, %v880
      %v1618 = vsel %vm229, %v575, %v882
      %vm1619 = vcmask 130048
      %v1620 = vsel %vm1619, %v1587, %v916
      %v1621 = vsel %vm1619, %v1588, %v918
      %v1622 = vsel %vm1619, %v1589, %v920
      %v1623 = vsel %vm1619, %v1590, %v922
      %v1624 = vsel %vm1619, %v1591, %v924
      %v1625 = vsel %vm1619, %v1592, %v926
      %v1626 = vsel %vm1619, %v1593, %v928
      %v1627 = vsel %vm1619, %v1594, %v930
      %v1628 = vsel %vm1619, %v1595, %v932
      %v1629 = vsel %vm1619, %v1596, %v934
      %v1630 = vsel %vm1619, %v1597, %v936
      %v1631 = vsel %vm1619, %v1598, %v938
      %v1632 = vsel %vm1619, %v1599, %v940
      %v1633 = vsel %vm1619, %v1600, %v942
      %v1634 = vsel %vm1619, %v1601, %v944
      %v1635 = vsel %vm1619, %v1602, %v946
      %v1636 = vsel %vm1619, %v1603, %v948
      %v1637 = vsel %vm1619, %v1604, %v950
      %v1638 = vsel %vm1619, %v1605, %v952
      %v1639 = vsel %vm1619, %v1606, %v954
      %v1640 = vsel %vm1619, %v1607, %v956
      %v1641 = vsel %vm1619, %v1608, %v958
      %v1642 = vsel %vm1619, %v1609, %v960
      %v1643 = vsel %vm1619, %v1610, %v962
      %v1644 = vsel %vm1619, %v1611, %v964
      %v1645 = vsel %vm1619, %v1612, %v966
      %v1646 = vsel %vm1619, %v1613, %v968
      %v1647 = vsel %vm1619, %v1614, %v970
      %v1648 = vsel %vm1619, %v1615, %v972
      %v1649 = vsel %vm1619, %v1616, %v974
      %v1650 = vsel %vm1619, %v1617, %v976
      %v1651 = vsel %vm1619, %v1618, %v978
      %vm1652 = vcmask 195584
      %v1653 = vsel %vm1652, %v1620, %v1012
      %v1654 = vsel %vm1652, %v1621, %v1014
      %v1655 = vsel %vm1652, %v1622, %v1016
      %v1656 = vsel %vm1652, %v1623, %v1018
      %v1657 = vsel %vm1652, %v1624, %v1020
      %v1658 = vsel %vm1652, %v1625, %v1022
      %v1659 = vsel %vm1652, %v1626, %v1024
      %v1660 = vsel %vm1652, %v1627, %v1026
      %v1661 = vsel %vm1652, %v1628, %v1028
      %v1662 = vsel %vm1652, %v1629, %v1030
      %v1663 = vsel %vm1652, %v1630, %v1032
      %v1664 = vsel %vm1652, %v1631, %v1034
      %v1665 = vsel %vm1652, %v1632, %v1036
      %v1666 = vsel %vm1652, %v1633, %v1038
      %v1667 = vsel %vm1652, %v1634, %v1040
      %v1668 = vsel %vm1652, %v1635, %v1042
      %v1669 = vsel %vm1652, %v1636, %v1044
      %v1670 = vsel %vm1652, %v1637, %v1046
      %v1671 = vsel %vm1652, %v1638, %v1048
      %v1672 = vsel %vm1652, %v1639, %v1050
      %v1673 = vsel %vm1652, %v1640, %v1052
      %v1674 = vsel %vm1652, %v1641, %v1054
      %v1675 = vsel %vm1652, %v1642, %v1056
      %v1676 = vsel %vm1652, %v1643, %v1058
      %v1677 = vsel %vm1652, %v1644, %v1060
      %v1678 = vsel %vm1652, %v1645, %v1062
      %v1679 = vsel %vm1652, %v1646, %v1064
      %v1680 = vsel %vm1652, %v1647, %v1066
      %v1681 = vsel %vm1652, %v1648, %v1068
      %v1682 = vsel %vm1652, %v1649, %v1070
      %v1683 = vsel %vm1652, %v1650, %v1072
      %v1684 = vsel %vm1652, %v1651, %v1074
      %vm1685 = vcmask 261120
      %v1686 = vsel %vm1685, %v1653, %v1108
      %v1687 = vsel %vm1685, %v1654, %v1110
      %v1688 = vsel %vm1685, %v1655, %v1112
      %v1689 = vsel %vm1685, %v1656, %v1114
      %v1690 = vsel %vm1685, %v1657, %v1116
      %v1691 = vsel %vm1685, %v1658, %v1118
      %v1692 = vsel %vm1685, %v1659, %v1120
      %v1693 = vsel %vm1685, %v1660, %v1122
      %v1694 = vsel %vm1685, %v1661, %v1124
      %v1695 = vsel %vm1685, %v1662, %v1126
      %v1696 = vsel %vm1685, %v1663, %v1128
      %v1697 = vsel %vm1685, %v1664, %v1130
      %v1698 = vsel %vm1685, %v1665, %v1132
      %v1699 = vsel %vm1685, %v1666, %v1134
      %v1700 = vsel %vm1685, %v1667, %v1136
      %v1701 = vsel %vm1685, %v1668, %v1138
      %v1702 = vsel %vm1685, %v1669, %v1140
      %v1703 = vsel %vm1685, %v1670, %v1142
      %v1704 = vsel %vm1685, %v1671, %v1144
      %v1705 = vsel %vm1685, %v1672, %v1146
      %v1706 = vsel %vm1685, %v1673, %v1148
      %v1707 = vsel %vm1685, %v1674, %v1150
      %v1708 = vsel %vm1685, %v1675, %v1152
      %v1709 = vsel %vm1685, %v1676, %v1154
      %v1710 = vsel %vm1685, %v1677, %v1156
      %v1711 = vsel %vm1685, %v1678, %v1158
      %v1712 = vsel %vm1685, %v1679, %v1160
      %v1713 = vsel %vm1685, %v1680, %v1162
      %v1714 = vsel %vm1685, %v1681, %v1164
      %v1715 = vsel %vm1685, %v1682, %v1166
      %v1716 = vsel %vm1685, %v1683, %v1168
      %v1717 = vsel %vm1685, %v1684, %v1170
      %vm1718 = vcmask 326656
      %v1719 = vsel %vm1718, %v1686, %v1204
      %v1720 = vsel %vm1718, %v1687, %v1206
      %v1721 = vsel %vm1718, %v1688, %v1208
      %v1722 = vsel %vm1718, %v1689, %v1210
      %v1723 = vsel %vm1718, %v1690, %v1212
      %v1724 = vsel %vm1718, %v1691, %v1214
      %v1725 = vsel %vm1718, %v1692, %v1216
      %v1726 = vsel %vm1718, %v1693, %v1218
      %v1727 = vsel %vm1718, %v1694, %v1220
      %v1728 = vsel %vm1718, %v1695, %v1222
      %v1729 = vsel %vm1718, %v1696, %v1224
      %v1730 = vsel %vm1718, %v1697, %v1226
      %v1731 = vsel %vm1718, %v1698, %v1228
      %v1732 = vsel %vm1718, %v1699, %v1230
      %v1733 = vsel %vm1718, %v1700, %v1232
      %v1734 = vsel %vm1718, %v1701, %v1234
      %v1735 = vsel %vm1718, %v1702, %v1236
      %v1736 = vsel %vm1718, %v1703, %v1238
      %v1737 = vsel %vm1718, %v1704, %v1240
      %v1738 = vsel %vm1718, %v1705, %v1242
      %v1739 = vsel %vm1718, %v1706, %v1244
      %v1740 = vsel %vm1718, %v1707, %v1246
      %v1741 = vsel %vm1718, %v1708, %v1248
      %v1742 = vsel %vm1718, %v1709, %v1250
      %v1743 = vsel %vm1718, %v1710, %v1252
      %v1744 = vsel %vm1718, %v1711, %v1254
      %v1745 = vsel %vm1718, %v1712, %v1256
      %v1746 = vsel %vm1718, %v1713, %v1258
      %v1747 = vsel %vm1718, %v1714, %v1260
      %v1748 = vsel %vm1718, %v1715, %v1262
      %v1749 = vsel %vm1718, %v1716, %v1264
      %v1750 = vsel %vm1718, %v1717, %v1266
      %vm1751 = vcmask 392192
      %v1752 = vsel %vm1751, %v1719, %v1300
      %v1753 = vsel %vm1751, %v1720, %v1302
      %v1754 = vsel %vm1751, %v1721, %v1304
      %v1755 = vsel %vm1751, %v1722, %v1306
      %v1756 = vsel %vm1751, %v1723, %v1308
      %v1757 = vsel %vm1751, %v1724, %v1310
      %v1758 = vsel %vm1751, %v1725, %v1312
      %v1759 = vsel %vm1751, %v1726, %v1314
      %v1760 = vsel %vm1751, %v1727, %v1316
      %v1761 = vsel %vm1751, %v1728, %v1318
      %v1762 = vsel %vm1751, %v1729, %v1320
      %v1763 = vsel %vm1751, %v1730, %v1322
      %v1764 = vsel %vm1751, %v1731, %v1324
      %v1765 = vsel %vm1751, %v1732, %v1326
      %v1766 = vsel %vm1751, %v1733, %v1328
      %v1767 = vsel %vm1751, %v1734, %v1330
      %v1768 = vsel %vm1751, %v1735, %v1332
      %v1769 = vsel %vm1751, %v1736, %v1334
      %v1770 = vsel %vm1751, %v1737, %v1336
      %v1771 = vsel %vm1751, %v1738, %v1338
      %v1772 = vsel %vm1751, %v1739, %v1340
      %v1773 = vsel %vm1751, %v1740, %v1342
      %v1774 = vsel %vm1751, %v1741, %v1344
      %v1775 = vsel %vm1751, %v1742, %v1346
      %v1776 = vsel %vm1751, %v1743, %v1348
      %v1777 = vsel %vm1751, %v1744, %v1350
      %v1778 = vsel %vm1751, %v1745, %v1352
      %v1779 = vsel %vm1751, %v1746, %v1354
      %v1780 = vsel %vm1751, %v1747, %v1356
      %v1781 = vsel %vm1751, %v1748, %v1358
      %v1782 = vsel %vm1751, %v1749, %v1360
      %v1783 = vsel %vm1751, %v1750, %v1362
      %vm1784 = vcmask 457728
      %v1785 = vsel %vm1784, %v1752, %v1396
      %v1786 = vsel %vm1784, %v1753, %v1398
      %v1787 = vsel %vm1784, %v1754, %v1400
      %v1788 = vsel %vm1784, %v1755, %v1402
      %v1789 = vsel %vm1784, %v1756, %v1404
      %v1790 = vsel %vm1784, %v1757, %v1406
      %v1791 = vsel %vm1784, %v1758, %v1408
      %v1792 = vsel %vm1784, %v1759, %v1410
      %v1793 = vsel %vm1784, %v1760, %v1412
      %v1794 = vsel %vm1784, %v1761, %v1414
      %v1795 = vsel %vm1784, %v1762, %v1416
      %v1796 = vsel %vm1784, %v1763, %v1418
      %v1797 = vsel %vm1784, %v1764, %v1420
      %v1798 = vsel %vm1784, %v1765, %v1422
      %v1799 = vsel %vm1784, %v1766, %v1424
      %v1800 = vsel %vm1784, %v1767, %v1426
      %v1801 = vsel %vm1784, %v1768, %v1428
      %v1802 = vsel %vm1784, %v1769, %v1430
      %v1803 = vsel %vm1784, %v1770, %v1432
      %v1804 = vsel %vm1784, %v1771, %v1434
      %v1805 = vsel %vm1784, %v1772, %v1436
      %v1806 = vsel %vm1784, %v1773, %v1438
      %v1807 = vsel %vm1784, %v1774, %v1440
      %v1808 = vsel %vm1784, %v1775, %v1442
      %v1809 = vsel %vm1784, %v1776, %v1444
      %v1810 = vsel %vm1784, %v1777, %v1446
      %v1811 = vsel %vm1784, %v1778, %v1448
      %v1812 = vsel %vm1784, %v1779, %v1450
      %v1813 = vsel %vm1784, %v1780, %v1452
      %v1814 = vsel %vm1784, %v1781, %v1454
      %v1815 = vsel %vm1784, %v1782, %v1456
      %v1816 = vsel %vm1784, %v1783, %v1458
      %vm1817 = vcmask 523264
      %v1818 = vsel %vm1817, %v1785, %v1492
      %v1819 = vsel %vm1817, %v1786, %v1494
      %v1820 = vsel %vm1817, %v1787, %v1496
      %v1821 = vsel %vm1817, %v1788, %v1498
      %v1822 = vsel %vm1817, %v1789, %v1500
      %v1823 = vsel %vm1817, %v1790, %v1502
      %v1824 = vsel %vm1817, %v1791, %v1504
      %v1825 = vsel %vm1817, %v1792, %v1506
      %v1826 = vsel %vm1817, %v1793, %v1508
      %v1827 = vsel %vm1817, %v1794, %v1510
      %v1828 = vsel %vm1817, %v1795, %v1512
      %v1829 = vsel %vm1817, %v1796, %v1514
      %v1830 = vsel %vm1817, %v1797, %v1516
      %v1831 = vsel %vm1817, %v1798, %v1518
      %v1832 = vsel %vm1817, %v1799, %v1520
      %v1833 = vsel %vm1817, %v1800, %v1522
      %v1834 = vsel %vm1817, %v1801, %v1524
      %v1835 = vsel %vm1817, %v1802, %v1526
      %v1836 = vsel %vm1817, %v1803, %v1528
      %v1837 = vsel %vm1817, %v1804, %v1530
      %v1838 = vsel %vm1817, %v1805, %v1532
      %v1839 = vsel %vm1817, %v1806, %v1534
      %v1840 = vsel %vm1817, %v1807, %v1536
      %v1841 = vsel %vm1817, %v1808, %v1538
      %v1842 = vsel %vm1817, %v1809, %v1540
      %v1843 = vsel %vm1817, %v1810, %v1542
      %v1844 = vsel %vm1817, %v1811, %v1544
      %v1845 = vsel %vm1817, %v1812, %v1546
      %v1846 = vsel %vm1817, %v1813, %v1548
      %v1847 = vsel %vm1817, %v1814, %v1550
      %v1848 = vsel %vm1817, %v1815, %v1552
      %v1849 = vsel %vm1817, %v1816, %v1554
      %v1850 = vld [vmem:[%s2] sm:$0xff]
      %v1851 = vld [vmem:[%s2 + $0x8] sm:$0xff]
      %v1852 = vld [vmem:[%s2 + $0x10] sm:$0xff]
      %v1853 = vld [vmem:[%s2 + $0x18] sm:$0xff]
      %v1854 = vld [vmem:[%s2 + $0x20] sm:$0xff]
      %v1855 = vld [vmem:[%s2 + $0x28] sm:$0xff]
      %v1856 = vld [vmem:[%s2 + $0x30] sm:$0xff]
      %v1857 = vld [vmem:[%s2 + $0x38] sm:$0xff]
      %v1858 = vld [vmem:[%s2 + $0x40] sm:$0xff]
      %vm1859 = vcmask 588800
      %v1861 = vsel %vm1859, %v1818, 0
      %v1864 = vsel %vm1859, %v1819, 0
      %v1867 = vsel %vm1859, %v1820, 0
      %v1870 = vsel %vm1859, %v1821, 0
      %v1873 = vsel %vm1859, %v1822, 0
      %v1876 = vsel %vm1859, %v1823, 0
      %v1879 = vsel %vm1859, %v1824, 0
      %v1882 = vsel %vm1859, %v1825, 0
      %v1885 = vsel %vm1859, %v1826, 0
      %v1888 = vsel %vm1859, %v1827, 0
      %v1891 = vsel %vm1859, %v1828, 0
      %v1894 = vsel %vm1859, %v1829, 0
      %v1897 = vsel %vm1859, %v1830, 0
      %v1900 = vsel %vm1859, %v1831, 0
      %v1903 = vsel %vm1859, %v1832, 0
      %v1906 = vsel %vm1859, %v1833, 0
      %v1909 = vsel %vm1859, %v1834, 0
      %v1912 = vsel %vm1859, %v1835, 0
      %v1915 = vsel %vm1859, %v1836, 0
      %v1918 = vsel %vm1859, %v1837, 0
      %v1921 = vsel %vm1859, %v1838, 0
      %v1924 = vsel %vm1859, %v1839, 0
      %v1927 = vsel %vm1859, %v1840, 0
      %v1930 = vsel %vm1859, %v1841, 0
      %v1933 = vsel %vm1859, %v1842, 0
      %v1936 = vsel %vm1859, %v1843, 0
      %v1939 = vsel %vm1859, %v1844, 0
      %v1942 = vsel %vm1859, %v1845, 0
      %v1945 = vsel %vm1859, %v1846, 0
      %v1948 = vsel %vm1859, %v1847, 0
      %v1951 = vsel %vm1859, %v1848, 0
      %v1954 = vsel %vm1859, %v1849, 0
      %1956 = vmatpush.msra.mxu0 0.0
      %1957 = vmatpush.msra.mxu0 0.0
      %1958 = vmatpush.msra.mxu0 0.0
      %1959 = vmatpush.msra.mxu0 0.0
      %1960 = vmatpush.msra.mxu0 0.0
      %1961 = vmatpush.msra.mxu0 0.0
      %1962 = vmatpush.msra.mxu0 0.0
      %1963 = vmatpush.msra.mxu0 %v1858
      %1964 = vmatpush.msra.mxu0 %v1857
      %1965 = vmatpush.msra.mxu0 %v1856
      %1966 = vmatpush.msra.mxu0 %v1855
      %1967 = vmatpush.msra.mxu0 %v1854
      %1968 = vmatpush.msra.mxu0 %v1853
      %1969 = vmatpush.msra.mxu0 %v1852
      %1970 = vmatpush.msra.mxu0 %v1851
      %1971 = vmatpush.msra.mxu0 %v1850
      %1972 = vmatmul.f32.gmra.mxu0 %v1861
      %v1973 = vpop.f32.mrf.mxu0
      %v1974 = vadd.f32 0.0, %v1973
      %1975 = vmatmul.f32.gmra.mxu0 %v1864
      %v1976 = vpop.f32.mrf.mxu0
      %v1977 = vadd.f32 0.0, %v1976
      %1978 = vmatmul.f32.gmra.mxu0 %v1867
      %v1979 = vpop.f32.mrf.mxu0
      %v1980 = vadd.f32 0.0, %v1979
      %1981 = vmatmul.f32.gmra.mxu0 %v1870
      %v1982 = vpop.f32.mrf.mxu0
      %v1983 = vadd.f32 0.0, %v1982
      %1984 = vmatmul.f32.gmra.mxu0 %v1873
      %v1985 = vpop.f32.mrf.mxu0
      %v1986 = vadd.f32 0.0, %v1985
      %1987 = vmatmul.f32.gmra.mxu0 %v1876
      %v1988 = vpop.f32.mrf.mxu0
      %v1989 = vadd.f32 0.0, %v1988
      %1990 = vmatmul.f32.gmra.mxu0 %v1879
      %v1991 = vpop.f32.mrf.mxu0
      %v1992 = vadd.f32 0.0, %v1991
      %1993 = vmatmul.f32.gmra.mxu0 %v1882
      %v1994 = vpop.f32.mrf.mxu0
      %v1995 = vadd.f32 0.0, %v1994
      %1996 = vmatmul.f32.gmra.mxu0 %v1885
      %v1997 = vpop.f32.mrf.mxu0
      %v1998 = vadd.f32 0.0, %v1997
      %1999 = vmatmul.f32.gmra.mxu0 %v1888
      %v2000 = vpop.f32.mrf.mxu0
      %v2001 = vadd.f32 0.0, %v2000
      %2002 = vmatmul.f32.gmra.mxu0 %v1891
      %v2003 = vpop.f32.mrf.mxu0
      %v2004 = vadd.f32 0.0, %v2003
      %2005 = vmatmul.f32.gmra.mxu0 %v1894
      %v2006 = vpop.f32.mrf.mxu0
      %v2007 = vadd.f32 0.0, %v2006
      %2008 = vmatmul.f32.gmra.mxu0 %v1897
      %v2009 = vpop.f32.mrf.mxu0
      %v2010 = vadd.f32 0.0, %v2009
      %2011 = vmatmul.f32.gmra.mxu0 %v1900
      %v2012 = vpop.f32.mrf.mxu0
      %v2013 = vadd.f32 0.0, %v2012
      %2014 = vmatmul.f32.gmra.mxu0 %v1903
      %v2015 = vpop.f32.mrf.mxu0
      %v2016 = vadd.f32 0.0, %v2015
      %2017 = vmatmul.f32.gmra.mxu0 %v1906
      %v2018 = vpop.f32.mrf.mxu0
      %v2019 = vadd.f32 0.0, %v2018
      %2020 = vmatmul.f32.gmra.mxu0 %v1909
      %v2021 = vpop.f32.mrf.mxu0
      %v2022 = vadd.f32 0.0, %v2021
      %2023 = vmatmul.f32.gmra.mxu0 %v1912
      %v2024 = vpop.f32.mrf.mxu0
      %v2025 = vadd.f32 0.0, %v2024
      %2026 = vmatmul.f32.gmra.mxu0 %v1915
      %v2027 = vpop.f32.mrf.mxu0
      %v2028 = vadd.f32 0.0, %v2027
      %2029 = vmatmul.f32.gmra.mxu0 %v1918
      %v2030 = vpop.f32.mrf.mxu0
      %v2031 = vadd.f32 0.0, %v2030
      %2032 = vmatmul.f32.gmra.mxu0 %v1921
      %v2033 = vpop.f32.mrf.mxu0
      %v2034 = vadd.f32 0.0, %v2033
      %2035 = vmatmul.f32.gmra.mxu0 %v1924
      %v2036 = vpop.f32.mrf.mxu0
      %v2037 = vadd.f32 0.0, %v2036
      %2038 = vmatmul.f32.gmra.mxu0 %v1927
      %v2039 = vpop.f32.mrf.mxu0
      %v2040 = vadd.f32 0.0, %v2039
      %2041 = vmatmul.f32.gmra.mxu0 %v1930
      %v2042 = vpop.f32.mrf.mxu0
      %v2043 = vadd.f32 0.0, %v2042
      %2044 = vmatmul.f32.gmra.mxu0 %v1933
      %v2045 = vpop.f32.mrf.mxu0
      %v2046 = vadd.f32 0.0, %v2045
      %2047 = vmatmul.f32.gmra.mxu0 %v1936
      %v2048 = vpop.f32.mrf.mxu0
      %v2049 = vadd.f32 0.0, %v2048
      %2050 = vmatmul.f32.gmra.mxu0 %v1939
      %v2051 = vpop.f32.mrf.mxu0
      %v2052 = vadd.f32 0.0, %v2051
      %2053 = vmatmul.f32.gmra.mxu0 %v1942
      %v2054 = vpop.f32.mrf.mxu0
      %v2055 = vadd.f32 0.0, %v2054
      %2056 = vmatmul.f32.gmra.mxu0 %v1945
      %v2057 = vpop.f32.mrf.mxu0
      %v2058 = vadd.f32 0.0, %v2057
      %2059 = vmatmul.f32.gmra.mxu0 %v1948
      %v2060 = vpop.f32.mrf.mxu0
      %v2061 = vadd.f32 0.0, %v2060
      %2062 = vmatmul.f32.gmra.mxu0 %v1951
      %v2063 = vpop.f32.mrf.mxu0
      %v2064 = vadd.f32 0.0, %v2063
      %2065 = vmatmul.f32.gmra.mxu0 %v1954
      %v2066 = vpop.f32.mrf.mxu0
      %v2067 = vadd.f32 0.0, %v2066
      %2068 = vdwg.mxu0
      %v2069 = vsel %vm229, %v1974, 0.0
      %v2070 = vsel %vm229, %v1977, 0.0
      %v2071 = vadd.f32 %v2069, %v2070
      %v2072 = vsel %vm229, %v1980, 0.0
      %v2073 = vadd.f32 %v2071, %v2072
      %v2074 = vsel %vm229, %v1983, 0.0
      %v2075 = vadd.f32 %v2073, %v2074
      %v2076 = vsel %vm229, %v1986, 0.0
      %v2077 = vadd.f32 %v2075, %v2076
      %v2078 = vsel %vm229, %v1989, 0.0
      %v2079 = vadd.f32 %v2077, %v2078
      %v2080 = vsel %vm229, %v1992, 0.0
      %v2081 = vadd.f32 %v2079, %v2080
      %v2082 = vsel %vm229, %v1995, 0.0
      %v2083 = vadd.f32 %v2081, %v2082
      %v2084 = vsel %vm229, %v1998, 0.0
      %v2085 = vadd.f32 %v2083, %v2084
      %v2086 = vsel %vm229, %v2001, 0.0
      %v2087 = vadd.f32 %v2085, %v2086
      %v2088 = vsel %vm229, %v2004, 0.0
      %v2089 = vadd.f32 %v2087, %v2088
      %v2090 = vsel %vm229, %v2007, 0.0
      %v2091 = vadd.f32 %v2089, %v2090
      %v2092 = vsel %vm229, %v2010, 0.0
      %v2093 = vadd.f32 %v2091, %v2092
      %v2094 = vsel %vm229, %v2013, 0.0
      %v2095 = vadd.f32 %v2093, %v2094
      %v2096 = vsel %vm229, %v2016, 0.0
      %v2097 = vadd.f32 %v2095, %v2096
      %v2098 = vsel %vm229, %v2019, 0.0
      %v2099 = vadd.f32 %v2097, %v2098
      %v2100 = vsel %vm229, %v2022, 0.0
      %v2101 = vadd.f32 %v2099, %v2100
      %v2102 = vsel %vm229, %v2025, 0.0
      %v2103 = vadd.f32 %v2101, %v2102
      %v2104 = vsel %vm229, %v2028, 0.0
      %v2105 = vadd.f32 %v2103, %v2104
      %v2106 = vsel %vm229, %v2031, 0.0
      %v2107 = vadd.f32 %v2105, %v2106
      %v2108 = vsel %vm229, %v2034, 0.0
      %v2109 = vadd.f32 %v2107, %v2108
      %v2110 = vsel %vm229, %v2037, 0.0
      %v2111 = vadd.f32 %v2109, %v2110
      %v2112 = vsel %vm229, %v2040, 0.0
      %v2113 = vadd.f32 %v2111, %v2112
      %v2114 = vsel %vm229, %v2043, 0.0
      %v2115 = vadd.f32 %v2113, %v2114
      %v2116 = vsel %vm229, %v2046, 0.0
      %v2117 = vadd.f32 %v2115, %v2116
      %v2118 = vsel %vm229, %v2049, 0.0
      %v2119 = vadd.f32 %v2117, %v2118
      %v2120 = vsel %vm229, %v2052, 0.0
      %v2121 = vadd.f32 %v2119, %v2120
      %v2122 = vsel %vm229, %v2055, 0.0
      %v2123 = vadd.f32 %v2121, %v2122
      %v2124 = vsel %vm229, %v2058, 0.0
      %v2125 = vadd.f32 %v2123, %v2124
      %v2126 = vsel %vm229, %v2061, 0.0
      %v2127 = vadd.f32 %v2125, %v2126
      %v2128 = vsel %vm229, %v2064, 0.0
      %v2129 = vadd.f32 %v2127, %v2128
      %v2130 = vsel %vm229, %v2067, 0.0
      %v2131 = vadd.f32 %v2129, %v2130
      %v2132 = vrot.slane %v2131, 4
      %v2133 = vadd.f32 %v2131, %v2132
      %v2134 = vrot.slane %v2133, 2
      %v2135 = vadd.f32 %v2133, %v2134
      %v2136 = vrot.slane %v2135, 1
      %v2137 = vadd.f32 %v2135, %v2136
      %v2138 = vmul.f32 %v1974, %v1974
      %v2139 = vmul.f32 %v1977, %v1977
      %v2140 = vmul.f32 %v1980, %v1980
      %v2141 = vmul.f32 %v1983, %v1983
      %v2142 = vmul.f32 %v1986, %v1986
      %v2143 = vmul.f32 %v1989, %v1989
      %v2144 = vmul.f32 %v1992, %v1992
      %v2145 = vmul.f32 %v1995, %v1995
      %v2146 = vmul.f32 %v1998, %v1998
      %v2147 = vmul.f32 %v2001, %v2001
      %v2148 = vmul.f32 %v2004, %v2004
      %v2149 = vmul.f32 %v2007, %v2007
      %v2150 = vmul.f32 %v2010, %v2010
      %v2151 = vmul.f32 %v2013, %v2013
      %v2152 = vmul.f32 %v2016, %v2016
      %v2153 = vmul.f32 %v2019, %v2019
      %v2154 = vmul.f32 %v2022, %v2022
      %v2155 = vmul.f32 %v2025, %v2025
      %v2156 = vmul.f32 %v2028, %v2028
      %v2157 = vmul.f32 %v2031, %v2031
      %v2158 = vmul.f32 %v2034, %v2034
      %v2159 = vmul.f32 %v2037, %v2037
      %v2160 = vmul.f32 %v2040, %v2040
      %v2161 = vmul.f32 %v2043, %v2043
      %v2162 = vmul.f32 %v2046, %v2046
      %v2163 = vmul.f32 %v2049, %v2049
      %v2164 = vmul.f32 %v2052, %v2052
      %v2165 = vmul.f32 %v2055, %v2055
      %v2166 = vmul.f32 %v2058, %v2058
      %v2167 = vmul.f32 %v2061, %v2061
      %v2168 = vmul.f32 %v2064, %v2064
      %v2169 = vmul.f32 %v2067, %v2067
      %v2170 = vsel %vm229, %v2138, 0.0
      %v2171 = vsel %vm229, %v2139, 0.0
      %v2172 = vadd.f32 %v2170, %v2171
      %v2173 = vsel %vm229, %v2140, 0.0
      %v2174 = vadd.f32 %v2172, %v2173
      %v2175 = vsel %vm229, %v2141, 0.0
      %v2176 = vadd.f32 %v2174, %v2175
      %v2177 = vsel %vm229, %v2142, 0.0
      %v2178 = vadd.f32 %v2176, %v2177
      %v2179 = vsel %vm229, %v2143, 0.0
      %v2180 = vadd.f32 %v2178, %v2179
      %v2181 = vsel %vm229, %v2144, 0.0
      %v2182 = vadd.f32 %v2180, %v2181
      %v2183 = vsel %vm229, %v2145, 0.0
      %v2184 = vadd.f32 %v2182, %v2183
      %v2185 = vsel %vm229, %v2146, 0.0
      %v2186 = vadd.f32 %v2184, %v2185
      %v2187 = vsel %vm229, %v2147, 0.0
      %v2188 = vadd.f32 %v2186, %v2187
      %v2189 = vsel %vm229, %v2148, 0.0
      %v2190 = vadd.f32 %v2188, %v2189
      %v2191 = vsel %vm229, %v2149, 0.0
      %v2192 = vadd.f32 %v2190, %v2191
      %v2193 = vsel %vm229, %v2150, 0.0
      %v2194 = vadd.f32 %v2192, %v2193
      %v2195 = vsel %vm229, %v2151, 0.0
      %v2196 = vadd.f32 %v2194, %v2195
      %v2197 = vsel %vm229, %v2152, 0.0
      %v2198 = vadd.f32 %v2196, %v2197
      %v2199 = vsel %vm229, %v2153, 0.0
      %v2200 = vadd.f32 %v2198, %v2199
      %v2201 = vsel %vm229, %v2154, 0.0
      %v2202 = vadd.f32 %v2200, %v2201
      %v2203 = vsel %vm229, %v2155, 0.0
      %v2204 = vadd.f32 %v2202, %v2203
      %v2205 = vsel %vm229, %v2156, 0.0
      %v2206 = vadd.f32 %v2204, %v2205
      %v2207 = vsel %vm229, %v2157, 0.0
      %v2208 = vadd.f32 %v2206, %v2207
      %v2209 = vsel %vm229, %v2158, 0.0
      %v2210 = vadd.f32 %v2208, %v2209
      %v2211 = vsel %vm229, %v2159, 0.0
      %v2212 = vadd.f32 %v2210, %v2211
      %v2213 = vsel %vm229, %v2160, 0.0
      %v2214 = vadd.f32 %v2212, %v2213
      %v2215 = vsel %vm229, %v2161, 0.0
      %v2216 = vadd.f32 %v2214, %v2215
      %v2217 = vsel %vm229, %v2162, 0.0
      %v2218 = vadd.f32 %v2216, %v2217
      %v2219 = vsel %vm229, %v2163, 0.0
      %v2220 = vadd.f32 %v2218, %v2219
      %v2221 = vsel %vm229, %v2164, 0.0
      %v2222 = vadd.f32 %v2220, %v2221
      %v2223 = vsel %vm229, %v2165, 0.0
      %v2224 = vadd.f32 %v2222, %v2223
      %v2225 = vsel %vm229, %v2166, 0.0
      %v2226 = vadd.f32 %v2224, %v2225
      %v2227 = vsel %vm229, %v2167, 0.0
      %v2228 = vadd.f32 %v2226, %v2227
      %v2229 = vsel %vm229, %v2168, 0.0
      %v2230 = vadd.f32 %v2228, %v2229
      %v2231 = vsel %vm229, %v2169, 0.0
      %v2232 = vadd.f32 %v2230, %v2231
      %v2233 = vrot.slane %v2232, 4
      %v2234 = vadd.f32 %v2232, %v2233
      %v2235 = vrot.slane %v2234, 2
      %v2236 = vadd.f32 %v2234, %v2235
      %v2237 = vrot.slane %v2236, 1
      %v2238 = vadd.f32 %v2236, %v2237
      %vm2239 = vcmask 1040384
      %v2240 = vsel %vm2239, %v2137, %v2238
      %v2241 = vadd.f32 %v2240, 0.0
      %2242 = vst.msk [vmem:[%s224] sm:$0xff] %vm229, %v1974
      %2243 = vst.msk [vmem:[%s224 + $0x8] sm:$0xff] %vm229, %v1977
      %2244 = vst.msk [vmem:[%s224 + $0x10] sm:$0xff] %vm229, %v1980
      %2245 = vst.msk [vmem:[%s224 + $0x18] sm:$0xff] %vm229, %v1983
      %2246 = vst.msk [vmem:[%s224 + $0x20] sm:$0xff] %vm229, %v1986
      %2247 = vst.msk [vmem:[%s224 + $0x28] sm:$0xff] %vm229, %v1989
      %2248 = vst.msk [vmem:[%s224 + $0x30] sm:$0xff] %vm229, %v1992
      %2249 = vst.msk [vmem:[%s224 + $0x38] sm:$0xff] %vm229, %v1995
      %2250 = vst.msk [vmem:[%s224 + $0x40] sm:$0xff] %vm229, %v1998
      %2251 = vst.msk [vmem:[%s224 + $0x48] sm:$0xff] %vm229, %v2001
      %2252 = vst.msk [vmem:[%s224 + $0x50] sm:$0xff] %vm229, %v2004
      %2253 = vst.msk [vmem:[%s224 + $0x58] sm:$0xff] %vm229, %v2007
      %2254 = vst.msk [vmem:[%s224 + $0x60] sm:$0xff] %vm229, %v2010
      %2255 = vst.msk [vmem:[%s224 + $0x68] sm:$0xff] %vm229, %v2013
      %2256 = vst.msk [vmem:[%s224 + $0x70] sm:$0xff] %vm229, %v2016
      %2257 = vst.msk [vmem:[%s224 + $0x78] sm:$0xff] %vm229, %v2019
      %2258 = vst.msk [vmem:[%s224 + $0x80] sm:$0xff] %vm229, %v2022
      %2259 = vst.msk [vmem:[%s224 + $0x88] sm:$0xff] %vm229, %v2025
      %2260 = vst.msk [vmem:[%s224 + $0x90] sm:$0xff] %vm229, %v2028
      %2261 = vst.msk [vmem:[%s224 + $0x98] sm:$0xff] %vm229, %v2031
      %2262 = vst.msk [vmem:[%s224 + $0xa0] sm:$0xff] %vm229, %v2034
      %2263 = vst.msk [vmem:[%s224 + $0xa8] sm:$0xff] %vm229, %v2037
      %2264 = vst.msk [vmem:[%s224 + $0xb0] sm:$0xff] %vm229, %v2040
      %2265 = vst.msk [vmem:[%s224 + $0xb8] sm:$0xff] %vm229, %v2043
      %2266 = vst.msk [vmem:[%s224 + $0xc0] sm:$0xff] %vm229, %v2046
      %2267 = vst.msk [vmem:[%s224 + $0xc8] sm:$0xff] %vm229, %v2049
      %2268 = vst.msk [vmem:[%s224 + $0xd0] sm:$0xff] %vm229, %v2052
      %2269 = vst.msk [vmem:[%s224 + $0xd8] sm:$0xff] %vm229, %v2055
      %2270 = vst.msk [vmem:[%s224 + $0xe0] sm:$0xff] %vm229, %v2058
      %2271 = vst.msk [vmem:[%s224 + $0xe8] sm:$0xff] %vm229, %v2061
      %2272 = vst.msk [vmem:[%s224 + $0xf0] sm:$0xff] %vm229, %v2064
      %2273 = vst.msk [vmem:[%s224 + $0xf8] sm:$0xff] %vm229, %v2067
      %2274 = vst.msk [vmem:[%s228] sm:$0x3] %vm232, %v2241
      %p2275 = scmp.lt.s32.totalorder %s16, 1
      %s2276 = scalar_select %p2275, %s16, 1
      %s2277 = smul.addr %s2276, 32
      %s2278 = smul.addr %s2277, 8
      %s2279 = scalar_lea.vmem %s3, %s2278
      %p2280 = scmp.lt.s32.totalorder %s16, 1
      %s2281 = scalar_select %p2280, %s16, 1
      %s2282 = smul.addr %s2281, 2
      %s2283 = scalar_lea.vmem %s4, %s2282
      // Predicated region
      $region33: #{up_forward.2} parent=31 // pred_check
        %p2284 = pneg %p107
      $region34: #{up_forward.2} parent=31 // pred_check_branch
        %2286 = sbr.rel (%p2284) target = $region36
      $region35: #{up_forward.2} parent=31 // pred_region
        _
      $region36: #{up_forward.2} parent=31 // pred_fallthru
        _
      // Predicated region
      $region37: #{up_forward.2} parent=31 // pred_check
        %p2287 = pneg %p133
      $region38: #{up_forward.2} parent=31 // pred_check_branch
        %2289 = sbr.rel (%p2287) target = $region40
      $region39: #{up_forward.2} parent=31 // pred_region
        _
      $region40: #{up_forward.2} parent=31 // pred_fallthru
        _
    $region32: #{up_forward.2} parent=5 // pred_fallthru
      _
    %p2290 = scmp.le.s32.totalorder 2, %s11
    // Predicated region
    $region41: #{up_forward.2} parent=5 // pred_check
      %p2291 = pneg %p2290
    $region42: #{up_forward.2} parent=5 // pred_check_branch
      %2293 = sbr.rel (%p2291) target = $region44
    $region43: #{up_forward.2} parent=5 // pred_region
      %s2294 = ssub.s32 %s11, 2
      // Predicated region
      $region45: #{up_forward.2} parent=43 // pred_check
        %p2295 = pneg %p113
      $region46: #{up_forward.2} parent=43 // pred_check_branch
        %2297 = sbr.rel (%p2295) target = $region48
      $region47: #{up_forward.2} parent=43 // pred_region
        %p2298 = scmp.lt.s32.totalorder %s17, 1
        %s2299 = scalar_select %p2298, %s17, 1
        %s2300 = smul.addr %s2299, 32
        %s2301 = smul.addr %s2300, 8
        %s2302 = scalar_lea.vmem %s3, %s2301
      $region48: #{up_forward.2} parent=43 // pred_fallthru
        _
      // Predicated region
      $region49: #{up_forward.2} parent=43 // pred_check
        %p2303 = pneg %p139
      $region50: #{up_forward.2} parent=43 // pred_check_branch
        %2305 = sbr.rel (%p2303) target = $region52
      $region51: #{up_forward.2} parent=43 // pred_region
        %p2306 = scmp.lt.s32.totalorder %s17, 1
        %s2307 = scalar_select %p2306, %s17, 1
        %s2308 = smul.addr %s2307, 2
        %s2309 = scalar_lea.vmem %s4, %s2308
      $region52: #{up_forward.2} parent=43 // pred_fallthru
        _
    $region44: #{up_forward.2} parent=5 // pred_fallthru
      _
  $region6: #{up_forward.2} parent=0 // loop_footer
    %s15 = sadd.s32 1, %s11
  $region7: #{up_forward.2} parent=0 // loop_footer_branch
    %10 = sbr.rel target = $region3
  $region8: #{up_forward.2} parent=0 // loop_exit
    _

// kernel: up_forward.3
$region0: #{up_forward.3}
  #allocation0 [shape = 'u32[]', space=smem, size = 0x4, offset = 0x4, fixed_abs, tag = 'smem constant byte address 0x4 - core index']
  #allocation1 [shape = 'u32[72,128]{1,0:T(1,128)}', space=vmem, size = 0x9000, scoped, tag = 'internal scratch']
  #allocation2 [shape = 'f32[18,18,8]{2,1,0:T(8,128)}', space=vmem, size = 0x36000, scoped, tag = 'scratch operand']
  %s0 = inlined_call_operand.vmem [shape: f32[2,16,16,8], index: 0, kind: input, shape index: {}]
  %s1 = inlined_call_operand.vmem [shape: f32[2,8], index: 1, kind: input, shape index: {}]
  %s2 = inlined_call_operand.vmem [shape: f32[72,8], index: 2, kind: input, shape index: {}]
  %s3 = inlined_call_operand.vmem [shape: f32[2,16,16,8], index: 3, kind: output, shape index: {0}]
  %s4 = inlined_call_operand.vmem [shape: f32[2,2,8], index: 4, kind: output, shape index: {1}]
  %5 = xla_tuple %s3, %s4
  %s6 = sld [smem:[#allocation0]]
  $region53: #{up_forward.3} parent=0
    _
  %s8 = ssub.s32 1, %s6
  %s9 = scalar_select 0, %s8, %s6
  loop: start=0, step=1, limit=4
  $region2: #{up_forward.3} parent=0 // loop_pre_header
    _
  $region3: #{up_forward.3} parent=0 // loop_header
    %s11 = sphi 0, %s15
    %p12 = scmp.ge.s32.totalorder %s11, 4
    %s21 = sphi 0, %s23
    %s24 = sphi 0, %s21
    %s25 = sphi 0, %s24
    %s41 = sphi 0, %s25
    %s45 = sphi 0, %s45
    %s47 = sphi 0, %s45
    %s48 = sphi 0, %s47
    %s62 = sphi 0, %s48
    %s66 = sphi 0, %s66
    %s68 = sphi 0, %s66
    %s69 = sphi 0, %s68
    %s83 = sphi 0, %s69
    %s89 = sphi 0, %s91
    %s92 = sphi 0, %s89
    %s93 = sphi 0, %s92
    %s109 = sphi 0, %s93
    %s115 = sphi 0, %s117
    %s118 = sphi 0, %s115
    %s119 = sphi 0, %s118
    %s135 = sphi 0, %s119
  $region4: #{up_forward.3} parent=0 // loop_header_branch
    %14 = sbr.rel (%p12) target = $region8
  $region5: #{up_forward.3} parent=0 // loop_body
    %s16 = ssub.s32 %s11, 1
    %s17 = ssub.s32 %s11, 2
    %s18 = sadd.s32 %s11, 1
    %s19 = ssub.s32 %s11, %s18
    %p20 = scmp.eq.s32.totalorder %s19, 0
    %s22 = sadd.s32 %s21, 1
    %s23 = scalar_select %p20, %s21, %s22
    %p26 = pneg %p20
    %p27 = scmp.eq.s32.totalorder %s11, 1
    %p28 = por %p26, %p27
    %p29 = scmp.ne.s32.totalorder %s21, %s24
    %p30 = scmp.eq.s32.totalorder %s11, 0
    %p31 = por %p29, %p30
    %p32 = scmp.ne.s32.totalorder %s21, %s24
    %p33 = scmp.eq.s32.totalorder %s16, 1
    %p34 = por %p32, %p33
    %p35 = scmp.ne.s32.totalorder %s24, %s25
    %p36 = scmp.eq.s32.totalorder %s16, 0
    %p37 = por %p35, %p36
    %p38 = scmp.ne.s32.totalorder %s24, %s25
    %p39 = scmp.eq.s32.totalorder %s17, 1
    %p40 = por %p38, %p39
    %p42 = scmp.ne.s32.totalorder %s25, %s41
    %p43 = scmp.eq.s32.totalorder %s17, 0
    %p44 = por %p42, %p43
    %s46 = sadd.s32 %s45, 1
    %p49 = scmp.eq.s32.totalorder %s11, 1
    %p50 = scmp.ne.s32.totalorder %s45, %s47
    %p51 = scmp.eq.s32.totalorder %s11, 0
    %p52 = por %p50, %p51
    %p53 = scmp.ne.s32.totalorder %s45, %s47
    %p54 = scmp.eq.s32.totalorder %s16, 1
    %p55 = por %p53, %p54
    %p56 = scmp.ne.s32.totalorder %s47, %s48
    %p57 = scmp.eq.s32.totalorder %s16, 0
    %p58 = por %p56, %p57
    %p59 = scmp.ne.s32.totalorder %s47, %s48
    %p60 = scmp.eq.s32.totalorder %s17, 1
    %p61 = por %p59, %p60
    %p63 = scmp.ne.s32.totalorder %s48, %s62
    %p64 = scmp.eq.s32.totalorder %s17, 0
    %p65 = por %p63, %p64
    %s67 = sadd.s32 %s66, 1
    %p70 = scmp.eq.s32.totalorder %s11, 1
    %p71 = scmp.ne.s32.totalorder %s66, %s68
    %p72 = scmp.eq.s32.totalorder %s11, 0
    %p73 = por %p71, %p72
    %p74 = scmp.ne.s32.totalorder %s66, %s68
    %p75 = scmp.eq.s32.totalorder %s16, 1
    %p76 = por %p74, %p75
    %p77 = scmp.ne.s32.totalorder %s68, %s69
    %p78 = scmp.eq.s32.totalorder %s16, 0
    %p79 = por %p77, %p78
    %p80 = scmp.ne.s32.totalorder %s68, %s69
    %p81 = scmp.eq.s32.totalorder %s17, 1
    %p82 = por %p80, %p81
    %p84 = scmp.ne.s32.totalorder %s69, %s83
    %p85 = scmp.eq.s32.totalorder %s17, 0
    %p86 = por %p84, %p85
    %s87 = ssub.s32 %s11, %s18
    %p88 = scmp.eq.s32.totalorder %s87, 0
    %s90 = sadd.s32 %s89, 1
    %s91 = scalar_select %p88, %s89, %s90
    %p94 = pneg %p88
    %p95 = scmp.eq.s32.totalorder %s11, 1
    %p96 = por %p94, %p95
    %p97 = scmp.ne.s32.totalorder %s89, %s92
    %p98 = scmp.eq.s32.totalorder %s11, 0
    %p99 = por %p97, %p98
    %p100 = scmp.ne.s32.totalorder %s89, %s92
    %p101 = scmp.eq.s32.totalorder %s16, 1
    %p102 = por %p100, %p101
    %p103 = scmp.ne.s32.totalorder %s92, %s93
    %p104 = scmp.eq.s32.totalorder %s16, 0
    %p105 = por %p103, %p104
    %p106 = scmp.ne.s32.totalorder %s92, %s93
    %p107 = scmp.eq.s32.totalorder %s17, 1
    %p108 = por %p106, %p107
    %p110 = scmp.ne.s32.totalorder %s93, %s109
    %p111 = scmp.eq.s32.totalorder %s17, 0
    %p112 = por %p110, %p111
    %s113 = ssub.s32 %s11, %s18
    %p114 = scmp.eq.s32.totalorder %s113, 0
    %s116 = sadd.s32 %s115, 1
    %s117 = scalar_select %p114, %s115, %s116
    %p120 = pneg %p114
    %p121 = scmp.eq.s32.totalorder %s11, 1
    %p122 = por %p120, %p121
    %p123 = scmp.ne.s32.totalorder %s115, %s118
    %p124 = scmp.eq.s32.totalorder %s11, 0
    %p125 = por %p123, %p124
    %p126 = scmp.ne.s32.totalorder %s115, %s118
    %p127 = scmp.eq.s32.totalorder %s16, 1
    %p128 = por %p126, %p127
    %p129 = scmp.ne.s32.totalorder %s118, %s119
    %p130 = scmp.eq.s32.totalorder %s16, 0
    %p131 = por %p129, %p130
    %p132 = scmp.ne.s32.totalorder %s118, %s119
    %p133 = scmp.eq.s32.totalorder %s17, 1
    %p134 = por %p132, %p133
    %p136 = scmp.ne.s32.totalorder %s119, %s135
    %p137 = scmp.eq.s32.totalorder %s17, 0
    %p138 = por %p136, %p137
    %p139 = scmp.le.s32.totalorder 1, %s11
    %p140 = scmp.lt.s32.totalorder %s11, 3
    %p141 = pnand %p139, %p140
    %p142 = pneg %p141
    // Predicated region
    $region9: #{up_forward.3} parent=5 // pred_check
      _
    $region10: #{up_forward.3} parent=5 // pred_check_branch
      %144 = sbr.rel (%p141) target = $region12
    $region11: #{up_forward.3} parent=5 // pred_region
      %s145 = ssub.s32 %s11, 1
      // Predicated region
      $region13: #{up_forward.3} parent=11 // pred_check
        %p146 = pneg %p58
      $region14: #{up_forward.3} parent=11 // pred_check_branch
        %148 = sbr.rel (%p146) target = $region16
      $region15: #{up_forward.3} parent=11 // pred_region
        _
      $region16: #{up_forward.3} parent=11 // pred_fallthru
        _
      // Predicated region
      $region17: #{up_forward.3} parent=11 // pred_check
        %p149 = pneg %p79
      $region18: #{up_forward.3} parent=11 // pred_check_branch
        %151 = sbr.rel (%p149) target = $region20
      $region19: #{up_forward.3} parent=11 // pred_region
        _
      $region20: #{up_forward.3} parent=11 // pred_fallthru
        _
    $region12: #{up_forward.3} parent=5 // pred_fallthru
      _
    %p152 = scmp.lt.s32.totalorder %s11, 2
    // Predicated region
    $region21: #{up_forward.3} parent=5 // pred_check
      %p153 = pneg %p152
    $region22: #{up_forward.3} parent=5 // pred_check_branch
      %155 = sbr.rel (%p153) target = $region24
    $region23: #{up_forward.3} parent=5 // pred_region
      // Predicated region
      $region25: #{up_forward.3} parent=23 // pred_check
        %p156 = pneg %p31
      $region26: #{up_forward.3} parent=23 // pred_check_branch
        %158 = sbr.rel (%p156) target = $region28
      $region27: #{up_forward.3} parent=23 // pred_region
        %p159 = scmp.lt.s32.totalorder %s11, 1
        %s160 = scalar_select %p159, %s11, 1
        %s161 = smul.addr %s160, 32
        %s162 = smul.addr %s161, 8
        %s163 = scalar_lea.vmem %s0, %s162
      $region28: #{up_forward.3} parent=23 // pred_fallthru
        _
    $region24: #{up_forward.3} parent=5 // pred_fallthru
      _
    %p164 = scmp.le.s32.totalorder 1, %s11
    %p165 = scmp.lt.s32.totalorder %s11, 3
    %p166 = pnand %p164, %p165
    %p167 = pneg %p166
    // Predicated region
    $region29: #{up_forward.3} parent=5 // pred_check
      _
    $region30: #{up_forward.3} parent=5 // pred_check_branch
      %169 = sbr.rel (%p166) target = $region32
    $region31: #{up_forward.3} parent=5 // pred_region
      %s170 = ssub.s32 %s11, 1
      %p171 = scmp.lt.s32.totalorder %s16, 1
      %s172 = scalar_select %p171, %s16, 1
      %s173 = smul.addr %s172, 32
      %s174 = smul.addr %s173, 8
      %s175 = scalar_lea.vmem %s0, %s174
      %p176 = pneg %p37
      %p177 = pneg %p34
      %p178 = pneg %p58
      %p179 = pneg %p55
      %p180 = pneg %p79
      %p181 = pneg %p76
      %p182 = pneg %p105
      %p183 = pneg %p102
      %p184 = scmp.lt.s32.totalorder %s16, 1
      %s185 = scalar_select %p184, %s16, 1
      %s186 = smul.addr %s185, 32
      %s187 = smul.addr %s186, 8
      %s188 = scalar_lea.vmem %s3, %s187
      %p189 = pneg %p131
      %p190 = pneg %p128
      %p191 = scmp.lt.s32.totalorder %s16, 1
      %s192 = scalar_select %p191, %s16, 1
      %s193 = smul.addr %s192, 2
      %s194 = scalar_lea.vmem %s4, %s193
      %p195 = scmp.lt.s32.totalorder %s16, 1
      %s196 = scalar_select %p195, %s16, 1
      %s197 = smul.addr %s196, 32
      %s198 = smul.addr %s197, 8
      %s199 = scalar_lea.vmem %s0, %s198
      %p200 = scmp.lt.s32.totalorder %s16, 1
      %s201 = scalar_select %p200, %s16, 1
      %s202 = smul.addr %s201, 32
      %s203 = smul.addr %s202, 8
      %s204 = scalar_lea.vmem %s3, %s203
      %p205 = scmp.lt.s32.totalorder %s16, 1
      %s206 = scalar_select %p205, %s16, 1
      %s207 = smul.addr %s206, 2
      %s208 = scalar_lea.vmem %s4, %s207
      %v209 = vld [vmem:[%s1] sm:$0x1]
      %v210 = vld [vmem:[%s1 + $0x1] sm:$0x1]
      %vm211 = vcmask 64512
      %212 = vst.msk [vmem:[#allocation2] sm:$0xff] %vm211, 0.0
      %213 = vst.msk [vmem:[#allocation2 + $0x8] sm:$0xff] %vm211, 0.0
      %vm214 = vcmask 58368
      %215 = vst.msk [vmem:[#allocation2 + $0x10] sm:$0x3] %vm214, 0.0
      %s216 = scalar_lea.vmem [#allocation2], 408
      %217 = vst.msk [vmem:[%s216] sm:$0xff] %vm211, 0.0
      %218 = vst.msk [vmem:[%s216 + $0x8] sm:$0xff] %vm211, 0.0
      %219 = vst.msk [vmem:[%s216 + $0x10] sm:$0x3] %vm214, 0.0
      %s220 = scalar_lea.vmem [#allocation2], 24
      %vm221 = vcmask 57344
      %222 = vst.msk [vmem:[%s220] sm:$0x1] %vm221, 0.0
      %223 = vst.msk [vmem:[%s220 + $0x18] sm:$0x1] %vm221, 0.0
      %224 = vst.msk [vmem:[%s220 + $0x30] sm:$0x1] %vm221, 0.0
      %225 = vst.msk [vmem:[%s220 + $0x48] sm:$0x1] %vm221, 0.0
      %226 = vst.msk [vmem:[%s220 + $0x60] sm:$0x1] %vm221, 0.0
      %227 = vst.msk [vmem:[%s220 + $0x78] sm:$0x1] %vm221, 0.0
      %228 = vst.msk [vmem:[%s220 + $0x90] sm:$0x1] %vm221, 0.0
      %229 = vst.msk [vmem:[%s220 + $0xa8] sm:$0x1] %vm221, 0.0
      %230 = vst.msk [vmem:[%s220 + $0xc0] sm:$0x1] %vm221, 0.0
      %231 = vst.msk [vmem:[%s220 + $0xd8] sm:$0x1] %vm221, 0.0
      %232 = vst.msk [vmem:[%s220 + $0xf0] sm:$0x1] %vm221, 0.0
      %233 = vst.msk [vmem:[%s220 + $0x108] sm:$0x1] %vm221, 0.0
      %234 = vst.msk [vmem:[%s220 + $0x120] sm:$0x1] %vm221, 0.0
      %235 = vst.msk [vmem:[%s220 + $0x138] sm:$0x1] %vm221, 0.0
      %236 = vst.msk [vmem:[%s220 + $0x150] sm:$0x1] %vm221, 0.0
      %237 = vst.msk [vmem:[%s220 + $0x168] sm:$0x1] %vm221, 0.0
      %238 = vst.msk [vmem:[%s220 + $0x11] sm:$0x1] %vm221, 0.0
      %239 = vst.msk [vmem:[%s220 + $0x29] sm:$0x1] %vm221, 0.0
      %240 = vst.msk [vmem:[%s220 + $0x41] sm:$0x1] %vm221, 0.0
      %241 = vst.msk [vmem:[%s220 + $0x59] sm:$0x1] %vm221, 0.0
      %242 = vst.msk [vmem:[%s220 + $0x71] sm:$0x1] %vm221, 0.0
      %243 = vst.msk [vmem:[%s220 + $0x89] sm:$0x1] %vm221, 0.0
      %244 = vst.msk [vmem:[%s220 + $0xa1] sm:$0x1] %vm221, 0.0
      %245 = vst.msk [vmem:[%s220 + $0xb9] sm:$0x1] %vm221, 0.0
      %246 = vst.msk [vmem:[%s220 + $0xd1] sm:$0x1] %vm221, 0.0
      %247 = vst.msk [vmem:[%s220 + $0xe9] sm:$0x1] %vm221, 0.0
      %248 = vst.msk [vmem:[%s220 + $0x101] sm:$0x1] %vm221, 0.0
      %249 = vst.msk [vmem:[%s220 + $0x119] sm:$0x1] %vm221, 0.0
      %250 = vst.msk [vmem:[%s220 + $0x131] sm:$0x1] %vm221, 0.0
      %251 = vst.msk [vmem:[%s220 + $0x149] sm:$0x1] %vm221, 0.0
      %252 = vst.msk [vmem:[%s220 + $0x161] sm:$0x1] %vm221, 0.0
      %253 = vst.msk [vmem:[%s220 + $0x179] sm:$0x1] %vm221, 0.0
      %v254 = vld [vmem:[%s199] sm:$0xff]
      %v255 = vld [vmem:[%s199 + $0x8] sm:$0xff]
      %v256 = vld [vmem:[%s199 + $0x10] sm:$0xff]
      %v257 = vld [vmem:[%s199 + $0x18] sm:$0xff]
      %v258 = vld [vmem:[%s199 + $0x20] sm:$0xff]
      %v259 = vld [vmem:[%s199 + $0x28] sm:$0xff]
      %v260 = vld [vmem:[%s199 + $0x30] sm:$0xff]
      %v261 = vld [vmem:[%s199 + $0x38] sm:$0xff]
      %v262 = vld [vmem:[%s199 + $0x40] sm:$0xff]
      %v263 = vld [vmem:[%s199 + $0x48] sm:$0xff]
      %v264 = vld [vmem:[%s199 + $0x50] sm:$0xff]
      %v265 = vld [vmem:[%s199 + $0x58] sm:$0xff]
      %v266 = vld [vmem:[%s199 + $0x60] sm:$0xff]
      %v267 = vld [vmem:[%s199 + $0x68] sm:$0xff]
      %v268 = vld [vmem:[%s199 + $0x70] sm:$0xff]
      %v269 = vld [vmem:[%s199 + $0x78] sm:$0xff]
      %v270 = vld [vmem:[%s199 + $0x80] sm:$0xff]
      %v271 = vld [vmem:[%s199 + $0x88] sm:$0xff]
      %v272 = vld [vmem:[%s199 + $0x90] sm:$0xff]
      %v273 = vld [vmem:[%s199 + $0x98] sm:$0xff]
      %v274 = vld [vmem:[%s199 + $0xa0] sm:$0xff]
      %v275 = vld [vmem:[%s199 + $0xa8] sm:$0xff]
      %v276 = vld [vmem:[%s199 + $0xb0] sm:$0xff]
      %v277 = vld [vmem:[%s199 + $0xb8] sm:$0xff]
      %v278 = vld [vmem:[%s199 + $0xc0] sm:$0xff]
      %v279 = vld [vmem:[%s199 + $0xc8] sm:$0xff]
      %v280 = vld [vmem:[%s199 + $0xd0] sm:$0xff]
      %v281 = vld [vmem:[%s199 + $0xd8] sm:$0xff]
      %v282 = vld [vmem:[%s199 + $0xe0] sm:$0xff]
      %v283 = vld [vmem:[%s199 + $0xe8] sm:$0xff]
      %v284 = vld [vmem:[%s199 + $0xf0] sm:$0xff]
      %v285 = vld [vmem:[%s199 + $0xf8] sm:$0xff]
      %v286 = vperm.slane %v209, 0
      %v287 = vmul.f32 %v254, %v286
      %v288 = vmul.f32 %v255, %v286
      %v289 = vmul.f32 %v256, %v286
      %v290 = vmul.f32 %v257, %v286
      %v291 = vmul.f32 %v258, %v286
      %v292 = vmul.f32 %v259, %v286
      %v293 = vmul.f32 %v260, %v286
      %v294 = vmul.f32 %v261, %v286
      %v295 = vmul.f32 %v262, %v286
      %v296 = vmul.f32 %v263, %v286
      %v297 = vmul.f32 %v264, %v286
      %v298 = vmul.f32 %v265, %v286
      %v299 = vmul.f32 %v266, %v286
      %v300 = vmul.f32 %v267, %v286
      %v301 = vmul.f32 %v268, %v286
      %v302 = vmul.f32 %v269, %v286
      %v303 = vmul.f32 %v270, %v286
      %v304 = vmul.f32 %v271, %v286
      %v305 = vmul.f32 %v272, %v286
      %v306 = vmul.f32 %v273, %v286
      %v307 = vmul.f32 %v274, %v286
      %v308 = vmul.f32 %v275, %v286
      %v309 = vmul.f32 %v276, %v286
      %v310 = vmul.f32 %v277, %v286
      %v311 = vmul.f32 %v278, %v286
      %v312 = vmul.f32 %v279, %v286
      %v313 = vmul.f32 %v280, %v286
      %v314 = vmul.f32 %v281, %v286
      %v315 = vmul.f32 %v282, %v286
      %v316 = vmul.f32 %v283, %v286
      %v317 = vmul.f32 %v284, %v286
      %v318 = vmul.f32 %v285, %v286
      %v319 = vperm.slane %v210, 0
      %v320 = vadd.f32 %v287, %v319
      %v321 = vadd.f32 %v288, %v319
      %v322 = vadd.f32 %v289, %v319
      %v323 = vadd.f32 %v290, %v319
      %v324 = vadd.f32 %v291, %v319
      %v325 = vadd.f32 %v292, %v319
      %v326 = vadd.f32 %v293, %v319
      %v327 = vadd.f32 %v294, %v319
      %v328 = vadd.f32 %v295, %v319
      %v329 = vadd.f32 %v296, %v319
      %v330 = vadd.f32 %v297, %v319
      %v331 = vadd.f32 %v298, %v319
      %v332 = vadd.f32 %v299, %v319
      %v333 = vadd.f32 %v300, %v319
      %v334 = vadd.f32 %v301, %v319
      %v335 = vadd.f32 %v302, %v319
      %v336 = vadd.f32 %v303, %v319
      %v337 = vadd.f32 %v304, %v319
      %v338 = vadd.f32 %v305, %v319
      %v339 = vadd.f32 %v306, %v319
      %v340 = vadd.f32 %v307, %v319
      %v341 = vadd.f32 %v308, %v319
      %v342 = vadd.f32 %v309, %v319
      %v343 = vadd.f32 %v310, %v319
      %v344 = vadd.f32 %v311, %v319
      %v345 = vadd.f32 %v312, %v319
      %v346 = vadd.f32 %v313, %v319
      %v347 = vadd.f32 %v314, %v319
      %v348 = vadd.f32 %v315, %v319
      %v349 = vadd.f32 %v316, %v319
      %v350 = vadd.f32 %v317, %v319
      %v351 = vadd.f32 %v318, %v319
      %v352 = vmax.f32 %v320, 0.0
      %v353 = vmax.f32 %v321, 0.0
      %v354 = vmax.f32 %v322, 0.0
      %v355 = vmax.f32 %v323, 0.0
      %v356 = vmax.f32 %v324, 0.0
      %v357 = vmax.f32 %v325, 0.0
      %v358 = vmax.f32 %v326, 0.0
      %v359 = vmax.f32 %v327, 0.0
      %v360 = vmax.f32 %v328, 0.0
      %v361 = vmax.f32 %v329, 0.0
      %v362 = vmax.f32 %v330, 0.0
      %v363 = vmax.f32 %v331, 0.0
      %v364 = vmax.f32 %v332, 0.0
      %v365 = vmax.f32 %v333, 0.0
      %v366 = vmax.f32 %v334, 0.0
      %v367 = vmax.f32 %v335, 0.0
      %v368 = vmax.f32 %v336, 0.0
      %v369 = vmax.f32 %v337, 0.0
      %v370 = vmax.f32 %v338, 0.0
      %v371 = vmax.f32 %v339, 0.0
      %v372 = vmax.f32 %v340, 0.0
      %v373 = vmax.f32 %v341, 0.0
      %v374 = vmax.f32 %v342, 0.0
      %v375 = vmax.f32 %v343, 0.0
      %v376 = vmax.f32 %v344, 0.0
      %v377 = vmax.f32 %v345, 0.0
      %v378 = vmax.f32 %v346, 0.0
      %v379 = vmax.f32 %v347, 0.0
      %v380 = vmax.f32 %v348, 0.0
      %v381 = vmax.f32 %v349, 0.0
      %v382 = vmax.f32 %v350, 0.0
      %v383 = vmax.f32 %v351, 0.0
      %384 = vst.msk [vmem:[%s220 + $0x1] sm:$0xff] %vm211, %v352
      %385 = vst.msk [vmem:[%s220 + $0x9] sm:$0xff] %vm211, %v353
      %386 = vst.msk [vmem:[%s220 + $0x19] sm:$0xff] %vm211, %v354
      %387 = vst.msk [vmem:[%s220 + $0x21] sm:$0xff] %vm211, %v355
      %388 = vst.msk [vmem:[%s220 + $0x31] sm:$0xff] %vm211, %v356
      %389 = vst.msk [vmem:[%s220 + $0x39] sm:$0xff] %vm211, %v357
      %390 = vst.msk [vmem:[%s220 + $0x49] sm:$0xff] %vm211, %v358
      %391 = vst.msk [vmem:[%s220 + $0x51] sm:$0xff] %vm211, %v359
      %392 = vst.msk [vmem:[%s220 + $0x61] sm:$0xff] %vm211, %v360
      %393 = vst.msk [vmem:[%s220 + $0x69] sm:$0xff] %vm211, %v361
      %394 = vst.msk [vmem:[%s220 + $0x79] sm:$0xff] %vm211, %v362
      %395 = vst.msk [vmem:[%s220 + $0x81] sm:$0xff] %vm211, %v363
      %396 = vst.msk [vmem:[%s220 + $0x91] sm:$0xff] %vm211, %v364
      %397 = vst.msk [vmem:[%s220 + $0x99] sm:$0xff] %vm211, %v365
      %398 = vst.msk [vmem:[%s220 + $0xa9] sm:$0xff] %vm211, %v366
      %399 = vst.msk [vmem:[%s220 + $0xb1] sm:$0xff] %vm211, %v367
      %400 = vst.msk [vmem:[%s220 + $0xc1] sm:$0xff] %vm211, %v368
      %401 = vst.msk [vmem:[%s220 + $0xc9] sm:$0xff] %vm211, %v369
      %402 = vst.msk [vmem:[%s220 + $0xd9] sm:$0xff] %vm211, %v370
      %403 = vst.msk [vmem:[%s220 + $0xe1] sm:$0xff] %vm211, %v371
      %404 = vst.msk [vmem:[%s220 + $0xf1] sm:$0xff] %vm211, %v372
      %405 = vst.msk [vmem:[%s220 + $0xf9] sm:$0xff] %vm211, %v373
      %406 = vst.msk [vmem:[%s220 + $0x109] sm:$0xff] %vm211, %v374
      %407 = vst.msk [vmem:[%s220 + $0x111] sm:$0xff] %vm211, %v375
      %408 = vst.msk [vmem:[%s220 + $0x121] sm:$0xff] %vm211, %v376
      %409 = vst.msk [vmem:[%s220 + $0x129] sm:$0xff] %vm211, %v377
      %410 = vst.msk [vmem:[%s220 + $0x139] sm:$0xff] %vm211, %v378
      %411 = vst.msk [vmem:[%s220 + $0x141] sm:$0xff] %vm211, %v379
      %412 = vst.msk [vmem:[%s220 + $0x151] sm:$0xff] %vm211, %v380
      %413 = vst.msk [vmem:[%s220 + $0x159] sm:$0xff] %vm211, %v381
      %414 = vst.msk [vmem:[%s220 + $0x169] sm:$0xff] %vm211, %v382
      %415 = vst.msk [vmem:[%s220 + $0x171] sm:$0xff] %vm211, %v383
      %v416 = vld [vmem:[#allocation2] sm:$0xff]
      %v417 = vld [vmem:[#allocation2 + $0x8] sm:$0xff]
      %v418 = vld [vmem:[#allocation2 + $0x10] sm:$0x3]
      %v419 = vld [vmem:[#allocation2 + $0x18] sm:$0xff]
      %v420 = vld [vmem:[#allocation2 + $0x20] sm:$0xff]
      %v421 = vld [vmem:[#allocation2 + $0x28] sm:$0x3]
      %v422 = vld [vmem:[#allocation2 + $0x30] sm:$0xff]
      %v423 = vld [vmem:[#allocation2 + $0x38] sm:$0xff]
      %v424 = vld [vmem:[#allocation2 + $0x40] sm:$0x3]
      %v425 = vld [vmem:[#allocation2 + $0x48] sm:$0xff]
      %v426 = vld [vmem:[#allocation2 + $0x50] sm:$0xff]
      %v427 = vld [vmem:[#allocation2 + $0x58] sm:$0x3]
      %v428 = vld [vmem:[#allocation2 + $0x60] sm:$0xff]
      %v429 = vld [vmem:[#allocation2 + $0x68] sm:$0xff]
      %v430 = vld [vmem:[#allocation2 + $0x70] sm:$0x3]
      %v431 = vld [vmem:[#allocation2 + $0x78] sm:$0xff]
      %v432 = vld [vmem:[#allocation2 + $0x80] sm:$0xff]
      %v433 = vld [vmem:[#allocation2 + $0x88] sm:$0x3]
      %v434 = vld [vmem:[#allocation2 + $0x90] sm:$0xff]
      %v435 = vld [vmem:[#allocation2 + $0x98] sm:$0xff]
      %v436 = vld [vmem:[#allocation2 + $0xa0] sm:$0x3]
      %v437 = vld [vmem:[#allocation2 + $0xa8] sm:$0xff]
      %v438 = vld [vmem:[#allocation2 + $0xb0] sm:$0xff]
      %v439 = vld [vmem:[#allocation2 + $0xb8] sm:$0x3]
      %v440 = vld [vmem:[#allocation2 + $0xc0] sm:$0xff]
      %v441 = vld [vmem:[#allocation2 + $0xc8] sm:$0xff]
      %v442 = vld [vmem:[#allocation2 + $0xd0] sm:$0x3]
      %v443 = vld [vmem:[#allocation2 + $0xd8] sm:$0xff]
      %v444 = vld [vmem:[#allocation2 + $0xe0] sm:$0xff]
      %v445 = vld [vmem:[#allocation2 + $0xe8] sm:$0x3]
      %v446 = vld [vmem:[#allocation2 + $0xf0] sm:$0xff]
      %v447 = vld [vmem:[#allocation2 + $0xf8] sm:$0xff]
      %v448 = vld [vmem:[#allocation2 + $0x100] sm:$0x3]
      %v449 = vld [vmem:[#allocation2 + $0x108] sm:$0xff]
      %v450 = vld [vmem:[#allocation2 + $0x110] sm:$0xff]
      %v451 = vld [vmem:[#allocation2 + $0x118] sm:$0x3]
      %v452 = vld [vmem:[#allocation2 + $0x120] sm:$0xff]
      %v453 = vld [vmem:[#allocation2 + $0x128] sm:$0xff]
      %v454 = vld [vmem:[#allocation2 + $0x130] sm:$0x3]
      %v455 = vld [vmem:[#allocation2 + $0x138] sm:$0xff]
      %v456 = vld [vmem:[#allocation2 + $0x140] sm:$0xff]
      %v457 = vld [vmem:[#allocation2 + $0x148] sm:$0x3]
      %v458 = vld [vmem:[#allocation2 + $0x150] sm:$0xff]
      %v459 = vld [vmem:[#allocation2 + $0x158] sm:$0xff]
      %v460 = vld [vmem:[#allocation2 + $0x160] sm:$0x3]
      %v461 = vld [vmem:[#allocation2 + $0x168] sm:$0xff]
      %v462 = vld [vmem:[#allocation2 + $0x170] sm:$0xff]
      %v463 = vld [vmem:[#allocation2 + $0x178] sm:$0x3]
      %v464 = vld [vmem:[#allocation2 + $0x180] sm:$0xff]
      %v465 = vld [vmem:[#allocation2 + $0x188] sm:$0xff]
      %v466 = vld [vmem:[#allocation2 + $0x190] sm:$0x3]
      %v467 = vld [vmem:[#allocation2 + $0x198] sm:$0xff]
      %v468 = vld [vmem:[#allocation2 + $0x1a0] sm:$0xff]
      %v469 = vld [vmem:[#allocation2 + $0x1a8] sm:$0x3]
      %vm518 = vcmask 1046528
      %v519 = vrot.slane %v416, 1
      %v520 = vrot.slane %v417, 1
      %v521 = vsel %vm518, %v519, %v520
      %v522 = vrot.slane %v418, 1
      %v523 = vsel %vm518, %v520, %v522
      %v524 = vrot.slane %v419, 1
      %v525 = vrot.slane %v420, 1
      %v526 = vsel %vm518, %v524, %v525
      %v527 = vrot.slane %v421, 1
      %v528 = vsel %vm518, %v525, %v527
      %v529 = vrot.slane %v422, 1
      %v530 = vrot.slane %v423, 1
      %v531 = vsel %vm518, %v529, %v530
      %v532 = vrot.slane %v424, 1
      %v533 = vsel %vm518, %v530, %v532
      %v534 = vrot.slane %v425, 1
      %v535 = vrot.slane %v426, 1
      %v536 = vsel %vm518, %v534, %v535
      %v537 = vrot.slane %v427, 1
      %v538 = vsel %vm518, %v535, %v537
      %v539 = vrot.slane %v428, 1
      %v540 = vrot.slane %v429, 1
      %v541 = vsel %vm518, %v539, %v540
      %v542 = vrot.slane %v430, 1
      %v543 = vsel %vm518, %v540, %v542
      %v544 = vrot.slane %v431, 1
      %v545 = vrot.slane %v432, 1
      %v546 = vsel %vm518, %v544, %v545
      %v547 = vrot.slane %v433, 1
      %v548 = vsel %vm518, %v545, %v547
      %v549 = vrot.slane %v434, 1
      %v550 = vrot.slane %v435, 1
      %v551 = vsel %vm518, %v549, %v550
      %v552 = vrot.slane %v436, 1
      %v553 = vsel %vm518, %v550, %v552
      %v554 = vrot.slane %v437, 1
      %v555 = vrot.slane %v438, 1
      %v556 = vsel %vm518, %v554, %v555
      %v557 = vrot.slane %v439, 1
      %v558 = vsel %vm518, %v555, %v557
      %v559 = vrot.slane %v440, 1
      %v560 = vrot.slane %v441, 1
      %v561 = vsel %vm518, %v559, %v560
      %v562 = vrot.slane %v442, 1
      %v563 = vsel %vm518, %v560, %v562
      %v564 = vrot.slane %v443, 1
      %v565 = vrot.slane %v444, 1
      %v566 = vsel %vm518, %v564, %v565
      %v567 = vrot.slane %v445, 1
      %v568 = vsel %vm518, %v565, %v567
      %v569 = vrot.slane %v446, 1
      %v570 = vrot.slane %v447, 1
      %v571 = vsel %vm518, %v569, %v570
      %v572 = vrot.slane %v448, 1
      %v573 = vsel %vm518, %v570, %v572
      %v574 = vrot.slane %v449, 1
      %v575 = vrot.slane %v450, 1
      %v576 = vsel %vm518, %v574, %v575
      %v577 = vrot.slane %v451, 1
      %v578 = vsel %vm518, %v575, %v577
      %v579 = vrot.slane %v452, 1
      %v580 = vrot.slane %v453, 1
      %v581 = vsel %vm518, %v579, %v580
      %v582 = vrot.slane %v454, 1
      %v583 = vsel %vm518, %v580, %v582
      %v584 = vrot.slane %v455, 1
      %v585 = vrot.slane %v456, 1
      %v586 = vsel %vm518, %v584, %v585
      %v587 = vrot.slane %v457, 1
      %v588 = vsel %vm518, %v585, %v587
      %v589 = vrot.slane %v458, 1
      %v590 = vrot.slane %v459, 1
      %v591 = vsel %vm518, %v589, %v590
      %v592 = vrot.slane %v460, 1
      %v593 = vsel %vm518, %v590, %v592
      %v594 = vrot.slane %v461, 1
      %v595 = vrot.slane %v462, 1
      %v596 = vsel %vm518, %v594, %v595
      %v597 = vrot.slane %v463, 1
      %v598 = vsel %vm518, %v595, %v597
      %vm599 = vcmask 1045504
      %v600 = vrot.slane %v416, 2
      %v601 = vrot.slane %v417, 2
      %v602 = vsel %vm599, %v600, %v601
      %v603 = vrot.slane %v418, 2
      %v604 = vsel %vm599, %v601, %v603
      %v605 = vrot.slane %v419, 2
      %v606 = vrot.slane %v420, 2
      %v607 = vsel %vm599, %v605, %v606
      %v608 = vrot.slane %v421, 2
      %v609 = vsel %vm599, %v606, %v608
      %v610 = vrot.slane %v422, 2
      %v611 = vrot.slane %v423, 2
      %v612 = vsel %vm599, %v610, %v611
      %v613 = vrot.slane %v424, 2
      %v614 = vsel %vm599, %v611, %v613
      %v615 = vrot.slane %v425, 2
      %v616 = vrot.slane %v426, 2
      %v617 = vsel %vm599, %v615, %v616
      %v618 = vrot.slane %v427, 2
      %v619 = vsel %vm599, %v616, %v618
      %v620 = vrot.slane %v428, 2
      %v621 = vrot.slane %v429, 2
      %v622 = vsel %vm599, %v620, %v621
      %v623 = vrot.slane %v430, 2
      %v624 = vsel %vm599, %v621, %v623
      %v625 = vrot.slane %v431, 2
      %v626 = vrot.slane %v432, 2
      %v627 = vsel %vm599, %v625, %v626
      %v628 = vrot.slane %v433, 2
      %v629 = vsel %vm599, %v626, %v628
      %v630 = vrot.slane %v434, 2
      %v631 = vrot.slane %v435, 2
      %v632 = vsel %vm599, %v630, %v631
      %v633 = vrot.slane %v436, 2
      %v634 = vsel %vm599, %v631, %v633
      %v635 = vrot.slane %v437, 2
      %v636 = vrot.slane %v438, 2
      %v637 = vsel %vm599, %v635, %v636
      %v638 = vrot.slane %v439, 2
      %v639 = vsel %vm599, %v636, %v638
      %v640 = vrot.slane %v440, 2
      %v641 = vrot.slane %v441, 2
      %v642 = vsel %vm599, %v640, %v641
      %v643 = vrot.slane %v442, 2
      %v644 = vsel %vm599, %v641, %v643
      %v645 = vrot.slane %v443, 2
      %v646 = vrot.slane %v444, 2
      %v647 = vsel %vm599, %v645, %v646
      %v648 = vrot.slane %v445, 2
      %v649 = vsel %vm599, %v646, %v648
      %v650 = vrot.slane %v446, 2
      %v651 = vrot.slane %v447, 2
      %v652 = vsel %vm599, %v650, %v651
      %v653 = vrot.slane %v448, 2
      %v654 = vsel %vm599, %v651, %v653
      %v655 = vrot.slane %v449, 2
      %v656 = vrot.slane %v450, 2
      %v657 = vsel %vm599, %v655, %v656
      %v658 = vrot.slane %v451, 2
      %v659 = vsel %vm599, %v656, %v658
      %v660 = vrot.slane %v452, 2
      %v661 = vrot.slane %v453, 2
      %v662 = vsel %vm599, %v660, %v661
      %v663 = vrot.slane %v454, 2
      %v664 = vsel %vm599, %v661, %v663
      %v665 = vrot.slane %v455, 2
      %v666 = vrot.slane %v456, 2
      %v667 = vsel %vm599, %v665, %v666
      %v668 = vrot.slane %v457, 2
      %v669 = vsel %vm599, %v666, %v668
      %v670 = vrot.slane %v458, 2
      %v671 = vrot.slane %v459, 2
      %v672 = vsel %vm599, %v670, %v671
      %v673 = vrot.slane %v460, 2
      %v674 = vsel %vm599, %v671, %v673
      %v675 = vrot.slane %v461, 2
      %v676 = vrot.slane %v462, 2
      %v677 = vsel %vm599, %v675, %v676
      %v678 = vrot.slane %v463, 2
      %v679 = vsel %vm599, %v676, %v678
      %v683 = vrot.slane %v464, 1
      %v684 = vrot.slane %v465, 1
      %v685 = vsel %vm518, %v683, %v684
      %v686 = vrot.slane %v466, 1
      %v687 = vsel %vm518, %v684, %v686
      %v688 = vrot.slane %v464, 2
      %v689 = vrot.slane %v465, 2
      %v690 = vsel %vm599, %v688, %v689
      %v691 = vrot.slane %v466, 2
      %v692 = vsel %vm599, %v689, %v691
      %v696 = vrot.slane %v467, 1
      %v697 = vrot.slane %v468, 1
      %v698 = vsel %vm518, %v696, %v697
      %v699 = vrot.slane %v469, 1
      %v700 = vsel %vm518, %v697, %v699
      %v701 = vrot.slane %v467, 2
      %v702 = vrot.slane %v468, 2
      %v703 = vsel %vm599, %v701, %v702
      %v704 = vrot.slane %v469, 2
      %v705 = vsel %vm599, %v702, %v704
      %706 = vrot.lane.b32.xlu0 %v521, 8
      %v707 = vpop.permute.xlu0 %706
      %708 = vrot.lane.b32.xlu0 %v523, 8
      %v709 = vpop.permute.xlu0 %708
      %710 = vrot.lane.b32.xlu0 %v526, 8
      %v711 = vpop.permute.xlu0 %710
      %712 = vrot.lane.b32.xlu0 %v528, 8
      %v713 = vpop.permute.xlu0 %712
      %714 = vrot.lane.b32.xlu0 %v531, 8
      %v715 = vpop.permute.xlu0 %714
      %716 = vrot.lane.b32.xlu0 %v533, 8
      %v717 = vpop.permute.xlu0 %716
      %718 = vrot.lane.b32.xlu0 %v536, 8
      %v719 = vpop.permute.xlu0 %718
      %720 = vrot.lane.b32.xlu0 %v538, 8
      %v721 = vpop.permute.xlu0 %720
      %722 = vrot.lane.b32.xlu0 %v541, 8
      %v723 = vpop.permute.xlu0 %722
      %724 = vrot.lane.b32.xlu0 %v543, 8
      %v725 = vpop.permute.xlu0 %724
      %726 = vrot.lane.b32.xlu0 %v546, 8
      %v727 = vpop.permute.xlu0 %726
      %728 = vrot.lane.b32.xlu0 %v548, 8
      %v729 = vpop.permute.xlu0 %728
      %730 = vrot.lane.b32.xlu0 %v551, 8
      %v731 = vpop.permute.xlu0 %730
      %732 = vrot.lane.b32.xlu0 %v553, 8
      %v733 = vpop.permute.xlu0 %732
      %734 = vrot.lane.b32.xlu0 %v556, 8
      %v735 = vpop.permute.xlu0 %734
      %736 = vrot.lane.b32.xlu0 %v558, 8
      %v737 = vpop.permute.xlu0 %736
      %738 = vrot.lane.b32.xlu0 %v561, 8
      %v739 = vpop.permute.xlu0 %738
      %740 = vrot.lane.b32.xlu0 %v563, 8
      %v741 = vpop.permute.xlu0 %740
      %742 = vrot.lane.b32.xlu0 %v566, 8
      %v743 = vpop.permute.xlu0 %742
      %744 = vrot.lane.b32.xlu0 %v568, 8
      %v745 = vpop.permute.xlu0 %744
      %746 = vrot.lane.b32.xlu0 %v571, 8
      %v747 = vpop.permute.xlu0 %746
      %748 = vrot.lane.b32.xlu0 %v573, 8
      %v749 = vpop.permute.xlu0 %748
      %750 = vrot.lane.b32.xlu0 %v576, 8
      %v751 = vpop.permute.xlu0 %750
      %752 = vrot.lane.b32.xlu0 %v578, 8
      %v753 = vpop.permute.xlu0 %752
      %754 = vrot.lane.b32.xlu0 %v581, 8
      %v755 = vpop.permute.xlu0 %754
      %756 = vrot.lane.b32.xlu0 %v583, 8
      %v757 = vpop.permute.xlu0 %756
      %758 = vrot.lane.b32.xlu0 %v586, 8
      %v759 = vpop.permute.xlu0 %758
      %760 = vrot.lane.b32.xlu0 %v588, 8
      %v761 = vpop.permute.xlu0 %760
      %762 = vrot.lane.b32.xlu0 %v591, 8
      %v763 = vpop.permute.xlu0 %762
      %764 = vrot.lane.b32.xlu0 %v593, 8
      %v765 = vpop.permute.xlu0 %764
      %766 = vrot.lane.b32.xlu0 %v596, 8
      %v767 = vpop.permute.xlu0 %766
      %768 = vrot.lane.b32.xlu0 %v598, 8
      %v769 = vpop.permute.xlu0 %768
      %802 = vrot.lane.b32.xlu0 %v602, 16
      %v803 = vpop.permute.xlu0 %802
      %804 = vrot.lane.b32.xlu0 %v604, 16
      %v805 = vpop.permute.xlu0 %804
      %806 = vrot.lane.b32.xlu0 %v607, 16
      %v807 = vpop.permute.xlu0 %806
      %808 = vrot.lane.b32.xlu0 %v609, 16
      %v809 = vpop.permute.xlu0 %808
      %810 = vrot.lane.b32.xlu0 %v612, 16
      %v811 = vpop.permute.xlu0 %810
      %812 = vrot.lane.b32.xlu0 %v614, 16
      %v813 = vpop.permute.xlu0 %812
      %814 = vrot.lane.b32.xlu0 %v617, 16
      %v815 = vpop.permute.xlu0 %814
      %816 = vrot.lane.b32.xlu0 %v619, 16
      %v817 = vpop.permute.xlu0 %816
      %818 = vrot.lane.b32.xlu0 %v622, 16
      %v819 = vpop.permute.xlu0 %818
      %820 = vrot.lane.b32.xlu0 %v624, 16
      %v821 = vpop.permute.xlu0 %820
      %822 = vrot.lane.b32.xlu0 %v627, 16
      %v823 = vpop.permute.xlu0 %822
      %824 = vrot.lane.b32.xlu0 %v629, 16
      %v825 = vpop.permute.xlu0 %824
      %826 = vrot.lane.b32.xlu0 %v632, 16
      %v827 = vpop.permute.xlu0 %826
      %828 = vrot.lane.b32.xlu0 %v634, 16
      %v829 = vpop.permute.xlu0 %828
      %830 = vrot.lane.b32.xlu0 %v637, 16
      %v831 = vpop.permute.xlu0 %830
      %832 = vrot.lane.b32.xlu0 %v639, 16
      %v833 = vpop.permute.xlu0 %832
      %834 = vrot.lane.b32.xlu0 %v642, 16
      %v835 = vpop.permute.xlu0 %834
      %836 = vrot.lane.b32.xlu0 %v644, 16
      %v837 = vpop.permute.xlu0 %836
      %838 = vrot.lane.b32.xlu0 %v647, 16
      %v839 = vpop.permute.xlu0 %838
      %840 = vrot.lane.b32.xlu0 %v649, 16
      %v841 = vpop.permute.xlu0 %840
      %842 = vrot.lane.b32.xlu0 %v652, 16
      %v843 = vpop.permute.xlu0 %842
      %844 = vrot.lane.b32.xlu0 %v654, 16
      %v845 = vpop.permute.xlu0 %844
      %846 = vrot.lane.b32.xlu0 %v657, 16
      %v847 = vpop.permute.xlu0 %846
      %848 = vrot.lane.b32.xlu0 %v659, 16
      %v849 = vpop.permute.xlu0 %848
      %850 = vrot.lane.b32.xlu0 %v662, 16
      %v851 = vpop.permute.xlu0 %850
      %852 = vrot.lane.b32.xlu0 %v664, 16
      %v853 = vpop.permute.xlu0 %852
      %854 = vrot.lane.b32.xlu0 %v667, 16
      %v855 = vpop.permute.xlu0 %854
      %856 = vrot.lane.b32.xlu0 %v669, 16
      %v857 = vpop.permute.xlu0 %856
      %858 = vrot.lane.b32.xlu0 %v672, 16
      %v859 = vpop.permute.xlu0 %858
      %860 = vrot.lane.b32.xlu0 %v674, 16
      %v861 = vpop.permute.xlu0 %860
      %862 = vrot.lane.b32.xlu0 %v677, 16
      %v863 = vpop.permute.xlu0 %862
      %864 = vrot.lane.b32.xlu0 %v679, 16
      %v865 = vpop.permute.xlu0 %864
      %898 = vrot.lane.b32.xlu0 %v419, 24
      %v899 = vpop.permute.xlu0 %898
      %900 = vrot.lane.b32.xlu0 %v420, 24
      %v901 = vpop.permute.xlu0 %900
      %902 = vrot.lane.b32.xlu0 %v422, 24
      %v903 = vpop.permute.xlu0 %902
      %904 = vrot.lane.b32.xlu0 %v423, 24
      %v905 = vpop.permute.xlu0 %904
      %906 = vrot.lane.b32.xlu0 %v425, 24
      %v907 = vpop.permute.xlu0 %906
      %908 = vrot.lane.b32.xlu0 %v426, 24
      %v909 = vpop.permute.xlu0 %908
      %910 = vrot.lane.b32.xlu0 %v428, 24
      %v911 = vpop.permute.xlu0 %910
      %912 = vrot.lane.b32.xlu0 %v429, 24
      %v913 = vpop.permute.xlu0 %912
      %914 = vrot.lane.b32.xlu0 %v431, 24
      %v915 = vpop.permute.xlu0 %914
      %916 = vrot.lane.b32.xlu0 %v432, 24
      %v917 = vpop.permute.xlu0 %916
      %918 = vrot.lane.b32.xlu0 %v434, 24
      %v919 = vpop.permute.xlu0 %918
      %920 = vrot.lane.b32.xlu0 %v435, 24
      %v921 = vpop.permute.xlu0 %920
      %922 = vrot.lane.b32.xlu0 %v437, 24
      %v923 = vpop.permute.xlu0 %922
      %924 = vrot.lane.b32.xlu0 %v438, 24
      %v925 = vpop.permute.xlu0 %924
      %926 = vrot.lane.b32.xlu0 %v440, 24
      %v927 = vpop.permute.xlu0 %926
      %928 = vrot.lane.b32.xlu0 %v441, 24
      %v929 = vpop.permute.xlu0 %928
      %930 = vrot.lane.b32.xlu0 %v443, 24
      %v931 = vpop.permute.xlu0 %930
      %932 = vrot.lane.b32.xlu0 %v444, 24
      %v933 = vpop.permute.xlu0 %932
      %934 = vrot.lane.b32.xlu0 %v446, 24
      %v935 = vpop.permute.xlu0 %934
      %936 = vrot.lane.b32.xlu0 %v447, 24
      %v937 = vpop.permute.xlu0 %936
      %938 = vrot.lane.b32.xlu0 %v449, 24
      %v939 = vpop.permute.xlu0 %938
      %940 = vrot.lane.b32.xlu0 %v450, 24
      %v941 = vpop.permute.xlu0 %940
      %942 = vrot.lane.b32.xlu0 %v452, 24
      %v943 = vpop.permute.xlu0 %942
      %944 = vrot.lane.b32.xlu0 %v453, 24
      %v945 = vpop.permute.xlu0 %944
      %946 = vrot.lane.b32.xlu0 %v455, 24
      %v947 = vpop.permute.xlu0 %946
      %948 = vrot.lane.b32.xlu0 %v456, 24
      %v949 = vpop.permute.xlu0 %948
      %950 = vrot.lane.b32.xlu0 %v458, 24
      %v951 = vpop.permute.xlu0 %950
      %952 = vrot.lane.b32.xlu0 %v459, 24
      %v953 = vpop.permute.xlu0 %952
      %954 = vrot.lane.b32.xlu0 %v461, 24
      %v955 = vpop.permute.xlu0 %954
      %956 = vrot.lane.b32.xlu0 %v462, 24
      %v957 = vpop.permute.xlu0 %956
      %958 = vrot.lane.b32.xlu0 %v464, 24
      %v959 = vpop.permute.xlu0 %958
      %960 = vrot.lane.b32.xlu0 %v465, 24
      %v961 = vpop.permute.xlu0 %960
      %994 = vrot.lane.b32.xlu0 %v526, 32
      %v995 = vpop.permute.xlu0 %994
      %996 = vrot.lane.b32.xlu0 %v528, 32
      %v997 = vpop.permute.xlu0 %996
      %998 = vrot.lane.b32.xlu0 %v531, 32
      %v999 = vpop.permute.xlu0 %998
      %1000 = vrot.lane.b32.xlu0 %v533, 32
      %v1001 = vpop.permute.xlu0 %1000
      %1002 = vrot.lane.b32.xlu0 %v536, 32
      %v1003 = vpop.permute.xlu0 %1002
      %1004 = vrot.lane.b32.xlu0 %v538, 32
      %v1005 = vpop.permute.xlu0 %1004
      %1006 = vrot.lane.b32.xlu0 %v541, 32
      %v1007 = vpop.permute.xlu0 %1006
      %1008 = vrot.lane.b32.xlu0 %v543, 32
      %v1009 = vpop.permute.xlu0 %1008
      %1010 = vrot.lane.b32.xlu0 %v546, 32
      %v1011 = vpop.permute.xlu0 %1010
      %1012 = vrot.lane.b32.xlu0 %v548, 32
      %v1013 = vpop.permute.xlu0 %1012
      %1014 = vrot.lane.b32.xlu0 %v551, 32
      %v1015 = vpop.permute.xlu0 %1014
      %1016 = vrot.lane.b32.xlu0 %v553, 32
      %v1017 = vpop.permute.xlu0 %1016
      %1018 = vrot.lane.b32.xlu0 %v556, 32
      %v1019 = vpop.permute.xlu0 %1018
      %1020 = vrot.lane.b32.xlu0 %v558, 32
      %v1021 = vpop.permute.xlu0 %1020
      %1022 = vrot.lane.b32.xlu0 %v561, 32
      %v1023 = vpop.permute.xlu0 %1022
      %1024 = vrot.lane.b32.xlu0 %v563, 32
      %v1025 = vpop.permute.xlu0 %1024
      %1026 = vrot.lane.b32.xlu0 %v566, 32
      %v1027 = vpop.permute.xlu0 %1026
      %1028 = vrot.lane.b32.xlu0 %v568, 32
      %v1029 = vpop.permute.xlu0 %1028
      %1030 = vrot.lane.b32.xlu0 %v571, 32
      %v1031 = vpop.permute.xlu0 %1030
      %1032 = vrot.lane.b32.xlu0 %v573, 32
      %v1033 = vpop.permute.xlu0 %1032
      %1034 = vrot.lane.b32.xlu0 %v576, 32
      %v1035 = vpop.permute.xlu0 %1034
      %1036 = vrot.lane.b32.xlu0 %v578, 32
      %v1037 = vpop.permute.xlu0 %1036
      %1038 = vrot.lane.b32.xlu0 %v581, 32
      %v1039 = vpop.permute.xlu0 %1038
      %1040 = vrot.lane.b32.xlu0 %v583, 32
      %v1041 = vpop.permute.xlu0 %1040
      %1042 = vrot.lane.b32.xlu0 %v586, 32
      %v1043 = vpop.permute.xlu0 %1042
      %1044 = vrot.lane.b32.xlu0 %v588, 32
      %v1045 = vpop.permute.xlu0 %1044
      %1046 = vrot.lane.b32.xlu0 %v591, 32
      %v1047 = vpop.permute.xlu0 %1046
      %1048 = vrot.lane.b32.xlu0 %v593, 32
      %v1049 = vpop.permute.xlu0 %1048
      %1050 = vrot.lane.b32.xlu0 %v596, 32
      %v1051 = vpop.permute.xlu0 %1050
      %1052 = vrot.lane.b32.xlu0 %v598, 32
      %v1053 = vpop.permute.xlu0 %1052
      %1054 = vrot.lane.b32.xlu0 %v685, 32
      %v1055 = vpop.permute.xlu0 %1054
      %1056 = vrot.lane.b32.xlu0 %v687, 32
      %v1057 = vpop.permute.xlu0 %1056
      %1090 = vrot.lane.b32.xlu0 %v607, 40
      %v1091 = vpop.permute.xlu0 %1090
      %1092 = vrot.lane.b32.xlu0 %v609, 40
      %v1093 = vpop.permute.xlu0 %1092
      %1094 = vrot.lane.b32.xlu0 %v612, 40
      %v1095 = vpop.permute.xlu0 %1094
      %1096 = vrot.lane.b32.xlu0 %v614, 40
      %v1097 = vpop.permute.xlu0 %1096
      %1098 = vrot.lane.b32.xlu0 %v617, 40
      %v1099 = vpop.permute.xlu0 %1098
      %1100 = vrot.lane.b32.xlu0 %v619, 40
      %v1101 = vpop.permute.xlu0 %1100
      %1102 = vrot.lane.b32.xlu0 %v622, 40
      %v1103 = vpop.permute.xlu0 %1102
      %1104 = vrot.lane.b32.xlu0 %v624, 40
      %v1105 = vpop.permute.xlu0 %1104
      %1106 = vrot.lane.b32.xlu0 %v627, 40
      %v1107 = vpop.permute.xlu0 %1106
      %1108 = vrot.lane.b32.xlu0 %v629, 40
      %v1109 = vpop.permute.xlu0 %1108
      %1110 = vrot.lane.b32.xlu0 %v632, 40
      %v1111 = vpop.permute.xlu0 %1110
      %1112 = vrot.lane.b32.xlu0 %v634, 40
      %v1113 = vpop.permute.xlu0 %1112
      %1114 = vrot.lane.b32.xlu0 %v637, 40
      %v1115 = vpop.permute.xlu0 %1114
      %1116 = vrot.lane.b32.xlu0 %v639, 40
      %v1117 = vpop.permute.xlu0 %1116
      %1118 = vrot.lane.b32.xlu0 %v642, 40
      %v1119 = vpop.permute.xlu0 %1118
      %1120 = vrot.lane.b32.xlu0 %v644, 40
      %v1121 = vpop.permute.xlu0 %1120
      %1122 = vrot.lane.b32.xlu0 %v647, 40
      %v1123 = vpop.permute.xlu0 %1122
      %1124 = vrot.lane.b32.xlu0 %v649, 40
      %v1125 = vpop.permute.xlu0 %1124
      %1126 = vrot.lane.b32.xlu0 %v652, 40
      %v1127 = vpop.permute.xlu0 %1126
      %1128 = vrot.lane.b32.xlu0 %v654, 40
      %v1129 = vpop.permute.xlu0 %1128
      %1130 = vrot.lane.b32.xlu0 %v657, 40
      %v1131 = vpop.permute.xlu0 %1130
      %1132 = vrot.lane.b32.xlu0 %v659, 40
      %v1133 = vpop.permute.xlu0 %1132
      %1134 = vrot.lane.b32.xlu0 %v662, 40
      %v1135 = vpop.permute.xlu0 %1134
      %1136 = vrot.lane.b32.xlu0 %v664, 40
      %v1137 = vpop.permute.xlu0 %1136
      %1138 = vrot.lane.b32.xlu0 %v667, 40
      %v1139 = vpop.permute.xlu0 %1138
      %1140 = vrot.lane.b32.xlu0 %v669, 40
      %v1141 = vpop.permute.xlu0 %1140
      %1142 = vrot.lane.b32.xlu0 %v672, 40
      %v1143 = vpop.permute.xlu0 %1142
      %1144 = vrot.lane.b32.xlu0 %v674, 40
      %v1145 = vpop.permute.xlu0 %1144
      %1146 = vrot.lane.b32.xlu0 %v677, 40
      %v1147 = vpop.permute.xlu0 %1146
      %1148 = vrot.lane.b32.xlu0 %v679, 40
      %v1149 = vpop.permute.xlu0 %1148
      %1150 = vrot.lane.b32.xlu0 %v690, 40
      %v1151 = vpop.permute.xlu0 %1150
      %1152 = vrot.lane.b32.xlu0 %v692, 40
      %v1153 = vpop.permute.xlu0 %1152
      %1186 = vrot.lane.b32.xlu0 %v422, 48
      %v1187 = vpop.permute.xlu0 %1186
      %1188 = vrot.lane.b32.xlu0 %v423, 48
      %v1189 = vpop.permute.xlu0 %1188
      %1190 = vrot.lane.b32.xlu0 %v425, 48
      %v1191 = vpop.permute.xlu0 %1190
      %1192 = vrot.lane.b32.xlu0 %v426, 48
      %v1193 = vpop.permute.xlu0 %1192
      %1194 = vrot.lane.b32.xlu0 %v428, 48
      %v1195 = vpop.permute.xlu0 %1194
      %1196 = vrot.lane.b32.xlu0 %v429, 48
      %v1197 = vpop.permute.xlu0 %1196
      %1198 = vrot.lane.b32.xlu0 %v431, 48
      %v1199 = vpop.permute.xlu0 %1198
      %1200 = vrot.lane.b32.xlu0 %v432, 48
      %v1201 = vpop.permute.xlu0 %1200
      %1202 = vrot.lane.b32.xlu0 %v434, 48
      %v1203 = vpop.permute.xlu0 %1202
      %1204 = vrot.lane.b32.xlu0 %v435, 48
      %v1205 = vpop.permute.xlu0 %1204
      %1206 = vrot.lane.b32.xlu0 %v437, 48
      %v1207 = vpop.permute.xlu0 %1206
      %1208 = vrot.lane.b32.xlu0 %v438, 48
      %v1209 = vpop.permute.xlu0 %1208
      %1210 = vrot.lane.b32.xlu0 %v440, 48
      %v1211 = vpop.permute.xlu0 %1210
      %1212 = vrot.lane.b32.xlu0 %v441, 48
      %v1213 = vpop.permute.xlu0 %1212
      %1214 = vrot.lane.b32.xlu0 %v443, 48
      %v1215 = vpop.permute.xlu0 %1214
      %1216 = vrot.lane.b32.xlu0 %v444, 48
      %v1217 = vpop.permute.xlu0 %1216
      %1218 = vrot.lane.b32.xlu0 %v446, 48
      %v1219 = vpop.permute.xlu0 %1218
      %1220 = vrot.lane.b32.xlu0 %v447, 48
      %v1221 = vpop.permute.xlu0 %1220
      %1222 = vrot.lane.b32.xlu0 %v449, 48
      %v1223 = vpop.permute.xlu0 %1222
      %1224 = vrot.lane.b32.xlu0 %v450, 48
      %v1225 = vpop.permute.xlu0 %1224
      %1226 = vrot.lane.b32.xlu0 %v452, 48
      %v1227 = vpop.permute.xlu0 %1226
      %1228 = vrot.lane.b32.xlu0 %v453, 48
      %v1229 = vpop.permute.xlu0 %1228
      %1230 = vrot.lane.b32.xlu0 %v455, 48
      %v1231 = vpop.permute.xlu0 %1230
      %1232 = vrot.lane.b32.xlu0 %v456, 48
      %v1233 = vpop.permute.xlu0 %1232
      %1234 = vrot.lane.b32.xlu0 %v458, 48
      %v1235 = vpop.permute.xlu0 %1234
      %1236 = vrot.lane.b32.xlu0 %v459, 48
      %v1237 = vpop.permute.xlu0 %1236
      %1238 = vrot.lane.b32.xlu0 %v461, 48
      %v1239 = vpop.permute.xlu0 %1238
      %1240 = vrot.lane.b32.xlu0 %v462, 48
      %v1241 = vpop.permute.xlu0 %1240
      %1242 = vrot.lane.b32.xlu0 %v464, 48
      %v1243 = vpop.permute.xlu0 %1242
      %1244 = vrot.lane.b32.xlu0 %v465, 48
      %v1245 = vpop.permute.xlu0 %1244
      %1246 = vrot.lane.b32.xlu0 %v467, 48
      %v1247 = vpop.permute.xlu0 %1246
      %1248 = vrot.lane.b32.xlu0 %v468, 48
      %v1249 = vpop.permute.xlu0 %1248
      %1282 = vrot.lane.b32.xlu0 %v531, 56
      %v1283 = vpop.permute.xlu0 %1282
      %1284 = vrot.lane.b32.xlu0 %v533, 56
      %v1285 = vpop.permute.xlu0 %1284
      %1286 = vrot.lane.b32.xlu0 %v536, 56
      %v1287 = vpop.permute.xlu0 %1286
      %1288 = vrot.lane.b32.xlu0 %v538, 56
      %v1289 = vpop.permute.xlu0 %1288
      %1290 = vrot.lane.b32.xlu0 %v541, 56
      %v1291 = vpop.permute.xlu0 %1290
      %1292 = vrot.lane.b32.xlu0 %v543, 56
      %v1293 = vpop.permute.xlu0 %1292
      %1294 = vrot.lane.b32.xlu0 %v546, 56
      %v1295 = vpop.permute.xlu0 %1294
      %1296 = vrot.lane.b32.xlu0 %v548, 56
      %v1297 = vpop.permute.xlu0 %1296
      %1298 = vrot.lane.b32.xlu0 %v551, 56
      %v1299 = vpop.permute.xlu0 %1298
      %1300 = vrot.lane.b32.xlu0 %v553, 56
      %v1301 = vpop.permute.xlu0 %1300
      %1302 = vrot.lane.b32.xlu0 %v556, 56
      %v1303 = vpop.permute.xlu0 %1302
      %1304 = vrot.lane.b32.xlu0 %v558, 56
      %v1305 = vpop.permute.xlu0 %1304
      %1306 = vrot.lane.b32.xlu0 %v561, 56
      %v1307 = vpop.permute.xlu0 %1306
      %1308 = vrot.lane.b32.xlu0 %v563, 56
      %v1309 = vpop.permute.xlu0 %1308
      %1310 = vrot.lane.b32.xlu0 %v566, 56
      %v1311 = vpop.permute.xlu0 %1310
      %1312 = vrot.lane.b32.xlu0 %v568, 56
      %v1313 = vpop.permute.xlu0 %1312
      %1314 = vrot.lane.b32.xlu0 %v571, 56
      %v1315 = vpop.permute.xlu0 %1314
      %1316 = vrot.lane.b32.xlu0 %v573, 56
      %v1317 = vpop.permute.xlu0 %1316
      %1318 = vrot.lane.b32.xlu0 %v576, 56
      %v1319 = vpop.permute.xlu0 %1318
      %1320 = vrot.lane.b32.xlu0 %v578, 56
      %v1321 = vpop.permute.xlu0 %1320
      %1322 = vrot.lane.b32.xlu0 %v581, 56
      %v1323 = vpop.permute.xlu0 %1322
      %1324 = vrot.lane.b32.xlu0 %v583, 56
      %v1325 = vpop.permute.xlu0 %1324
      %1326 = vrot.lane.b32.xlu0 %v586, 56
      %v1327 = vpop.permute.xlu0 %1326
      %1328 = vrot.lane.b32.xlu0 %v588, 56
      %v1329 = vpop.permute.xlu0 %1328
      %1330 = vrot.lane.b32.xlu0 %v591, 56
      %v1331 = vpop.permute.xlu0 %1330
      %1332 = vrot.lane.b32.xlu0 %v593, 56
      %v1333 = vpop.permute.xlu0 %1332
      %1334 = vrot.lane.b32.xlu0 %v596, 56
      %v1335 = vpop.permute.xlu0 %1334
      %1336 = vrot.lane.b32.xlu0 %v598, 56
      %v1337 = vpop.permute.xlu0 %1336
      %1338 = vrot.lane.b32.xlu0 %v685, 56
      %v1339 = vpop.permute.xlu0 %1338
      %1340 = vrot.lane.b32.xlu0 %v687, 56
      %v1341 = vpop.permute.xlu0 %1340
      %1342 = vrot.lane.b32.xlu0 %v698, 56
      %v1343 = vpop.permute.xlu0 %1342
      %1344 = vrot.lane.b32.xlu0 %v700, 56
      %v1345 = vpop.permute.xlu0 %1344
      %1378 = vrot.lane.b32.xlu0 %v612, 64
      %v1379 = vpop.permute.xlu0 %1378
      %1380 = vrot.lane.b32.xlu0 %v614, 64
      %v1381 = vpop.permute.xlu0 %1380
      %1382 = vrot.lane.b32.xlu0 %v617, 64
      %v1383 = vpop.permute.xlu0 %1382
      %1384 = vrot.lane.b32.xlu0 %v619, 64
      %v1385 = vpop.permute.xlu0 %1384
      %1386 = vrot.lane.b32.xlu0 %v622, 64
      %v1387 = vpop.permute.xlu0 %1386
      %1388 = vrot.lane.b32.xlu0 %v624, 64
      %v1389 = vpop.permute.xlu0 %1388
      %1390 = vrot.lane.b32.xlu0 %v627, 64
      %v1391 = vpop.permute.xlu0 %1390
      %1392 = vrot.lane.b32.xlu0 %v629, 64
      %v1393 = vpop.permute.xlu0 %1392
      %1394 = vrot.lane.b32.xlu0 %v632, 64
      %v1395 = vpop.permute.xlu0 %1394
      %1396 = vrot.lane.b32.xlu0 %v634, 64
      %v1397 = vpop.permute.xlu0 %1396
      %1398 = vrot.lane.b32.xlu0 %v637, 64
      %v1399 = vpop.permute.xlu0 %1398
      %1400 = vrot.lane.b32.xlu0 %v639, 64
      %v1401 = vpop.permute.xlu0 %1400
      %1402 = vrot.lane.b32.xlu0 %v642, 64
      %v1403 = vpop.permute.xlu0 %1402
      %1404 = vrot.lane.b32.xlu0 %v644, 64
      %v1405 = vpop.permute.xlu0 %1404
      %1406 = vrot.lane.b32.xlu0 %v647, 64
      %v1407 = vpop.permute.xlu0 %1406
      %1408 = vrot.lane.b32.xlu0 %v649, 64
      %v1409 = vpop.permute.xlu0 %1408
      %1410 = vrot.lane.b32.xlu0 %v652, 64
      %v1411 = vpop.permute.xlu0 %1410
      %1412 = vrot.lane.b32.xlu0 %v654, 64
      %v1413 = vpop.permute.xlu0 %1412
      %1414 = vrot.lane.b32.xlu0 %v657, 64
      %v1415 = vpop.permute.xlu0 %1414
      %1416 = vrot.lane.b32.xlu0 %v659, 64
      %v1417 = vpop.permute.xlu0 %1416
      %1418 = vrot.lane.b32.xlu0 %v662, 64
      %v1419 = vpop.permute.xlu0 %1418
      %1420 = vrot.lane.b32.xlu0 %v664, 64
      %v1421 = vpop.permute.xlu0 %1420
      %1422 = vrot.lane.b32.xlu0 %v667, 64
      %v1423 = vpop.permute.xlu0 %1422
      %1424 = vrot.lane.b32.xlu0 %v669, 64
      %v1425 = vpop.permute.xlu0 %1424
      %1426 = vrot.lane.b32.xlu0 %v672, 64
      %v1427 = vpop.permute.xlu0 %1426
      %1428 = vrot.lane.b32.xlu0 %v674, 64
      %v1429 = vpop.permute.xlu0 %1428
      %1430 = vrot.lane.b32.xlu0 %v677, 64
      %v1431 = vpop.permute.xlu0 %1430
      %1432 = vrot.lane.b32.xlu0 %v679, 64
      %v1433 = vpop.permute.xlu0 %1432
      %1434 = vrot.lane.b32.xlu0 %v690, 64
      %v1435 = vpop.permute.xlu0 %1434
      %1436 = vrot.lane.b32.xlu0 %v692, 64
      %v1437 = vpop.permute.xlu0 %1436
      %1438 = vrot.lane.b32.xlu0 %v703, 64
      %v1439 = vpop.permute.xlu0 %1438
      %1440 = vrot.lane.b32.xlu0 %v705, 64
      %v1441 = vpop.permute.xlu0 %1440
      %v1474 = vsel %vm211, %v416, %v707
      %v1475 = vsel %vm211, %v417, %v709
      %v1476 = vsel %vm211, %v419, %v711
      %v1477 = vsel %vm211, %v420, %v713
      %v1478 = vsel %vm211, %v422, %v715
      %v1479 = vsel %vm211, %v423, %v717
      %v1480 = vsel %vm211, %v425, %v719
      %v1481 = vsel %vm211, %v426, %v721
      %v1482 = vsel %vm211, %v428, %v723
      %v1483 = vsel %vm211, %v429, %v725
      %v1484 = vsel %vm211, %v431, %v727
      %v1485 = vsel %vm211, %v432, %v729
      %v1486 = vsel %vm211, %v434, %v731
      %v1487 = vsel %vm211, %v435, %v733
      %v1488 = vsel %vm211, %v437, %v735
      %v1489 = vsel %vm211, %v438, %v737
      %v1490 = vsel %vm211, %v440, %v739
      %v1491 = vsel %vm211, %v441, %v741
      %v1492 = vsel %vm211, %v443, %v743
      %v1493 = vsel %vm211, %v444, %v745
      %v1494 = vsel %vm211, %v446, %v747
      %v1495 = vsel %vm211, %v447, %v749
      %v1496 = vsel %vm211, %v449, %v751
      %v1497 = vsel %vm211, %v450, %v753
      %v1498 = vsel %vm211, %v452, %v755
      %v1499 = vsel %vm211, %v453, %v757
      %v1500 = vsel %vm211, %v455, %v759
      %v1501 = vsel %vm211, %v456, %v761
      %v1502 = vsel %vm211, %v458, %v763
      %v1503 = vsel %vm211, %v459, %v765
      %v1504 = vsel %vm211, %v461, %v767
      %v1505 = vsel %vm211, %v462, %v769
      %vm1506 = vcmask 130048
      %v1507 = vsel %vm1506, %v1474, %v803
      %v1508 = vsel %vm1506, %v1475, %v805
      %v1509 = vsel %vm1506, %v1476, %v807
      %v1510 = vsel %vm1506, %v1477, %v809
      %v1511 = vsel %vm1506, %v1478, %v811
      %v1512 = vsel %vm1506, %v1479, %v813
      %v1513 = vsel %vm1506, %v1480, %v815
      %v1514 = vsel %vm1506, %v1481, %v817
      %v1515 = vsel %vm1506, %v1482, %v819
      %v1516 = vsel %vm1506, %v1483, %v821
      %v1517 = vsel %vm1506, %v1484, %v823
      %v1518 = vsel %vm1506, %v1485, %v825
      %v1519 = vsel %vm1506, %v1486, %v827
      %v1520 = vsel %vm1506, %v1487, %v829
      %v1521 = vsel %vm1506, %v1488, %v831
      %v1522 = vsel %vm1506, %v1489, %v833
      %v1523 = vsel %vm1506, %v1490, %v835
      %v1524 = vsel %vm1506, %v1491, %v837
      %v1525 = vsel %vm1506, %v1492, %v839
      %v1526 = vsel %vm1506, %v1493, %v841
      %v1527 = vsel %vm1506, %v1494, %v843
      %v1528 = vsel %vm1506, %v1495, %v845
      %v1529 = vsel %vm1506, %v1496, %v847
      %v1530 = vsel %vm1506, %v1497, %v849
      %v1531 = vsel %vm1506, %v1498, %v851
      %v1532 = vsel %vm1506, %v1499, %v853
      %v1533 = vsel %vm1506, %v1500, %v855
      %v1534 = vsel %vm1506, %v1501, %v857
      %v1535 = vsel %vm1506, %v1502, %v859
      %v1536 = vsel %vm1506, %v1503, %v861
      %v1537 = vsel %vm1506, %v1504, %v863
      %v1538 = vsel %vm1506, %v1505, %v865
      %vm1539 = vcmask 195584
      %v1540 = vsel %vm1539, %v1507, %v899
      %v1541 = vsel %vm1539, %v1508, %v901
      %v1542 = vsel %vm1539, %v1509, %v903
      %v1543 = vsel %vm1539, %v1510, %v905
      %v1544 = vsel %vm1539, %v1511, %v907
      %v1545 = vsel %vm1539, %v1512, %v909
      %v1546 = vsel %vm1539, %v1513, %v911
      %v1547 = vsel %vm1539, %v1514, %v913
      %v1548 = vsel %vm1539, %v1515, %v915
      %v1549 = vsel %vm1539, %v1516, %v917
      %v1550 = vsel %vm1539, %v1517, %v919
      %v1551 = vsel %vm1539, %v1518, %v921
      %v1552 = vsel %vm1539, %v1519, %v923
      %v1553 = vsel %vm1539, %v1520, %v925
      %v1554 = vsel %vm1539, %v1521, %v927
      %v1555 = vsel %vm1539, %v1522, %v929
      %v1556 = vsel %vm1539, %v1523, %v931
      %v1557 = vsel %vm1539, %v1524, %v933
      %v1558 = vsel %vm1539, %v1525, %v935
      %v1559 = vsel %vm1539, %v1526, %v937
      %v1560 = vsel %vm1539, %v1527, %v939
      %v1561 = vsel %vm1539, %v1528, %v941
      %v1562 = vsel %vm1539, %v1529, %v943
      %v1563 = vsel %vm1539, %v1530, %v945
      %v1564 = vsel %vm1539, %v1531, %v947
      %v1565 = vsel %vm1539, %v1532, %v949
      %v1566 = vsel %vm1539, %v1533, %v951
      %v1567 = vsel %vm1539, %v1534, %v953
      %v1568 = vsel %vm1539, %v1535, %v955
      %v1569 = vsel %vm1539, %v1536, %v957
      %v1570 = vsel %vm1539, %v1537, %v959
      %v1571 = vsel %vm1539, %v1538, %v961
      %vm1572 = vcmask 261120
      %v1573 = vsel %vm1572, %v1540, %v995
      %v1574 = vsel %vm1572, %v1541, %v997
      %v1575 = vsel %vm1572, %v1542, %v999
      %v1576 = vsel %vm1572, %v1543, %v1001
      %v1577 = vsel %vm1572, %v1544, %v1003
      %v1578 = vsel %vm1572, %v1545, %v1005
      %v1579 = vsel %vm1572, %v1546, %v1007
      %v1580 = vsel %vm1572, %v1547, %v1009
      %v1581 = vsel %vm1572, %v1548, %v1011
      %v1582 = vsel %vm1572, %v1549, %v1013
      %v1583 = vsel %vm1572, %v1550, %v1015
      %v1584 = vsel %vm1572, %v1551, %v1017
      %v1585 = vsel %vm1572, %v1552, %v1019
      %v1586 = vsel %vm1572, %v1553, %v1021
      %v1587 = vsel %vm1572, %v1554, %v1023
      %v1588 = vsel %vm1572, %v1555, %v1025
      %v1589 = vsel %vm1572, %v1556, %v1027
      %v1590 = vsel %vm1572, %v1557, %v1029
      %v1591 = vsel %vm1572, %v1558, %v1031
      %v1592 = vsel %vm1572, %v1559, %v1033
      %v1593 = vsel %vm1572, %v1560, %v1035
      %v1594 = vsel %vm1572, %v1561, %v1037
      %v1595 = vsel %vm1572, %v1562, %v1039
      %v1596 = vsel %vm1572, %v1563, %v1041
      %v1597 = vsel %vm1572, %v1564, %v1043
      %v1598 = vsel %vm1572, %v1565, %v1045
      %v1599 = vsel %vm1572, %v1566, %v1047
      %v1600 = vsel %vm1572, %v1567, %v1049
      %v1601 = vsel %vm1572, %v1568, %v1051
      %v1602 = vsel %vm1572, %v1569, %v1053
      %v1603 = vsel %vm1572, %v1570, %v1055
      %v1604 = vsel %vm1572, %v1571, %v1057
      %vm1605 = vcmask 326656
      %v1606 = vsel %vm1605, %v1573, %v1091
      %v1607 = vsel %vm1605, %v1574, %v1093
      %v1608 = vsel %vm1605, %v1575, %v1095
      %v1609 = vsel %vm1605, %v1576, %v1097
      %v1610 = vsel %vm1605, %v1577, %v1099
      %v1611 = vsel %vm1605, %v1578, %v1101
      %v1612 = vsel %vm1605, %v1579, %v1103
      %v1613 = vsel %vm1605, %v1580, %v1105
      %v1614 = vsel %vm1605, %v1581, %v1107
      %v1615 = vsel %vm1605, %v1582, %v1109
      %v1616 = vsel %vm1605, %v1583, %v1111
      %v1617 = vsel %vm1605, %v1584, %v1113
      %v1618 = vsel %vm1605, %v1585, %v1115
      %v1619 = vsel %vm1605, %v1586, %v1117
      %v1620 = vsel %vm1605, %v1587, %v1119
      %v1621 = vsel %vm1605, %v1588, %v1121
      %v1622 = vsel %vm1605, %v1589, %v1123
      %v1623 = vsel %vm1605, %v1590, %v1125
      %v1624 = vsel %vm1605, %v1591, %v1127
      %v1625 = vsel %vm1605, %v1592, %v1129
      %v1626 = vsel %vm1605, %v1593, %v1131
      %v1627 = vsel %vm1605, %v1594, %v1133
      %v1628 = vsel %vm1605, %v1595, %v1135
      %v1629 = vsel %vm1605, %v1596, %v1137
      %v1630 = vsel %vm1605, %v1597, %v1139
      %v1631 = vsel %vm1605, %v1598, %v1141
      %v1632 = vsel %vm1605, %v1599, %v1143
      %v1633 = vsel %vm1605, %v1600, %v1145
      %v1634 = vsel %vm1605, %v1601, %v1147
      %v1635 = vsel %vm1605, %v1602, %v1149
      %v1636 = vsel %vm1605, %v1603, %v1151
      %v1637 = vsel %vm1605, %v1604, %v1153
      %vm1638 = vcmask 392192
      %v1639 = vsel %vm1638, %v1606, %v1187
      %v1640 = vsel %vm1638, %v1607, %v1189
      %v1641 = vsel %vm1638, %v1608, %v1191
      %v1642 = vsel %vm1638, %v1609, %v1193
      %v1643 = vsel %vm1638, %v1610, %v1195
      %v1644 = vsel %vm1638, %v1611, %v1197
      %v1645 = vsel %vm1638, %v1612, %v1199
      %v1646 = vsel %vm1638, %v1613, %v1201
      %v1647 = vsel %vm1638, %v1614, %v1203
      %v1648 = vsel %vm1638, %v1615, %v1205
      %v1649 = vsel %vm1638, %v1616, %v1207
      %v1650 = vsel %vm1638, %v1617, %v1209
      %v1651 = vsel %vm1638, %v1618, %v1211
      %v1652 = vsel %vm1638, %v1619, %v1213
      %v1653 = vsel %vm1638, %v1620, %v1215
      %v1654 = vsel %vm1638, %v1621, %v1217
      %v1655 = vsel %vm1638, %v1622, %v1219
      %v1656 = vsel %vm1638, %v1623, %v1221
      %v1657 = vsel %vm1638, %v1624, %v1223
      %v1658 = vsel %vm1638, %v1625, %v1225
      %v1659 = vsel %vm1638, %v1626, %v1227
      %v1660 = vsel %vm1638, %v1627, %v1229
      %v1661 = vsel %vm1638, %v1628, %v1231
      %v1662 = vsel %vm1638, %v1629, %v1233
      %v1663 = vsel %vm1638, %v1630, %v1235
      %v1664 = vsel %vm1638, %v1631, %v1237
      %v1665 = vsel %vm1638, %v1632, %v1239
      %v1666 = vsel %vm1638, %v1633, %v1241
      %v1667 = vsel %vm1638, %v1634, %v1243
      %v1668 = vsel %vm1638, %v1635, %v1245
      %v1669 = vsel %vm1638, %v1636, %v1247
      %v1670 = vsel %vm1638, %v1637, %v1249
      %vm1671 = vcmask 457728
      %v1672 = vsel %vm1671, %v1639, %v1283
      %v1673 = vsel %vm1671, %v1640, %v1285
      %v1674 = vsel %vm1671, %v1641, %v1287
      %v1675 = vsel %vm1671, %v1642, %v1289
      %v1676 = vsel %vm1671, %v1643, %v1291
      %v1677 = vsel %vm1671, %v1644, %v1293
      %v1678 = vsel %vm1671, %v1645, %v1295
      %v1679 = vsel %vm1671, %v1646, %v1297
      %v1680 = vsel %vm1671, %v1647, %v1299
      %v1681 = vsel %vm1671, %v1648, %v1301
      %v1682 = vsel %vm1671, %v1649, %v1303
      %v1683 = vsel %vm1671, %v1650, %v1305
      %v1684 = vsel %vm1671, %v1651, %v1307
      %v1685 = vsel %vm1671, %v1652, %v1309
      %v1686 = vsel %vm1671, %v1653, %v1311
      %v1687 = vsel %vm1671, %v1654, %v1313
      %v1688 = vsel %vm1671, %v1655, %v1315
      %v1689 = vsel %vm1671, %v1656, %v1317
      %v1690 = vsel %vm1671, %v1657, %v1319
      %v1691 = vsel %vm1671, %v1658, %v1321
      %v1692 = vsel %vm1671, %v1659, %v1323
      %v1693 = vsel %vm1671, %v1660, %v1325
      %v1694 = vsel %vm1671, %v1661, %v1327
      %v1695 = vsel %vm1671, %v1662, %v1329
      %v1696 = vsel %vm1671, %v1663, %v1331
      %v1697 = vsel %vm1671, %v1664, %v1333
      %v1698 = vsel %vm1671, %v1665, %v1335
      %v1699 = vsel %vm1671, %v1666, %v1337
      %v1700 = vsel %vm1671, %v1667, %v1339
      %v1701 = vsel %vm1671, %v1668, %v1341
      %v1702 = vsel %vm1671, %v1669, %v1343
      %v1703 = vsel %vm1671, %v1670, %v1345
      %vm1704 = vcmask 523264
      %v1705 = vsel %vm1704, %v1672, %v1379
      %v1706 = vsel %vm1704, %v1673, %v1381
      %v1707 = vsel %vm1704, %v1674, %v1383
      %v1708 = vsel %vm1704, %v1675, %v1385
      %v1709 = vsel %vm1704, %v1676, %v1387
      %v1710 = vsel %vm1704, %v1677, %v1389
      %v1711 = vsel %vm1704, %v1678, %v1391
      %v1712 = vsel %vm1704, %v1679, %v1393
      %v1713 = vsel %vm1704, %v1680, %v1395
      %v1714 = vsel %vm1704, %v1681, %v1397
      %v1715 = vsel %vm1704, %v1682, %v1399
      %v1716 = vsel %vm1704, %v1683, %v1401
      %v1717 = vsel %vm1704, %v1684, %v1403
      %v1718 = vsel %vm1704, %v1685, %v1405
      %v1719 = vsel %vm1704, %v1686, %v1407
      %v1720 = vsel %vm1704, %v1687, %v1409
      %v1721 = vsel %vm1704, %v1688, %v1411
      %v1722 = vsel %vm1704, %v1689, %v1413
      %v1723 = vsel %vm1704, %v1690, %v1415
      %v1724 = vsel %vm1704, %v1691, %v1417
      %v1725 = vsel %vm1704, %v1692, %v1419
      %v1726 = vsel %vm1704, %v1693, %v1421
      %v1727 = vsel %vm1704, %v1694, %v1423
      %v1728 = vsel %vm1704, %v1695, %v1425
      %v1729 = vsel %vm1704, %v1696, %v1427
      %v1730 = vsel %vm1704, %v1697, %v1429
      %v1731 = vsel %vm1704, %v1698, %v1431
      %v1732 = vsel %vm1704, %v1699, %v1433
      %v1733 = vsel %vm1704, %v1700, %v1435
      %v1734 = vsel %vm1704, %v1701, %v1437
      %v1735 = vsel %vm1704, %v1702, %v1439
      %v1736 = vsel %vm1704, %v1703, %v1441
      %v1737 = vld [vmem:[%s2] sm:$0xff]
      %v1738 = vld [vmem:[%s2 + $0x8] sm:$0xff]
      %v1739 = vld [vmem:[%s2 + $0x10] sm:$0xff]
      %v1740 = vld [vmem:[%s2 + $0x18] sm:$0xff]
      %v1741 = vld [vmem:[%s2 + $0x20] sm:$0xff]
      %v1742 = vld [vmem:[%s2 + $0x28] sm:$0xff]
      %v1743 = vld [vmem:[%s2 + $0x30] sm:$0xff]
      %v1744 = vld [vmem:[%s2 + $0x38] sm:$0xff]
      %v1745 = vld [vmem:[%s2 + $0x40] sm:$0xff]
      %vm1746 = vcmask 588800
      %v1748 = vsel %vm1746, %v1705, 0
      %v1751 = vsel %vm1746, %v1706, 0
      %v1754 = vsel %vm1746, %v1707, 0
      %v1757 = vsel %vm1746, %v1708, 0
      %v1760 = vsel %vm1746, %v1709, 0
      %v1763 = vsel %vm1746, %v1710, 0
      %v1766 = vsel %vm1746, %v1711, 0
      %v1769 = vsel %vm1746, %v1712, 0
      %v1772 = vsel %vm1746, %v1713, 0
      %v1775 = vsel %vm1746, %v1714, 0
      %v1778 = vsel %vm1746, %v1715, 0
      %v1781 = vsel %vm1746, %v1716, 0
      %v1784 = vsel %vm1746, %v1717, 0
      %v1787 = vsel %vm1746, %v1718, 0
      %v1790 = vsel %vm1746, %v1719, 0
      %v1793 = vsel %vm1746, %v1720, 0
      %v1796 = vsel %vm1746, %v1721, 0
      %v1799 = vsel %vm1746, %v1722, 0
      %v1802 = vsel %vm1746, %v1723, 0
      %v1805 = vsel %vm1746, %v1724, 0
      %v1808 = vsel %vm1746, %v1725, 0
      %v1811 = vsel %vm1746, %v1726, 0
      %v1814 = vsel %vm1746, %v1727, 0
      %v1817 = vsel %vm1746, %v1728, 0
      %v1820 = vsel %vm1746, %v1729, 0
      %v1823 = vsel %vm1746, %v1730, 0
      %v1826 = vsel %vm1746, %v1731, 0
      %v1829 = vsel %vm1746, %v1732, 0
      %v1832 = vsel %vm1746, %v1733, 0
      %v1835 = vsel %vm1746, %v1734, 0
      %v1838 = vsel %vm1746, %v1735, 0
      %v1841 = vsel %vm1746, %v1736, 0
      %1843 = vmatpush.msra.mxu0 0.0
      %1844 = vmatpush.msra.mxu0 0.0
      %1845 = vmatpush.msra.mxu0 0.0
      %1846 = vmatpush.msra.mxu0 0.0
      %1847 = vmatpush.msra.mxu0 0.0
      %1848 = vmatpush.msra.mxu0 0.0
      %1849 = vmatpush.msra.mxu0 0.0
      %1850 = vmatpush.msra.mxu0 %v1745
      %1851 = vmatpush.msra.mxu0 %v1744
      %1852 = vmatpush.msra.mxu0 %v1743
      %1853 = vmatpush.msra.mxu0 %v1742
      %1854 = vmatpush.msra.mxu0 %v1741
      %1855 = vmatpush.msra.mxu0 %v1740
      %1856 = vmatpush.msra.mxu0 %v1739
      %1857 = vmatpush.msra.mxu0 %v1738
      %1858 = vmatpush.msra.mxu0 %v1737
      %1859 = vmatmul.f32.gmra.mxu0 %v1748
      %v1860 = vpop.f32.mrf.mxu0
      %v1861 = vadd.f32 0.0, %v1860
      %1862 = vmatmul.f32.gmra.mxu0 %v1751
      %v1863 = vpop.f32.mrf.mxu0
      %v1864 = vadd.f32 0.0, %v1863
      %1865 = vmatmul.f32.gmra.mxu0 %v1754
      %v1866 = vpop.f32.mrf.mxu0
      %v1867 = vadd.f32 0.0, %v1866
      %1868 = vmatmul.f32.gmra.mxu0 %v1757
      %v1869 = vpop.f32.mrf.mxu0
      %v1870 = vadd.f32 0.0, %v1869
      %1871 = vmatmul.f32.gmra.mxu0 %v1760
      %v1872 = vpop.f32.mrf.mxu0
      %v1873 = vadd.f32 0.0, %v1872
      %1874 = vmatmul.f32.gmra.mxu0 %v1763
      %v1875 = vpop.f32.mrf.mxu0
      %v1876 = vadd.f32 0.0, %v1875
      %1877 = vmatmul.f32.gmra.mxu0 %v1766
      %v1878 = vpop.f32.mrf.mxu0
      %v1879 = vadd.f32 0.0, %v1878
      %1880 = vmatmul.f32.gmra.mxu0 %v1769
      %v1881 = vpop.f32.mrf.mxu0
      %v1882 = vadd.f32 0.0, %v1881
      %1883 = vmatmul.f32.gmra.mxu0 %v1772
      %v1884 = vpop.f32.mrf.mxu0
      %v1885 = vadd.f32 0.0, %v1884
      %1886 = vmatmul.f32.gmra.mxu0 %v1775
      %v1887 = vpop.f32.mrf.mxu0
      %v1888 = vadd.f32 0.0, %v1887
      %1889 = vmatmul.f32.gmra.mxu0 %v1778
      %v1890 = vpop.f32.mrf.mxu0
      %v1891 = vadd.f32 0.0, %v1890
      %1892 = vmatmul.f32.gmra.mxu0 %v1781
      %v1893 = vpop.f32.mrf.mxu0
      %v1894 = vadd.f32 0.0, %v1893
      %1895 = vmatmul.f32.gmra.mxu0 %v1784
      %v1896 = vpop.f32.mrf.mxu0
      %v1897 = vadd.f32 0.0, %v1896
      %1898 = vmatmul.f32.gmra.mxu0 %v1787
      %v1899 = vpop.f32.mrf.mxu0
      %v1900 = vadd.f32 0.0, %v1899
      %1901 = vmatmul.f32.gmra.mxu0 %v1790
      %v1902 = vpop.f32.mrf.mxu0
      %v1903 = vadd.f32 0.0, %v1902
      %1904 = vmatmul.f32.gmra.mxu0 %v1793
      %v1905 = vpop.f32.mrf.mxu0
      %v1906 = vadd.f32 0.0, %v1905
      %1907 = vmatmul.f32.gmra.mxu0 %v1796
      %v1908 = vpop.f32.mrf.mxu0
      %v1909 = vadd.f32 0.0, %v1908
      %1910 = vmatmul.f32.gmra.mxu0 %v1799
      %v1911 = vpop.f32.mrf.mxu0
      %v1912 = vadd.f32 0.0, %v1911
      %1913 = vmatmul.f32.gmra.mxu0 %v1802
      %v1914 = vpop.f32.mrf.mxu0
      %v1915 = vadd.f32 0.0, %v1914
      %1916 = vmatmul.f32.gmra.mxu0 %v1805
      %v1917 = vpop.f32.mrf.mxu0
      %v1918 = vadd.f32 0.0, %v1917
      %1919 = vmatmul.f32.gmra.mxu0 %v1808
      %v1920 = vpop.f32.mrf.mxu0
      %v1921 = vadd.f32 0.0, %v1920
      %1922 = vmatmul.f32.gmra.mxu0 %v1811
      %v1923 = vpop.f32.mrf.mxu0
      %v1924 = vadd.f32 0.0, %v1923
      %1925 = vmatmul.f32.gmra.mxu0 %v1814
      %v1926 = vpop.f32.mrf.mxu0
      %v1927 = vadd.f32 0.0, %v1926
      %1928 = vmatmul.f32.gmra.mxu0 %v1817
      %v1929 = vpop.f32.mrf.mxu0
      %v1930 = vadd.f32 0.0, %v1929
      %1931 = vmatmul.f32.gmra.mxu0 %v1820
      %v1932 = vpop.f32.mrf.mxu0
      %v1933 = vadd.f32 0.0, %v1932
      %1934 = vmatmul.f32.gmra.mxu0 %v1823
      %v1935 = vpop.f32.mrf.mxu0
      %v1936 = vadd.f32 0.0, %v1935
      %1937 = vmatmul.f32.gmra.mxu0 %v1826
      %v1938 = vpop.f32.mrf.mxu0
      %v1939 = vadd.f32 0.0, %v1938
      %1940 = vmatmul.f32.gmra.mxu0 %v1829
      %v1941 = vpop.f32.mrf.mxu0
      %v1942 = vadd.f32 0.0, %v1941
      %1943 = vmatmul.f32.gmra.mxu0 %v1832
      %v1944 = vpop.f32.mrf.mxu0
      %v1945 = vadd.f32 0.0, %v1944
      %1946 = vmatmul.f32.gmra.mxu0 %v1835
      %v1947 = vpop.f32.mrf.mxu0
      %v1948 = vadd.f32 0.0, %v1947
      %1949 = vmatmul.f32.gmra.mxu0 %v1838
      %v1950 = vpop.f32.mrf.mxu0
      %v1951 = vadd.f32 0.0, %v1950
      %1952 = vmatmul.f32.gmra.mxu0 %v1841
      %v1953 = vpop.f32.mrf.mxu0
      %v1954 = vadd.f32 0.0, %v1953
      %1955 = vdwg.mxu0
      %v1956 = vsel %vm211, %v1861, 0.0
      %v1957 = vsel %vm211, %v1864, 0.0
      %v1958 = vadd.f32 %v1956, %v1957
      %v1959 = vsel %vm211, %v1867, 0.0
      %v1960 = vadd.f32 %v1958, %v1959
      %v1961 = vsel %vm211, %v1870, 0.0
      %v1962 = vadd.f32 %v1960, %v1961
      %v1963 = vsel %vm211, %v1873, 0.0
      %v1964 = vadd.f32 %v1962, %v1963
      %v1965 = vsel %vm211, %v1876, 0.0
      %v1966 = vadd.f32 %v1964, %v1965
      %v1967 = vsel %vm211, %v1879, 0.0
      %v1968 = vadd.f32 %v1966, %v1967
      %v1969 = vsel %vm211, %v1882, 0.0
      %v1970 = vadd.f32 %v1968, %v1969
      %v1971 = vsel %vm211, %v1885, 0.0
      %v1972 = vadd.f32 %v1970, %v1971
      %v1973 = vsel %vm211, %v1888, 0.0
      %v1974 = vadd.f32 %v1972, %v1973
      %v1975 = vsel %vm211, %v1891, 0.0
      %v1976 = vadd.f32 %v1974, %v1975
      %v1977 = vsel %vm211, %v1894, 0.0
      %v1978 = vadd.f32 %v1976, %v1977
      %v1979 = vsel %vm211, %v1897, 0.0
      %v1980 = vadd.f32 %v1978, %v1979
      %v1981 = vsel %vm211, %v1900, 0.0
      %v1982 = vadd.f32 %v1980, %v1981
      %v1983 = vsel %vm211, %v1903, 0.0
      %v1984 = vadd.f32 %v1982, %v1983
      %v1985 = vsel %vm211, %v1906, 0.0
      %v1986 = vadd.f32 %v1984, %v1985
      %v1987 = vsel %vm211, %v1909, 0.0
      %v1988 = vadd.f32 %v1986, %v1987
      %v1989 = vsel %vm211, %v1912, 0.0
      %v1990 = vadd.f32 %v1988, %v1989
      %v1991 = vsel %vm211, %v1915, 0.0
      %v1992 = vadd.f32 %v1990, %v1991
      %v1993 = vsel %vm211, %v1918, 0.0
      %v1994 = vadd.f32 %v1992, %v1993
      %v1995 = vsel %vm211, %v1921, 0.0
      %v1996 = vadd.f32 %v1994, %v1995
      %v1997 = vsel %vm211, %v1924, 0.0
      %v1998 = vadd.f32 %v1996, %v1997
      %v1999 = vsel %vm211, %v1927, 0.0
      %v2000 = vadd.f32 %v1998, %v1999
      %v2001 = vsel %vm211, %v1930, 0.0
      %v2002 = vadd.f32 %v2000, %v2001
      %v2003 = vsel %vm211, %v1933, 0.0
      %v2004 = vadd.f32 %v2002, %v2003
      %v2005 = vsel %vm211, %v1936, 0.0
      %v2006 = vadd.f32 %v2004, %v2005
      %v2007 = vsel %vm211, %v1939, 0.0
      %v2008 = vadd.f32 %v2006, %v2007
      %v2009 = vsel %vm211, %v1942, 0.0
      %v2010 = vadd.f32 %v2008, %v2009
      %v2011 = vsel %vm211, %v1945, 0.0
      %v2012 = vadd.f32 %v2010, %v2011
      %v2013 = vsel %vm211, %v1948, 0.0
      %v2014 = vadd.f32 %v2012, %v2013
      %v2015 = vsel %vm211, %v1951, 0.0
      %v2016 = vadd.f32 %v2014, %v2015
      %v2017 = vsel %vm211, %v1954, 0.0
      %v2018 = vadd.f32 %v2016, %v2017
      %v2019 = vrot.slane %v2018, 4
      %v2020 = vadd.f32 %v2018, %v2019
      %v2021 = vrot.slane %v2020, 2
      %v2022 = vadd.f32 %v2020, %v2021
      %v2023 = vrot.slane %v2022, 1
      %v2024 = vadd.f32 %v2022, %v2023
      %v2025 = vmul.f32 %v1861, %v1861
      %v2026 = vmul.f32 %v1864, %v1864
      %v2027 = vmul.f32 %v1867, %v1867
      %v2028 = vmul.f32 %v1870, %v1870
      %v2029 = vmul.f32 %v1873, %v1873
      %v2030 = vmul.f32 %v1876, %v1876
      %v2031 = vmul.f32 %v1879, %v1879
      %v2032 = vmul.f32 %v1882, %v1882
      %v2033 = vmul.f32 %v1885, %v1885
      %v2034 = vmul.f32 %v1888, %v1888
      %v2035 = vmul.f32 %v1891, %v1891
      %v2036 = vmul.f32 %v1894, %v1894
      %v2037 = vmul.f32 %v1897, %v1897
      %v2038 = vmul.f32 %v1900, %v1900
      %v2039 = vmul.f32 %v1903, %v1903
      %v2040 = vmul.f32 %v1906, %v1906
      %v2041 = vmul.f32 %v1909, %v1909
      %v2042 = vmul.f32 %v1912, %v1912
      %v2043 = vmul.f32 %v1915, %v1915
      %v2044 = vmul.f32 %v1918, %v1918
      %v2045 = vmul.f32 %v1921, %v1921
      %v2046 = vmul.f32 %v1924, %v1924
      %v2047 = vmul.f32 %v1927, %v1927
      %v2048 = vmul.f32 %v1930, %v1930
      %v2049 = vmul.f32 %v1933, %v1933
      %v2050 = vmul.f32 %v1936, %v1936
      %v2051 = vmul.f32 %v1939, %v1939
      %v2052 = vmul.f32 %v1942, %v1942
      %v2053 = vmul.f32 %v1945, %v1945
      %v2054 = vmul.f32 %v1948, %v1948
      %v2055 = vmul.f32 %v1951, %v1951
      %v2056 = vmul.f32 %v1954, %v1954
      %v2057 = vsel %vm211, %v2025, 0.0
      %v2058 = vsel %vm211, %v2026, 0.0
      %v2059 = vadd.f32 %v2057, %v2058
      %v2060 = vsel %vm211, %v2027, 0.0
      %v2061 = vadd.f32 %v2059, %v2060
      %v2062 = vsel %vm211, %v2028, 0.0
      %v2063 = vadd.f32 %v2061, %v2062
      %v2064 = vsel %vm211, %v2029, 0.0
      %v2065 = vadd.f32 %v2063, %v2064
      %v2066 = vsel %vm211, %v2030, 0.0
      %v2067 = vadd.f32 %v2065, %v2066
      %v2068 = vsel %vm211, %v2031, 0.0
      %v2069 = vadd.f32 %v2067, %v2068
      %v2070 = vsel %vm211, %v2032, 0.0
      %v2071 = vadd.f32 %v2069, %v2070
      %v2072 = vsel %vm211, %v2033, 0.0
      %v2073 = vadd.f32 %v2071, %v2072
      %v2074 = vsel %vm211, %v2034, 0.0
      %v2075 = vadd.f32 %v2073, %v2074
      %v2076 = vsel %vm211, %v2035, 0.0
      %v2077 = vadd.f32 %v2075, %v2076
      %v2078 = vsel %vm211, %v2036, 0.0
      %v2079 = vadd.f32 %v2077, %v2078
      %v2080 = vsel %vm211, %v2037, 0.0
      %v2081 = vadd.f32 %v2079, %v2080
      %v2082 = vsel %vm211, %v2038, 0.0
      %v2083 = vadd.f32 %v2081, %v2082
      %v2084 = vsel %vm211, %v2039, 0.0
      %v2085 = vadd.f32 %v2083, %v2084
      %v2086 = vsel %vm211, %v2040, 0.0
      %v2087 = vadd.f32 %v2085, %v2086
      %v2088 = vsel %vm211, %v2041, 0.0
      %v2089 = vadd.f32 %v2087, %v2088
      %v2090 = vsel %vm211, %v2042, 0.0
      %v2091 = vadd.f32 %v2089, %v2090
      %v2092 = vsel %vm211, %v2043, 0.0
      %v2093 = vadd.f32 %v2091, %v2092
      %v2094 = vsel %vm211, %v2044, 0.0
      %v2095 = vadd.f32 %v2093, %v2094
      %v2096 = vsel %vm211, %v2045, 0.0
      %v2097 = vadd.f32 %v2095, %v2096
      %v2098 = vsel %vm211, %v2046, 0.0
      %v2099 = vadd.f32 %v2097, %v2098
      %v2100 = vsel %vm211, %v2047, 0.0
      %v2101 = vadd.f32 %v2099, %v2100
      %v2102 = vsel %vm211, %v2048, 0.0
      %v2103 = vadd.f32 %v2101, %v2102
      %v2104 = vsel %vm211, %v2049, 0.0
      %v2105 = vadd.f32 %v2103, %v2104
      %v2106 = vsel %vm211, %v2050, 0.0
      %v2107 = vadd.f32 %v2105, %v2106
      %v2108 = vsel %vm211, %v2051, 0.0
      %v2109 = vadd.f32 %v2107, %v2108
      %v2110 = vsel %vm211, %v2052, 0.0
      %v2111 = vadd.f32 %v2109, %v2110
      %v2112 = vsel %vm211, %v2053, 0.0
      %v2113 = vadd.f32 %v2111, %v2112
      %v2114 = vsel %vm211, %v2054, 0.0
      %v2115 = vadd.f32 %v2113, %v2114
      %v2116 = vsel %vm211, %v2055, 0.0
      %v2117 = vadd.f32 %v2115, %v2116
      %v2118 = vsel %vm211, %v2056, 0.0
      %v2119 = vadd.f32 %v2117, %v2118
      %v2120 = vrot.slane %v2119, 4
      %v2121 = vadd.f32 %v2119, %v2120
      %v2122 = vrot.slane %v2121, 2
      %v2123 = vadd.f32 %v2121, %v2122
      %v2124 = vrot.slane %v2123, 1
      %v2125 = vadd.f32 %v2123, %v2124
      %vm2126 = vcmask 1040384
      %v2127 = vsel %vm2126, %v2024, %v2125
      %v2128 = vadd.f32 %v2127, 0.0
      %2129 = vst.msk [vmem:[%s204] sm:$0xff] %vm211, %v1861
      %2130 = vst.msk [vmem:[%s204 + $0x8] sm:$0xff] %vm211, %v1864
      %2131 = vst.msk [vmem:[%s204 + $0x10] sm:$0xff] %vm211, %v1867
      %2132 = vst.msk [vmem:[%s204 + $0x18] sm:$0xff] %vm211, %v1870
      %2133 = vst.msk [vmem:[%s204 + $0x20] sm:$0xff] %vm211, %v1873
      %2134 = vst.msk [vmem:[%s204 + $0x28] sm:$0xff] %vm211, %v1876
      %2135 = vst.msk [vmem:[%s204 + $0x30] sm:$0xff] %vm211, %v1879
      %2136 = vst.msk [vmem:[%s204 + $0x38] sm:$0xff] %vm211, %v1882
      %2137 = vst.msk [vmem:[%s204 + $0x40] sm:$0xff] %vm211, %v1885
      %2138 = vst.msk [vmem:[%s204 + $0x48] sm:$0xff] %vm211, %v1888
      %2139 = vst.msk [vmem:[%s204 + $0x50] sm:$0xff] %vm211, %v1891
      %2140 = vst.msk [vmem:[%s204 + $0x58] sm:$0xff] %vm211, %v1894
      %2141 = vst.msk [vmem:[%s204 + $0x60] sm:$0xff] %vm211, %v1897
      %2142 = vst.msk [vmem:[%s204 + $0x68] sm:$0xff] %vm211, %v1900
      %2143 = vst.msk [vmem:[%s204 + $0x70] sm:$0xff] %vm211, %v1903
      %2144 = vst.msk [vmem:[%s204 + $0x78] sm:$0xff] %vm211, %v1906
      %2145 = vst.msk [vmem:[%s204 + $0x80] sm:$0xff] %vm211, %v1909
      %2146 = vst.msk [vmem:[%s204 + $0x88] sm:$0xff] %vm211, %v1912
      %2147 = vst.msk [vmem:[%s204 + $0x90] sm:$0xff] %vm211, %v1915
      %2148 = vst.msk [vmem:[%s204 + $0x98] sm:$0xff] %vm211, %v1918
      %2149 = vst.msk [vmem:[%s204 + $0xa0] sm:$0xff] %vm211, %v1921
      %2150 = vst.msk [vmem:[%s204 + $0xa8] sm:$0xff] %vm211, %v1924
      %2151 = vst.msk [vmem:[%s204 + $0xb0] sm:$0xff] %vm211, %v1927
      %2152 = vst.msk [vmem:[%s204 + $0xb8] sm:$0xff] %vm211, %v1930
      %2153 = vst.msk [vmem:[%s204 + $0xc0] sm:$0xff] %vm211, %v1933
      %2154 = vst.msk [vmem:[%s204 + $0xc8] sm:$0xff] %vm211, %v1936
      %2155 = vst.msk [vmem:[%s204 + $0xd0] sm:$0xff] %vm211, %v1939
      %2156 = vst.msk [vmem:[%s204 + $0xd8] sm:$0xff] %vm211, %v1942
      %2157 = vst.msk [vmem:[%s204 + $0xe0] sm:$0xff] %vm211, %v1945
      %2158 = vst.msk [vmem:[%s204 + $0xe8] sm:$0xff] %vm211, %v1948
      %2159 = vst.msk [vmem:[%s204 + $0xf0] sm:$0xff] %vm211, %v1951
      %2160 = vst.msk [vmem:[%s204 + $0xf8] sm:$0xff] %vm211, %v1954
      %2161 = vst.msk [vmem:[%s208] sm:$0x3] %vm214, %v2128
      %p2162 = scmp.lt.s32.totalorder %s16, 1
      %s2163 = scalar_select %p2162, %s16, 1
      %s2164 = smul.addr %s2163, 32
      %s2165 = smul.addr %s2164, 8
      %s2166 = scalar_lea.vmem %s3, %s2165
      %p2167 = scmp.lt.s32.totalorder %s16, 1
      %s2168 = scalar_select %p2167, %s16, 1
      %s2169 = smul.addr %s2168, 2
      %s2170 = scalar_lea.vmem %s4, %s2169
      // Predicated region
      $region33: #{up_forward.3} parent=31 // pred_check
        %p2171 = pneg %p102
      $region34: #{up_forward.3} parent=31 // pred_check_branch
        %2173 = sbr.rel (%p2171) target = $region36
      $region35: #{up_forward.3} parent=31 // pred_region
        _
      $region36: #{up_forward.3} parent=31 // pred_fallthru
        _
      // Predicated region
      $region37: #{up_forward.3} parent=31 // pred_check
        %p2174 = pneg %p128
      $region38: #{up_forward.3} parent=31 // pred_check_branch
        %2176 = sbr.rel (%p2174) target = $region40
      $region39: #{up_forward.3} parent=31 // pred_region
        _
      $region40: #{up_forward.3} parent=31 // pred_fallthru
        _
    $region32: #{up_forward.3} parent=5 // pred_fallthru
      _
    %p2177 = scmp.le.s32.totalorder 2, %s11
    // Predicated region
    $region41: #{up_forward.3} parent=5 // pred_check
      %p2178 = pneg %p2177
    $region42: #{up_forward.3} parent=5 // pred_check_branch
      %2180 = sbr.rel (%p2178) target = $region44
    $region43: #{up_forward.3} parent=5 // pred_region
      %s2181 = ssub.s32 %s11, 2
      // Predicated region
      $region45: #{up_forward.3} parent=43 // pred_check
        %p2182 = pneg %p108
      $region46: #{up_forward.3} parent=43 // pred_check_branch
        %2184 = sbr.rel (%p2182) target = $region48
      $region47: #{up_forward.3} parent=43 // pred_region
        %p2185 = scmp.lt.s32.totalorder %s17, 1
        %s2186 = scalar_select %p2185, %s17, 1
        %s2187 = smul.addr %s2186, 32
        %s2188 = smul.addr %s2187, 8
        %s2189 = scalar_lea.vmem %s3, %s2188
      $region48: #{up_forward.3} parent=43 // pred_fallthru
        _
      // Predicated region
      $region49: #{up_forward.3} parent=43 // pred_check
        %p2190 = pneg %p134
      $region50: #{up_forward.3} parent=43 // pred_check_branch
        %2192 = sbr.rel (%p2190) target = $region52
      $region51: #{up_forward.3} parent=43 // pred_region
        %p2193 = scmp.lt.s32.totalorder %s17, 1
        %s2194 = scalar_select %p2193, %s17, 1
        %s2195 = smul.addr %s2194, 2
        %s2196 = scalar_lea.vmem %s4, %s2195
      $region52: #{up_forward.3} parent=43 // pred_fallthru
        _
    $region44: #{up_forward.3} parent=5 // pred_fallthru
      _
  $region6: #{up_forward.3} parent=0 // loop_footer
    %s15 = sadd.s32 1, %s11
  $region7: #{up_forward.3} parent=0 // loop_footer_branch
    %10 = sbr.rel target = $region3
  $region8: #{up_forward.3} parent=0 // loop_exit
    _

</llo_original>
